<compile_context>
chip_gen: v7x
topology: tpu7x:2x2x1
jax: 0.10.0
libtpu: 0.0.40
codegen_flags: <defaults>
</compile_context>

<pallas_src>
import math
from functools import partial

import jax
import jax.numpy as jnp
import numpy as np
from jax import lax
from jax.experimental import pallas as pl
from jax.experimental.pallas import tpu as pltpu


# ----------------------------------------------------------------------------
# Pallas kernel: LayerNorm(query) + multi-head cross-attention + out-proj.
# Grid: (B, Sp // s_tile).  K|V are projected once per batch element (fused
# matmul) and cached lane-dense in VMEM scratch for all S tiles of that batch
# element.
# ----------------------------------------------------------------------------
def _cross_attn_kernel(num_heads, head_dim, eps,
                       q_ref, kv_ref, mask_ref,
                       gamma_ref, beta_ref,
                       wq_t_ref, w_kv_t_ref, bq_ref, b_kv_ref,
                       wo_t_ref, bo_ref,
                       out_ref, attn_ref,
                       kv_scr):
    E = num_heads * head_dim

    # --- fused K|V projection: once per batch element, lane-dense cache ---
    @pl.when(pl.program_id(1) == 0)
    def _():
        kv = kv_ref[0]                                         # (Lp, E) bf16
        kvp = jnp.dot(kv, w_kv_t_ref[...],
                      preferred_element_type=jnp.float32) + b_kv_ref[...]
        kv_scr[...] = kvp.astype(jnp.bfloat16)                 # (Lp, 2E)

    # --- LayerNorm over embed dim (f32 VPU math, biased variance) ---
    x = q_ref[0].astype(jnp.float32)                           # (tS, E)
    mean = jnp.mean(x, axis=-1, keepdims=True)
    var = jnp.mean((x - mean) * (x - mean), axis=-1, keepdims=True)
    xn = (x - mean) * lax.rsqrt(var + eps)
    xn = xn * gamma_ref[...] + beta_ref[...]                   # gamma/beta (1, E)

    # --- q projection (1/sqrt(head_dim) already folded into wq_t / bq) ---
    q = jnp.dot(xn.astype(jnp.bfloat16), wq_t_ref[...],
                preferred_element_type=jnp.float32) + bq_ref[...]
    q = q.astype(jnp.bfloat16)                                 # (tS, E)

    # --- key padding mask: mask == 0 -> large negative bias ---
    # (finite -1e30 instead of -inf so a fully-padded row stays NaN-free;
    #  intentional divergence from nn.MultiheadAttention for that edge case)
    mask_bias = jnp.where(mask_ref[0] == 0,
                          jnp.float32(-1e30), jnp.float32(0.0))  # (1, Lp)

    # --- per-head attention: static lane slices, 2-D MXU matmuls ---
    dn = (((1,), (1,)), ((), ()))        # contract last dims: (tS,hd)x(Lp,hd)
    inv_heads = jnp.float32(1.0 / num_heads)
    ctx_parts = []
    probs_sum = None
    for h in range(num_heads):
        lo, hi = h * head_dim, (h + 1) * head_dim
        q_h = q[:, lo:hi]                                      # (tS, hd) bf16
        k_h = kv_scr[:, lo:hi]                                 # (Lp, hd) bf16
        v_h = kv_scr[:, E + lo:E + hi]                         # (Lp, hd) bf16

        s = lax.dot_general(q_h, k_h, dn,
                            preferred_element_type=jnp.float32)  # (tS, Lp)
        s = s + mask_bias
        m = jnp.max(s, axis=-1, keepdims=True)
        e = jnp.exp(s - m)
        # exact normalization: these probs are returned as attn_weights
        p = e * (1.0 / jnp.sum(e, axis=-1, keepdims=True))      # (tS, Lp) f32

        ctx_parts.append(jnp.dot(p.astype(jnp.bfloat16), v_h,
                                 preferred_element_type=jnp.float32))
        probs_sum = p if probs_sum is None else probs_sum + p

    # merge heads (static lane concat, layout-only) and project out
    ctx = jnp.concatenate(ctx_parts, axis=-1)                   # (tS, E) f32
    o = jnp.dot(ctx.astype(jnp.bfloat16), wo_t_ref[...],
                preferred_element_type=jnp.float32) + bo_ref[...]

    out_ref[0] = o.astype(out_ref.dtype)
    attn_ref[0] = (probs_sum * inv_heads).astype(attn_ref.dtype)


# ----------------------------------------------------------------------------
# Wrapper: parameter plumbing + pallas_call with (B, S-tiles) grid.
# ----------------------------------------------------------------------------
def image_cross_attention(image_features, text_features, attention_mask, params,
                          num_heads, *, s_tile=256, eps=1e-5,
                          attn_weights_dtype=jnp.float32,
                          vmem_limit_bytes=None):
    """image_features: (B, C, H, W); text_features: (B, L, C);
       attention_mask: (B, L) int (0 == pad). Returns (attn_spatial, attn_w)."""
    B, C, H, W = image_features.shape
    E = C
    S = H * W
    L = text_features.shape[1]
    assert E % num_heads == 0, "embed_dim must be divisible by num_heads"
    hd = E // num_heads

    # Lane-pad the key axis to a multiple of 128 (dense scores / softmax /
    # attn-weight writeback); padded keys are masked out via the mask.
    Lp = max(128, pl.cdiv(L, 128) * 128)

    # S tiling: clamp tile to (8-rounded) S, pad S up to a tile multiple.
    # (On v7x prefer s_tile=128; on v5e/v6e 256-512 amortizes grid overhead.)
    s_tile = max(8, min(s_tile, pl.cdiv(S, 8) * 8))
    Sp = pl.cdiv(S, s_tile) * s_tile
    n_s = Sp // s_tile

    # NCHW -> (B, S, E) token-major queries (interface glue, see NOTE above).
    query_seq = jnp.transpose(image_features.reshape(B, C, S), (0, 2, 1))
    if Sp != S:
        query_seq = jnp.pad(query_seq, ((0, 0), (0, Sp - S), (0, 0)))

    # Pad text / mask along L -> Lp; pre-cast text to bf16 (halves its DMA).
    text_p = jnp.pad(text_features, ((0, 0), (0, Lp - L), (0, 0))
                     ).astype(jnp.bfloat16)
    mask3 = jnp.pad(attention_mask.astype(jnp.int32),
                    ((0, 0), (0, Lp - L))).reshape(B, 1, Lp)

    # Split fused in_proj; pre-transpose all weights host-side, fuse K|V,
    # fold the attention scale into the q projection, cast weights to bf16.
    w_in = params["in_proj_weight"]              # (3E, E)
    b_in = params["in_proj_bias"]                # (3E,)
    scale = 1.0 / math.sqrt(hd)
    wq_t = (w_in[:E].T * scale).astype(jnp.bfloat16)                 # (E, E)
    bq = (b_in[:E] * scale).reshape(1, E).astype(jnp.float32)
    w_kv_t = jnp.concatenate([w_in[E:2 * E].T, w_in[2 * E:].T],
                             axis=1).astype(jnp.bfloat16)            # (E, 2E)
    b_kv = jnp.concatenate([b_in[E:2 * E], b_in[2 * E:]]
                           ).reshape(1, 2 * E).astype(jnp.float32)
    wo_t = params["out_proj_weight"].T.astype(jnp.bfloat16)
    bo = params["out_proj_bias"].reshape(1, E).astype(jnp.float32)
    gamma = params["ln_weight"].reshape(1, E).astype(jnp.float32)
    beta = params["ln_bias"].reshape(1, E).astype(jnp.float32)

    out_dtype = image_features.dtype
    kernel = partial(_cross_attn_kernel, num_heads, hd, eps)

    cp_kwargs = dict(dimension_semantics=("parallel", "arbitrary"))
    if vmem_limit_bytes is not None:
        cp_kwargs["vmem_limit_bytes"] = vmem_limit_bytes

    rep = lambda shp: pl.BlockSpec(shp, lambda b, si: (0, 0))

    out_seq, attn_w = pl.pallas_call(
        kernel,
        out_shape=(
            jax.ShapeDtypeStruct((B, Sp, E), out_dtype),
            jax.ShapeDtypeStruct((B, Sp, Lp), attn_weights_dtype),
        ),
        grid=(B, n_s),
        in_specs=[
            pl.BlockSpec((1, s_tile, E), lambda b, si: (b, si, 0)),  # queries
            pl.BlockSpec((1, Lp, E), lambda b, si: (b, 0, 0)),       # text (bf16)
            pl.BlockSpec((1, 1, Lp), lambda b, si: (b, 0, 0)),       # key mask
            rep((1, E)),        # ln gamma
            rep((1, E)),        # ln beta
            rep((E, E)),        # wq_t (scaled)
            rep((E, 2 * E)),    # w_kv_t (fused K|V)
            rep((1, E)),        # bq (scaled)
            rep((1, 2 * E)),    # b_kv
            rep((E, E)),        # wo_t
            rep((1, E)),        # bo
        ],
        out_specs=(
            pl.BlockSpec((1, s_tile, E), lambda b, si: (b, si, 0)),
            pl.BlockSpec((1, s_tile, Lp), lambda b, si: (b, si, 0)),
        ),
        scratch_shapes=[
            pltpu.VMEM((Lp, 2 * E), jnp.bfloat16),   # lane-dense cached K|V
        ],
        compiler_params=pltpu.CompilerParams(**cp_kwargs),
    )(query_seq, text_p, mask3, gamma, beta,
      wq_t, w_kv_t, bq, b_kv, wo_t, bo)

    # Trim S padding; (B, S, E) -> (B, C, H, W); trim padded key columns.
    out_seq = out_seq[:, :S]
    attn_spatial = jnp.transpose(out_seq, (0, 2, 1)).reshape(B, C, H, W)
    return attn_spatial, attn_w[:, :S, :L]


# ----------------------------------------------------------------------------
# Pure-JAX reference (mirrors PyTorch semantics) for a correctness check.
# ----------------------------------------------------------------------------
def reference(image_features, text_features, attention_mask, params, num_heads):
    B, C, H, W = image_features.shape
    E = C
    S = H * W
    L = text_features.shape[1]
    hd = E // num_heads

    q_seq = jnp.transpose(image_features.reshape(B, C, S), (0, 2, 1))
    mean = jnp.mean(q_seq, axis=-1, keepdims=True)
    var = jnp.mean((q_seq - mean) ** 2, axis=-1, keepdims=True)
    qn = (q_seq - mean) / jnp.sqrt(var + 1e-5)
    qn = qn * params["ln_weight"] + params["ln_bias"]

    w_in, b_in = params["in_proj_weight"], params["in_proj_bias"]
    q = qn @ w_in[:E].T + b_in[:E]
    k = text_features @ w_in[E:2 * E].T + b_in[E:2 * E]
    v = text_features @ w_in[2 * E:].T + b_in[2 * E:]

    q = q.reshape(B, S, num_heads, hd).transpose(0, 2, 1, 3)
    k = k.reshape(B, L, num_heads, hd).transpose(0, 2, 1, 3)
    v = v.reshape(B, L, num_heads, hd).transpose(0, 2, 1, 3)

    scores = jnp.einsum("bhsd,bhld->bhsl", q, k) / math.sqrt(hd)
    bias = jnp.where(attention_mask[:, None, None, :] == 0, -jnp.inf, 0.0)
    probs = jax.nn.softmax(scores + bias, axis=-1)
    out = jnp.einsum("bhsl,bhld->bhsd", probs, v)
    out = out.transpose(0, 2, 1, 3).reshape(B, S, E)
    out = out @ params["out_proj_weight"].T + params["out_proj_bias"]

    attn_spatial = jnp.transpose(out, (0, 2, 1)).reshape(B, C, H, W)
    attn_w = jnp.mean(probs, axis=1)
    return attn_spatial, attn_w


if __name__ == "__main__":
    # Small, module-consistent shapes. S = 160 with s_tile=128 exercises
    # multiple S tiles per batch element, the per-batch K/V cache reuse, and
    # the S-padding (Sp = 256) path.
    B, C, H, W = 2, 32, 16, 10        # embed_dim = C = 32, S = 160
    L = 8                              # text sequence length
    num_heads = 4

    key = jax.random.PRNGKey(0)
    k_img, k_txt, k_w, k_b, k_wo = jax.random.split(key, 5)

    image_features = jax.random.normal(k_img, (B, C, H, W), jnp.float32)
    text_features = jax.random.normal(k_txt, (B, L, C), jnp.float32)
    # First batch: last 3 text tokens padded; second batch: fully valid.
    attention_mask = jnp.array(
        [[1, 1, 1, 1, 1, 0, 0, 0],
         [1, 1, 1, 1, 1, 1, 1, 1]], dtype=jnp.int32)

    # Deterministic parameter init (shapes match nn.MultiheadAttention /
    # nn.LayerNorm of embed_dim=32). Not a checkpoint load.
    params = {
        "in_proj_weight": 0.1 * jax.random.normal(k_w, (3 * C, C), jnp.float32),
        "in_proj_bias": 0.1 * jax.random.normal(k_b, (3 * C,), jnp.float32),
        "out_proj_weight": 0.1 * jax.random.normal(k_wo, (C, C), jnp.float32),
        "out_proj_bias": jnp.zeros((C,), jnp.float32),
        "ln_weight": jnp.ones((C,), jnp.float32),
        "ln_bias": jnp.zeros((C,), jnp.float32),
    }

    out_spatial, attn_weights = image_cross_attention(
        image_features, text_features, attention_mask, params, num_heads,
        s_tile=128)
    out_spatial = jax.block_until_ready(out_spatial)
    attn_weights = jax.block_until_ready(attn_weights)

    # Correctness check vs. pure-JAX f32 reference (kernel uses bf16 MXU ops).
    ref_spatial, ref_weights = reference(
        image_features, text_features, attention_mask, params, num_heads)
    np.testing.assert_allclose(np.asarray(out_spatial), np.asarray(ref_spatial),
                               rtol=2e-2, atol=2e-2)
    np.testing.assert_allclose(np.asarray(attn_weights), np.asarray(ref_weights),
                               rtol=2e-2, atol=2e-2)

    assert out_spatial.shape == (B, C, H, W)
    assert attn_weights.shape == (B, H * W, L)
    print("KERNEL_OK")
</pallas_src>

<mosaic_0001>
module attributes {stable_mosaic.version = 11 : i64} {
  func.func @_cross_attn_kernel(%arg0: i32, %arg1: i32, %arg2: memref<1x128x32xf32, #tpu.memory_space<vmem>>, %arg3: memref<1x128x32xbf16, #tpu.memory_space<vmem>>, %arg4: memref<1x1x128xi32, #tpu.memory_space<vmem>>, %arg5: memref<1x32xf32, #tpu.memory_space<vmem>>, %arg6: memref<1x32xf32, #tpu.memory_space<vmem>>, %arg7: memref<32x32xbf16, #tpu.memory_space<vmem>>, %arg8: memref<32x64xbf16, #tpu.memory_space<vmem>>, %arg9: memref<1x32xf32, #tpu.memory_space<vmem>>, %arg10: memref<1x64xf32, #tpu.memory_space<vmem>>, %arg11: memref<32x32xbf16, #tpu.memory_space<vmem>>, %arg12: memref<1x32xf32, #tpu.memory_space<vmem>>, %arg13: memref<1x128x32xf32, #tpu.memory_space<vmem>>, %arg14: memref<1x128x128xf32, #tpu.memory_space<vmem>>, %arg15: memref<128x64xbf16, #tpu.memory_space<vmem>>) attributes {dimension_semantics = [#tpu.dimension_semantics<parallel>, #tpu.dimension_semantics<arbitrary>], iteration_bounds = array<i64: 2, 2>, scalar_prefetch = 0 : i64, scratch_operands = 1 : i64, tpu.core_type = #tpu.core_type<tc>, window_params = [{transform_indices = @transform_0, window_bounds = array<i64: 1, 128, 32>}, {transform_indices = @transform_1, window_bounds = array<i64: 1, 128, 32>}, {transform_indices = @transform_2, window_bounds = array<i64: 1, 1, 128>}, {pipeline_mode = #tpu.pipeline_mode<synchronous>, transform_indices = @transform_3, window_bounds = array<i64: 1, 32>}, {pipeline_mode = #tpu.pipeline_mode<synchronous>, transform_indices = @transform_4, window_bounds = array<i64: 1, 32>}, {pipeline_mode = #tpu.pipeline_mode<synchronous>, transform_indices = @transform_5, window_bounds = array<i64: 32, 32>}, {pipeline_mode = #tpu.pipeline_mode<synchronous>, transform_indices = @transform_6, window_bounds = array<i64: 32, 64>}, {pipeline_mode = #tpu.pipeline_mode<synchronous>, transform_indices = @transform_7, window_bounds = array<i64: 1, 32>}, {pipeline_mode = #tpu.pipeline_mode<synchronous>, transform_indices = @transform_8, window_bounds = array<i64: 1, 64>}, {pipeline_mode = #tpu.pipeline_mode<synchronous>, transform_indices = @transform_9, window_bounds = array<i64: 32, 32>}, {pipeline_mode = #tpu.pipeline_mode<synchronous>, transform_indices = @transform_10, window_bounds = array<i64: 1, 32>}, {transform_indices = @transform_11, window_bounds = array<i64: 1, 128, 32>}, {transform_indices = @transform_12, window_bounds = array<i64: 1, 128, 128>}]} {
    %c0_i32 = arith.constant 0 : i32
    %0 = arith.cmpi eq, %arg1, %c0_i32 : i32
    %1 = arith.extui %0 : i1 to i32
    %c0_i32_0 = arith.constant 0 : i32
    %2 = arith.cmpi ne, %1, %c0_i32_0 : i32
    scf.if %2 {
      %c0_63 = arith.constant 0 : index
      %c0_64 = arith.constant 0 : index
      %c0_65 = arith.constant 0 : index
      %139 = vector.load %arg3[%c0_63, %c0_64, %c0_65] : memref<1x128x32xbf16, #tpu.memory_space<vmem>>, vector<1x128x32xbf16>
      %140 = vector.shape_cast %139 : vector<1x128x32xbf16> to vector<128x32xbf16>
      %c0_66 = arith.constant 0 : index
      %c0_67 = arith.constant 0 : index
      %141 = vector.load %arg8[%c0_66, %c0_67] : memref<32x64xbf16, #tpu.memory_space<vmem>>, vector<32x64xbf16>
      %cst_68 = arith.constant dense<0.000000e+00> : vector<128x64xf32>
      %142 = tpu.matmul %140, %141, %cst_68 {dimension_numbers = #tpu.dot_dimension_numbers<[1], [0], [0], [1], [0, 0, 1, 1], [], []>} : vector<128x32xbf16>, vector<32x64xbf16>, vector<128x64xf32> -> vector<128x64xf32>
      %c0_69 = arith.constant 0 : index
      %c0_70 = arith.constant 0 : index
      %143 = vector.load %arg10[%c0_69, %c0_70] : memref<1x64xf32, #tpu.memory_space<vmem>>, vector<1x64xf32>
      %144 = vector.broadcast %143 : vector<1x64xf32> to vector<128x64xf32>
      %145 = arith.addf %142, %144 : vector<128x64xf32>
      %146 = arith.truncf %145 : vector<128x64xf32> to vector<128x64xbf16>
      %c0_71 = arith.constant 0 : index
      %c0_72 = arith.constant 0 : index
      %147 = vector.load %arg15[%c0_71, %c0_72] : memref<128x64xbf16, #tpu.memory_space<vmem>>, vector<128x64xbf16>
      tpu.vector_store %arg15[%c0_71, %c0_72], %146 {strides = array<i32>} : memref<128x64xbf16, #tpu.memory_space<vmem>>, vector<128x64xbf16>,
    } else {
    }
    %c0 = arith.constant 0 : index
    %c0_1 = arith.constant 0 : index
    %c0_2 = arith.constant 0 : index
    %3 = vector.load %arg2[%c0, %c0_1, %c0_2] : memref<1x128x32xf32, #tpu.memory_space<vmem>>, vector<1x128x32xf32>
    %4 = vector.shape_cast %3 : vector<1x128x32xf32> to vector<128x32xf32>
    %cst = arith.constant dense<0.000000e+00> : vector<128xf32>
    %5 = vector.multi_reduction <add>, %4, %cst [1] : vector<128x32xf32> to vector<128xf32>
    %6 = vector.shape_cast %5 : vector<128xf32> to vector<128x1xf32>
    %cst_3 = arith.constant 3.200000e+01 : f32
    %7 = vector.broadcast %cst_3 : f32 to vector<128x1xf32>
    %8 = arith.divf %6, %7 : vector<128x1xf32>
    %9 = vector.broadcast %8 : vector<128x1xf32> to vector<128x32xf32>
    %10 = arith.subf %4, %9 : vector<128x32xf32>
    %11 = vector.broadcast %8 : vector<128x1xf32> to vector<128x32xf32>
    %12 = arith.subf %4, %11 : vector<128x32xf32>
    %13 = arith.mulf %10, %12 : vector<128x32xf32>
    %cst_4 = arith.constant dense<0.000000e+00> : vector<128xf32>
    %14 = vector.multi_reduction <add>, %13, %cst_4 [1] : vector<128x32xf32> to vector<128xf32>
    %15 = vector.shape_cast %14 : vector<128xf32> to vector<128x1xf32>
    %cst_5 = arith.constant 3.200000e+01 : f32
    %16 = vector.broadcast %cst_5 : f32 to vector<128x1xf32>
    %17 = arith.divf %15, %16 : vector<128x1xf32>
    %18 = vector.broadcast %8 : vector<128x1xf32> to vector<128x32xf32>
    %19 = arith.subf %4, %18 : vector<128x32xf32>
    %cst_6 = arith.constant 9.99999974E-6 : f32
    %20 = vector.broadcast %cst_6 : f32 to vector<128x1xf32>
    %21 = arith.addf %17, %20 : vector<128x1xf32>
    %22 = math.rsqrt %21 : vector<128x1xf32>
    %23 = vector.broadcast %22 : vector<128x1xf32> to vector<128x32xf32>
    %24 = arith.mulf %19, %23 : vector<128x32xf32>
    %c0_7 = arith.constant 0 : index
    %c0_8 = arith.constant 0 : index
    %25 = vector.load %arg5[%c0_7, %c0_8] : memref<1x32xf32, #tpu.memory_space<vmem>>, vector<1x32xf32>
    %26 = vector.broadcast %25 : vector<1x32xf32> to vector<128x32xf32>
    %27 = arith.mulf %24, %26 : vector<128x32xf32>
    %c0_9 = arith.constant 0 : index
    %c0_10 = arith.constant 0 : index
    %28 = vector.load %arg6[%c0_9, %c0_10] : memref<1x32xf32, #tpu.memory_space<vmem>>, vector<1x32xf32>
    %29 = vector.broadcast %28 : vector<1x32xf32> to vector<128x32xf32>
    %30 = arith.addf %27, %29 : vector<128x32xf32>
    %31 = arith.truncf %30 : vector<128x32xf32> to vector<128x32xbf16>
    %c0_11 = arith.constant 0 : index
    %c0_12 = arith.constant 0 : index
    %32 = vector.load %arg7[%c0_11, %c0_12] : memref<32x32xbf16, #tpu.memory_space<vmem>>, vector<32x32xbf16>
    %cst_13 = arith.constant dense<0.000000e+00> : vector<128x32xf32>
    %33 = tpu.matmul %31, %32, %cst_13 {dimension_numbers = #tpu.dot_dimension_numbers<[1], [0], [0], [1], [0, 0, 1, 1], [], []>} : vector<128x32xbf16>, vector<32x32xbf16>, vector<128x32xf32> -> vector<128x32xf32>
    %c0_14 = arith.constant 0 : index
    %c0_15 = arith.constant 0 : index
    %34 = vector.load %arg9[%c0_14, %c0_15] : memref<1x32xf32, #tpu.memory_space<vmem>>, vector<1x32xf32>
    %35 = vector.broadcast %34 : vector<1x32xf32> to vector<128x32xf32>
    %36 = arith.addf %33, %35 : vector<128x32xf32>
    %37 = arith.truncf %36 : vector<128x32xf32> to vector<128x32xbf16>
    %c0_16 = arith.constant 0 : index
    %c0_17 = arith.constant 0 : index
    %c0_18 = arith.constant 0 : index
    %38 = vector.load %arg4[%c0_16, %c0_17, %c0_18] : memref<1x1x128xi32, #tpu.memory_space<vmem>>, vector<1x1x128xi32>
    %39 = vector.shape_cast %38 : vector<1x1x128xi32> to vector<1x128xi32>
    %c0_i32_19 = arith.constant 0 : i32
    %40 = vector.broadcast %c0_i32_19 : i32 to vector<1x128xi32>
    %41 = arith.cmpi eq, %39, %40 : vector<1x128xi32>
    %cst_20 = arith.constant -1.000000e+30 : f32
    %cst_21 = arith.constant 0.000000e+00 : f32
    %42 = vector.broadcast %cst_20 : f32 to vector<1x128xf32>
    %43 = vector.broadcast %cst_21 : f32 to vector<1x128xf32>
    %44 = arith.select %41, %42, %43 : vector<1x128xi1>, vector<1x128xf32>
    %45 = vector.extract_strided_slice %37 {offsets = [0, 0], sizes = [128, 8], strides = [1, 1]} : vector<128x32xbf16> to vector<128x8xbf16>
    %c0_22 = arith.constant 0 : index
    %c0_23 = arith.constant 0 : index
    %46 = vector.load %arg15[%c0_22, %c0_23] : memref<128x64xbf16, #tpu.memory_space<vmem>>, vector<128x8xbf16>
    %c0_24 = arith.constant 0 : index
    %c32 = arith.constant 32 : index
    %47 = vector.load %arg15[%c0_24, %c32] : memref<128x64xbf16, #tpu.memory_space<vmem>>, vector<128x8xbf16>
    %cst_25 = arith.constant dense<0.000000e+00> : vector<128x128xf32>
    %48 = tpu.matmul %45, %46, %cst_25 {dimension_numbers = #tpu.dot_dimension_numbers<[1], [1], [0], [0], [0, 0, 1, 0], [], []>} : vector<128x8xbf16>, vector<128x8xbf16>, vector<128x128xf32> -> vector<128x128xf32>
    %49 = vector.broadcast %44 : vector<1x128xf32> to vector<128x128xf32>
    %50 = arith.addf %48, %49 : vector<128x128xf32>
    %cst_26 = arith.constant dense<0xFF800000> : vector<128xf32>
    %51 = vector.multi_reduction <maximumf>, %50, %cst_26 [1] : vector<128x128xf32> to vector<128xf32>
    %52 = vector.shape_cast %51 : vector<128xf32> to vector<128x1xf32>
    %53 = vector.broadcast %52 : vector<128x1xf32> to vector<128x128xf32>
    %54 = arith.subf %50, %53 : vector<128x128xf32>
    %55 = math.exp %54 : vector<128x128xf32>
    %cst_27 = arith.constant dense<0.000000e+00> : vector<128xf32>
    %56 = vector.multi_reduction <add>, %55, %cst_27 [1] : vector<128x128xf32> to vector<128xf32>
    %57 = vector.shape_cast %56 : vector<128xf32> to vector<128x1xf32>
    %cst_28 = arith.constant 1.000000e+00 : f32
    %58 = vector.broadcast %cst_28 : f32 to vector<128x1xf32>
    %59 = arith.divf %58, %57 : vector<128x1xf32>
    %60 = vector.broadcast %59 : vector<128x1xf32> to vector<128x128xf32>
    %61 = arith.mulf %55, %60 : vector<128x128xf32>
    %62 = arith.truncf %61 : vector<128x128xf32> to vector<128x128xbf16>
    %cst_29 = arith.constant dense<0.000000e+00> : vector<128x8xf32>
    %63 = tpu.matmul %62, %47, %cst_29 {dimension_numbers = #tpu.dot_dimension_numbers<[1], [0], [0], [1], [0, 0, 1, 1], [], []>} : vector<128x128xbf16>, vector<128x8xbf16>, vector<128x8xf32> -> vector<128x8xf32>
    %64 = vector.extract_strided_slice %37 {offsets = [0, 8], sizes = [128, 8], strides = [1, 1]} : vector<128x32xbf16> to vector<128x8xbf16>
    %c0_30 = arith.constant 0 : index
    %c8 = arith.constant 8 : index
    %65 = vector.load %arg15[%c0_30, %c8] : memref<128x64xbf16, #tpu.memory_space<vmem>>, vector<128x8xbf16>
    %c0_31 = arith.constant 0 : index
    %c40 = arith.constant 40 : index
    %66 = vector.load %arg15[%c0_31, %c40] : memref<128x64xbf16, #tpu.memory_space<vmem>>, vector<128x8xbf16>
    %cst_32 = arith.constant dense<0.000000e+00> : vector<128x128xf32>
    %67 = tpu.matmul %64, %65, %cst_32 {dimension_numbers = #tpu.dot_dimension_numbers<[1], [1], [0], [0], [0, 0, 1, 0], [], []>} : vector<128x8xbf16>, vector<128x8xbf16>, vector<128x128xf32> -> vector<128x128xf32>
    %68 = vector.broadcast %44 : vector<1x128xf32> to vector<128x128xf32>
    %69 = arith.addf %67, %68 : vector<128x128xf32>
    %cst_33 = arith.constant dense<0xFF800000> : vector<128xf32>
    %70 = vector.multi_reduction <maximumf>, %69, %cst_33 [1] : vector<128x128xf32> to vector<128xf32>
    %71 = vector.shape_cast %70 : vector<128xf32> to vector<128x1xf32>
    %72 = vector.broadcast %71 : vector<128x1xf32> to vector<128x128xf32>
    %73 = arith.subf %69, %72 : vector<128x128xf32>
    %74 = math.exp %73 : vector<128x128xf32>
    %cst_34 = arith.constant dense<0.000000e+00> : vector<128xf32>
    %75 = vector.multi_reduction <add>, %74, %cst_34 [1] : vector<128x128xf32> to vector<128xf32>
    %76 = vector.shape_cast %75 : vector<128xf32> to vector<128x1xf32>
    %cst_35 = arith.constant 1.000000e+00 : f32
    %77 = vector.broadcast %cst_35 : f32 to vector<128x1xf32>
    %78 = arith.divf %77, %76 : vector<128x1xf32>
    %79 = vector.broadcast %78 : vector<128x1xf32> to vector<128x128xf32>
    %80 = arith.mulf %74, %79 : vector<128x128xf32>
    %81 = arith.truncf %80 : vector<128x128xf32> to vector<128x128xbf16>
    %cst_36 = arith.constant dense<0.000000e+00> : vector<128x8xf32>
    %82 = tpu.matmul %81, %66, %cst_36 {dimension_numbers = #tpu.dot_dimension_numbers<[1], [0], [0], [1], [0, 0, 1, 1], [], []>} : vector<128x128xbf16>, vector<128x8xbf16>, vector<128x8xf32> -> vector<128x8xf32>
    %83 = arith.addf %61, %80 : vector<128x128xf32>
    %84 = vector.extract_strided_slice %37 {offsets = [0, 16], sizes = [128, 8], strides = [1, 1]} : vector<128x32xbf16> to vector<128x8xbf16>
    %c0_37 = arith.constant 0 : index
    %c16 = arith.constant 16 : index
    %85 = vector.load %arg15[%c0_37, %c16] : memref<128x64xbf16, #tpu.memory_space<vmem>>, vector<128x8xbf16>
    %c0_38 = arith.constant 0 : index
    %c48 = arith.constant 48 : index
    %86 = vector.load %arg15[%c0_38, %c48] : memref<128x64xbf16, #tpu.memory_space<vmem>>, vector<128x8xbf16>
    %cst_39 = arith.constant dense<0.000000e+00> : vector<128x128xf32>
    %87 = tpu.matmul %84, %85, %cst_39 {dimension_numbers = #tpu.dot_dimension_numbers<[1], [1], [0], [0], [0, 0, 1, 0], [], []>} : vector<128x8xbf16>, vector<128x8xbf16>, vector<128x128xf32> -> vector<128x128xf32>
    %88 = vector.broadcast %44 : vector<1x128xf32> to vector<128x128xf32>
    %89 = arith.addf %87, %88 : vector<128x128xf32>
    %cst_40 = arith.constant dense<0xFF800000> : vector<128xf32>
    %90 = vector.multi_reduction <maximumf>, %89, %cst_40 [1] : vector<128x128xf32> to vector<128xf32>
    %91 = vector.shape_cast %90 : vector<128xf32> to vector<128x1xf32>
    %92 = vector.broadcast %91 : vector<128x1xf32> to vector<128x128xf32>
    %93 = arith.subf %89, %92 : vector<128x128xf32>
    %94 = math.exp %93 : vector<128x128xf32>
    %cst_41 = arith.constant dense<0.000000e+00> : vector<128xf32>
    %95 = vector.multi_reduction <add>, %94, %cst_41 [1] : vector<128x128xf32> to vector<128xf32>
    %96 = vector.shape_cast %95 : vector<128xf32> to vector<128x1xf32>
    %cst_42 = arith.constant 1.000000e+00 : f32
    %97 = vector.broadcast %cst_42 : f32 to vector<128x1xf32>
    %98 = arith.divf %97, %96 : vector<128x1xf32>
    %99 = vector.broadcast %98 : vector<128x1xf32> to vector<128x128xf32>
    %100 = arith.mulf %94, %99 : vector<128x128xf32>
    %101 = arith.truncf %100 : vector<128x128xf32> to vector<128x128xbf16>
    %cst_43 = arith.constant dense<0.000000e+00> : vector<128x8xf32>
    %102 = tpu.matmul %101, %86, %cst_43 {dimension_numbers = #tpu.dot_dimension_numbers<[1], [0], [0], [1], [0, 0, 1, 1], [], []>} : vector<128x128xbf16>, vector<128x8xbf16>, vector<128x8xf32> -> vector<128x8xf32>
    %103 = arith.addf %83, %100 : vector<128x128xf32>
    %104 = vector.extract_strided_slice %37 {offsets = [0, 24], sizes = [128, 8], strides = [1, 1]} : vector<128x32xbf16> to vector<128x8xbf16>
    %c0_44 = arith.constant 0 : index
    %c24 = arith.constant 24 : index
    %105 = vector.load %arg15[%c0_44, %c24] : memref<128x64xbf16, #tpu.memory_space<vmem>>, vector<128x8xbf16>
    %c0_45 = arith.constant 0 : index
    %c56 = arith.constant 56 : index
    %106 = vector.load %arg15[%c0_45, %c56] : memref<128x64xbf16, #tpu.memory_space<vmem>>, vector<128x8xbf16>
    %cst_46 = arith.constant dense<0.000000e+00> : vector<128x128xf32>
    %107 = tpu.matmul %104, %105, %cst_46 {dimension_numbers = #tpu.dot_dimension_numbers<[1], [1], [0], [0], [0, 0, 1, 0], [], []>} : vector<128x8xbf16>, vector<128x8xbf16>, vector<128x128xf32> -> vector<128x128xf32>
    %108 = vector.broadcast %44 : vector<1x128xf32> to vector<128x128xf32>
    %109 = arith.addf %107, %108 : vector<128x128xf32>
    %cst_47 = arith.constant dense<0xFF800000> : vector<128xf32>
    %110 = vector.multi_reduction <maximumf>, %109, %cst_47 [1] : vector<128x128xf32> to vector<128xf32>
    %111 = vector.shape_cast %110 : vector<128xf32> to vector<128x1xf32>
    %112 = vector.broadcast %111 : vector<128x1xf32> to vector<128x128xf32>
    %113 = arith.subf %109, %112 : vector<128x128xf32>
    %114 = math.exp %113 : vector<128x128xf32>
    %cst_48 = arith.constant dense<0.000000e+00> : vector<128xf32>
    %115 = vector.multi_reduction <add>, %114, %cst_48 [1] : vector<128x128xf32> to vector<128xf32>
    %116 = vector.shape_cast %115 : vector<128xf32> to vector<128x1xf32>
    %cst_49 = arith.constant 1.000000e+00 : f32
    %117 = vector.broadcast %cst_49 : f32 to vector<128x1xf32>
    %118 = arith.divf %117, %116 : vector<128x1xf32>
    %119 = vector.broadcast %118 : vector<128x1xf32> to vector<128x128xf32>
    %120 = arith.mulf %114, %119 : vector<128x128xf32>
    %121 = arith.truncf %120 : vector<128x128xf32> to vector<128x128xbf16>
    %cst_50 = arith.constant dense<0.000000e+00> : vector<128x8xf32>
    %122 = tpu.matmul %121, %106, %cst_50 {dimension_numbers = #tpu.dot_dimension_numbers<[1], [0], [0], [1], [0, 0, 1, 1], [], []>} : vector<128x128xbf16>, vector<128x8xbf16>, vector<128x8xf32> -> vector<128x8xf32>
    %123 = arith.addf %103, %120 : vector<128x128xf32>
    %124 = tpu.concatenate %63, %82, %102, %122 in 1 : vector<128x8xf32>, vector<128x8xf32>, vector<128x8xf32>, vector<128x8xf32> -> vector<128x32xf32>
    %125 = arith.truncf %124 : vector<128x32xf32> to vector<128x32xbf16>
    %c0_51 = arith.constant 0 : index
    %c0_52 = arith.constant 0 : index
    %126 = vector.load %arg11[%c0_51, %c0_52] : memref<32x32xbf16, #tpu.memory_space<vmem>>, vector<32x32xbf16>
    %cst_53 = arith.constant dense<0.000000e+00> : vector<128x32xf32>
    %127 = tpu.matmul %125, %126, %cst_53 {dimension_numbers = #tpu.dot_dimension_numbers<[1], [0], [0], [1], [0, 0, 1, 1], [], []>} : vector<128x32xbf16>, vector<32x32xbf16>, vector<128x32xf32> -> vector<128x32xf32>
    %c0_54 = arith.constant 0 : index
    %c0_55 = arith.constant 0 : index
    %128 = vector.load %arg12[%c0_54, %c0_55] : memref<1x32xf32, #tpu.memory_space<vmem>>, vector<1x32xf32>
    %129 = vector.broadcast %128 : vector<1x32xf32> to vector<128x32xf32>
    %130 = arith.addf %127, %129 : vector<128x32xf32>
    %c0_56 = arith.constant 0 : index
    %c0_57 = arith.constant 0 : index
    %c0_58 = arith.constant 0 : index
    %131 = vector.load %arg13[%c0_56, %c0_57, %c0_58] : memref<1x128x32xf32, #tpu.memory_space<vmem>>, vector<1x128x32xf32>
    %132 = vector.shape_cast %131 : vector<1x128x32xf32> to vector<128x32xf32>
    %133 = vector.shape_cast %130 : vector<128x32xf32> to vector<1x128x32xf32>
    tpu.vector_store %arg13[%c0_56, %c0_57, %c0_58], %133 {strides = array<i32>} : memref<1x128x32xf32, #tpu.memory_space<vmem>>, vector<1x128x32xf32>,
    %cst_59 = arith.constant 2.500000e-01 : f32
    %134 = vector.broadcast %cst_59 : f32 to vector<128x128xf32>
    %135 = arith.mulf %123, %134 : vector<128x128xf32>
    %c0_60 = arith.constant 0 : index
    %c0_61 = arith.constant 0 : index
    %c0_62 = arith.constant 0 : index
    %136 = vector.load %arg14[%c0_60, %c0_61, %c0_62] : memref<1x128x128xf32, #tpu.memory_space<vmem>>, vector<1x128x128xf32>
    %137 = vector.shape_cast %136 : vector<1x128x128xf32> to vector<128x128xf32>
    %138 = vector.shape_cast %135 : vector<128x128xf32> to vector<1x128x128xf32>
    tpu.vector_store %arg14[%c0_60, %c0_61, %c0_62], %138 {strides = array<i32>} : memref<1x128x128xf32, #tpu.memory_space<vmem>>, vector<1x128x128xf32>,
    return
  }
  func.func @transform_0(%arg0: i32, %arg1: i32) -> (i32, i32, i32) {
    %c0_i32 = arith.constant 0 : i32
    %c0_i32_0 = arith.constant 0 : i32
    return %arg0, %arg1, %c0_i32 : i32, i32, i32
  }
  func.func @transform_1(%arg0: i32, %arg1: i32) -> (i32, i32, i32) {
    %c0_i32 = arith.constant 0 : i32
    %c0_i32_0 = arith.constant 0 : i32
    %c0_i32_1 = arith.constant 0 : i32
    return %arg0, %c0_i32, %c0_i32_0 : i32, i32, i32
  }
  func.func @transform_2(%arg0: i32, %arg1: i32) -> (i32, i32, i32) {
    %c0_i32 = arith.constant 0 : i32
    %c0_i32_0 = arith.constant 0 : i32
    %c0_i32_1 = arith.constant 0 : i32
    return %arg0, %c0_i32, %c0_i32_0 : i32, i32, i32
  }
  func.func @transform_3(%arg0: i32, %arg1: i32) -> (i32, i32) {
    %c0_i32 = arith.constant 0 : i32
    %c0_i32_0 = arith.constant 0 : i32
    %c0_i32_1 = arith.constant 0 : i32
    return %c0_i32, %c0_i32_0 : i32, i32
  }
  func.func @transform_4(%arg0: i32, %arg1: i32) -> (i32, i32) {
    %c0_i32 = arith.constant 0 : i32
    %c0_i32_0 = arith.constant 0 : i32
    %c0_i32_1 = arith.constant 0 : i32
    return %c0_i32, %c0_i32_0 : i32, i32
  }
  func.func @transform_5(%arg0: i32, %arg1: i32) -> (i32, i32) {
    %c0_i32 = arith.constant 0 : i32
    %c0_i32_0 = arith.constant 0 : i32
    %c0_i32_1 = arith.constant 0 : i32
    return %c0_i32, %c0_i32_0 : i32, i32
  }
  func.func @transform_6(%arg0: i32, %arg1: i32) -> (i32, i32) {
    %c0_i32 = arith.constant 0 : i32
    %c0_i32_0 = arith.constant 0 : i32
    %c0_i32_1 = arith.constant 0 : i32
    return %c0_i32, %c0_i32_0 : i32, i32
  }
  func.func @transform_7(%arg0: i32, %arg1: i32) -> (i32, i32) {
    %c0_i32 = arith.constant 0 : i32
    %c0_i32_0 = arith.constant 0 : i32
    %c0_i32_1 = arith.constant 0 : i32
    return %c0_i32, %c0_i32_0 : i32, i32
  }
  func.func @transform_8(%arg0: i32, %arg1: i32) -> (i32, i32) {
    %c0_i32 = arith.constant 0 : i32
    %c0_i32_0 = arith.constant 0 : i32
    %c0_i32_1 = arith.constant 0 : i32
    return %c0_i32, %c0_i32_0 : i32, i32
  }
  func.func @transform_9(%arg0: i32, %arg1: i32) -> (i32, i32) {
    %c0_i32 = arith.constant 0 : i32
    %c0_i32_0 = arith.constant 0 : i32
    %c0_i32_1 = arith.constant 0 : i32
    return %c0_i32, %c0_i32_0 : i32, i32
  }
  func.func @transform_10(%arg0: i32, %arg1: i32) -> (i32, i32) {
    %c0_i32 = arith.constant 0 : i32
    %c0_i32_0 = arith.constant 0 : i32
    %c0_i32_1 = arith.constant 0 : i32
    return %c0_i32, %c0_i32_0 : i32, i32
  }
  func.func @transform_11(%arg0: i32, %arg1: i32) -> (i32, i32, i32) {
    %c0_i32 = arith.constant 0 : i32
    %c0_i32_0 = arith.constant 0 : i32
    return %arg0, %arg1, %c0_i32 : i32, i32, i32
  }
  func.func @transform_12(%arg0: i32, %arg1: i32) -> (i32, i32, i32) {
    %c0_i32 = arith.constant 0 : i32
    %c0_i32_0 = arith.constant 0 : i32
    return %arg0, %arg1, %c0_i32 : i32, i32, i32
  }
}

</mosaic_0001>

<llo_original>
// kernel: tpu_custom_call.1
$region0: #{tpu_custom_call.1}
  #allocation0 [shape = 'u32[]', space=smem, size = 0x4, offset = 0x4, fixed_abs, tag = 'smem constant byte address 0x4 - core index']
  #allocation1 [shape = 'u32[144,128]{1,0:T(1,128)}', space=vmem, size = 0x12000, scoped, tag = 'internal scratch']
  #allocation2 [shape = 'bf16[128,64]{1,0:T(16,128)(2,1)}', space=vmem, size = 0x8000, scoped, tag = 'scratch operand']
  %s0 = inlined_call_operand.vmem [shape: f32[2,256,32], index: 0, kind: input, shape index: {}]
  %s1 = inlined_call_operand.vmem [shape: bf16[2,128,32], index: 1, kind: input, shape index: {}]
  %s2 = inlined_call_operand.vmem [shape: s32[2,1,128], index: 2, kind: input, shape index: {}]
  %s3 = inlined_call_operand.vmem [shape: f32[1,32], index: 3, kind: input, shape index: {}]
  %s4 = inlined_call_operand.vmem [shape: f32[1,32], index: 4, kind: input, shape index: {}]
  %s5 = inlined_call_operand.vmem [shape: bf16[32,32], index: 5, kind: input, shape index: {}]
  %s6 = inlined_call_operand.vmem [shape: bf16[32,64], index: 6, kind: input, shape index: {}]
  %s7 = inlined_call_operand.vmem [shape: f32[1,32], index: 7, kind: input, shape index: {}]
  %s8 = inlined_call_operand.vmem [shape: f32[1,64], index: 8, kind: input, shape index: {}]
  %s9 = inlined_call_operand.vmem [shape: bf16[32,32], index: 9, kind: input, shape index: {}]
  %s10 = inlined_call_operand.vmem [shape: f32[1,32], index: 10, kind: input, shape index: {}]
  %s11 = inlined_call_operand.vmem [shape: f32[2,256,32], index: 11, kind: output, shape index: {0}]
  %s12 = inlined_call_operand.hbm [shape: f32[2,256,128], index: 12, kind: output, shape index: {1}]
  %13 = xla_tuple %s11, %s12
  %s14 = sld [smem:[#allocation0]]
  $region89: #{tpu_custom_call.1} parent=0
    _
  %s16 = ssub.s32 1, %s14
  %s17 = scalar_select 0, %s16, %s14
  $region1: #{tpu_custom_call.1} parent=0
    #allocation3 [shape = 'u8[131072]{0}', space=vmem, size = 0x20000, scoped, tag = 'output window, operand 1']
    #allocation4 [shape = 's32[2]{0}', space=sflag, size = 0x8, scoped, tag = 'scoped memory for tpu_custom_call.1']
    %18 = vsyncpa [#allocation4], 0
    %s19 = scalar_lea.sflag [#allocation4], 1
    %20 = vsyncpa %s19, 0
    loop: start=0, step=1, limit=6
    $region2: #{tpu_custom_call.1} parent=1 // loop_pre_header
      _
    $region3: #{tpu_custom_call.1} parent=1 // loop_header
      %s22 = sphi 0, %s26
      %p23 = scmp.ge.s32.totalorder %s22, 6
      %s29 = sphi 0, %s41
      %s30 = sphi 0, %s37
      %s31 = sphi 0, %s29
      %s32 = sphi 0, %s30
      %s33 = sphi 0, %s31
      %s34 = sphi 0, %s32
      %s46 = sphi 0, %s48
      %s49 = sphi 0, %s46
      %s50 = sphi 0, %s49
      %s66 = sphi 0, %s50
      %s72 = sphi 0, %s74
      %s75 = sphi 0, %s72
      %s76 = sphi 0, %s75
      %s92 = sphi 0, %s76
      %s98 = sphi 0, %s100
      %s101 = sphi 0, %s98
      %s102 = sphi 0, %s101
      %s118 = sphi 0, %s102
      %s122 = sphi 0, %s122
      %s124 = sphi 0, %s122
      %s125 = sphi 0, %s124
      %s139 = sphi 0, %s125
      %s143 = sphi 0, %s143
      %s145 = sphi 0, %s143
      %s146 = sphi 0, %s145
      %s160 = sphi 0, %s146
      %s164 = sphi 0, %s164
      %s166 = sphi 0, %s164
      %s167 = sphi 0, %s166
      %s181 = sphi 0, %s167
      %s185 = sphi 0, %s185
      %s187 = sphi 0, %s185
      %s188 = sphi 0, %s187
      %s202 = sphi 0, %s188
      %s206 = sphi 0, %s206
      %s208 = sphi 0, %s206
      %s209 = sphi 0, %s208
      %s223 = sphi 0, %s209
      %s227 = sphi 0, %s227
      %s229 = sphi 0, %s227
      %s230 = sphi 0, %s229
      %s244 = sphi 0, %s230
      %s248 = sphi 0, %s248
      %s250 = sphi 0, %s248
      %s251 = sphi 0, %s250
      %s265 = sphi 0, %s251
      %s269 = sphi 0, %s269
      %s271 = sphi 0, %s269
      %s272 = sphi 0, %s271
      %s286 = sphi 0, %s272
      %s294 = sphi 0, %s296
      %s297 = sphi 0, %s294
      %s298 = sphi 0, %s297
      %s314 = sphi 0, %s298
      %s322 = sphi 0, %s324
      %s325 = sphi 0, %s322
      %s326 = sphi 0, %s325
      %s342 = sphi 0, %s326
    $region4: #{tpu_custom_call.1} parent=1 // loop_header_branch
      %25 = sbr.rel (%p23) target = $region8
    $region5: #{tpu_custom_call.1} parent=1 // loop_body
      %s27 = ssub.s32 %s22, 1
      %s28 = ssub.s32 %s22, 2
      %s35 = sadd.s32 1, %s30
      %p36 = scmp.ge.s32.totalorder %s35, 2
      %s37 = scalar_select %p36, 0, %s35
      %s38 = sadd.s32 1, %s29
      %s39 = scalar_select %p36, %s38, %s29
      %p40 = scmp.ge.s32.totalorder %s39, 2
      %s41 = scalar_select %p40, 0, %s39
      %s42 = ssub.s32 %s29, %s41
      %s43 = ssub.s32 %s30, %s37
      %s44 = sor.u32 %s42, %s43
      %p45 = scmp.eq.s32.totalorder %s44, 0
      %s47 = sadd.s32 %s46, 1
      %s48 = scalar_select %p45, %s46, %s47
      %p51 = pneg %p45
      %p52 = scmp.eq.s32.totalorder %s22, 3
      %p53 = por %p51, %p52
      %p54 = scmp.ne.s32.totalorder %s46, %s49
      %p55 = scmp.eq.s32.totalorder %s22, 0
      %p56 = por %p54, %p55
      %p57 = scmp.ne.s32.totalorder %s46, %s49
      %p58 = scmp.eq.s32.totalorder %s27, 3
      %p59 = por %p57, %p58
      %p60 = scmp.ne.s32.totalorder %s49, %s50
      %p61 = scmp.eq.s32.totalorder %s27, 0
      %p62 = por %p60, %p61
      %p63 = scmp.ne.s32.totalorder %s49, %s50
      %p64 = scmp.eq.s32.totalorder %s28, 3
      %p65 = por %p63, %p64
      %p67 = scmp.ne.s32.totalorder %s50, %s66
      %p68 = scmp.eq.s32.totalorder %s28, 0
      %p69 = por %p67, %p68
      %s70 = ssub.s32 %s29, %s41
      %p71 = scmp.eq.s32.totalorder %s70, 0
      %s73 = sadd.s32 %s72, 1
      %s74 = scalar_select %p71, %s72, %s73
      %p77 = pneg %p71
      %p78 = scmp.eq.s32.totalorder %s22, 3
      %p79 = por %p77, %p78
      %p80 = scmp.ne.s32.totalorder %s72, %s75
      %p81 = scmp.eq.s32.totalorder %s22, 0
      %p82 = por %p80, %p81
      %p83 = scmp.ne.s32.totalorder %s72, %s75
      %p84 = scmp.eq.s32.totalorder %s27, 3
      %p85 = por %p83, %p84
      %p86 = scmp.ne.s32.totalorder %s75, %s76
      %p87 = scmp.eq.s32.totalorder %s27, 0
      %p88 = por %p86, %p87
      %p89 = scmp.ne.s32.totalorder %s75, %s76
      %p90 = scmp.eq.s32.totalorder %s28, 3
      %p91 = por %p89, %p90
      %p93 = scmp.ne.s32.totalorder %s76, %s92
      %p94 = scmp.eq.s32.totalorder %s28, 0
      %p95 = por %p93, %p94
      %s96 = ssub.s32 %s29, %s41
      %p97 = scmp.eq.s32.totalorder %s96, 0
      %s99 = sadd.s32 %s98, 1
      %s100 = scalar_select %p97, %s98, %s99
      %p103 = pneg %p97
      %p104 = scmp.eq.s32.totalorder %s22, 3
      %p105 = por %p103, %p104
      %p106 = scmp.ne.s32.totalorder %s98, %s101
      %p107 = scmp.eq.s32.totalorder %s22, 0
      %p108 = por %p106, %p107
      %p109 = scmp.ne.s32.totalorder %s98, %s101
      %p110 = scmp.eq.s32.totalorder %s27, 3
      %p111 = por %p109, %p110
      %p112 = scmp.ne.s32.totalorder %s101, %s102
      %p113 = scmp.eq.s32.totalorder %s27, 0
      %p114 = por %p112, %p113
      %p115 = scmp.ne.s32.totalorder %s101, %s102
      %p116 = scmp.eq.s32.totalorder %s28, 3
      %p117 = por %p115, %p116
      %p119 = scmp.ne.s32.totalorder %s102, %s118
      %p120 = scmp.eq.s32.totalorder %s28, 0
      %p121 = por %p119, %p120
      %s123 = sadd.s32 %s122, 1
      %p126 = scmp.eq.s32.totalorder %s22, 3
      %p127 = scmp.ne.s32.totalorder %s122, %s124
      %p128 = scmp.eq.s32.totalorder %s22, 0
      %p129 = por %p127, %p128
      %p130 = scmp.ne.s32.totalorder %s122, %s124
      %p131 = scmp.eq.s32.totalorder %s27, 3
      %p132 = por %p130, %p131
      %p133 = scmp.ne.s32.totalorder %s124, %s125
      %p134 = scmp.eq.s32.totalorder %s27, 0
      %p135 = por %p133, %p134
      %p136 = scmp.ne.s32.totalorder %s124, %s125
      %p137 = scmp.eq.s32.totalorder %s28, 3
      %p138 = por %p136, %p137
      %p140 = scmp.ne.s32.totalorder %s125, %s139
      %p141 = scmp.eq.s32.totalorder %s28, 0
      %p142 = por %p140, %p141
      %s144 = sadd.s32 %s143, 1
      %p147 = scmp.eq.s32.totalorder %s22, 3
      %p148 = scmp.ne.s32.totalorder %s143, %s145
      %p149 = scmp.eq.s32.totalorder %s22, 0
      %p150 = por %p148, %p149
      %p151 = scmp.ne.s32.totalorder %s143, %s145
      %p152 = scmp.eq.s32.totalorder %s27, 3
      %p153 = por %p151, %p152
      %p154 = scmp.ne.s32.totalorder %s145, %s146
      %p155 = scmp.eq.s32.totalorder %s27, 0
      %p156 = por %p154, %p155
      %p157 = scmp.ne.s32.totalorder %s145, %s146
      %p158 = scmp.eq.s32.totalorder %s28, 3
      %p159 = por %p157, %p158
      %p161 = scmp.ne.s32.totalorder %s146, %s160
      %p162 = scmp.eq.s32.totalorder %s28, 0
      %p163 = por %p161, %p162
      %s165 = sadd.s32 %s164, 1
      %p168 = scmp.eq.s32.totalorder %s22, 3
      %p169 = scmp.ne.s32.totalorder %s164, %s166
      %p170 = scmp.eq.s32.totalorder %s22, 0
      %p171 = por %p169, %p170
      %p172 = scmp.ne.s32.totalorder %s164, %s166
      %p173 = scmp.eq.s32.totalorder %s27, 3
      %p174 = por %p172, %p173
      %p175 = scmp.ne.s32.totalorder %s166, %s167
      %p176 = scmp.eq.s32.totalorder %s27, 0
      %p177 = por %p175, %p176
      %p178 = scmp.ne.s32.totalorder %s166, %s167
      %p179 = scmp.eq.s32.totalorder %s28, 3
      %p180 = por %p178, %p179
      %p182 = scmp.ne.s32.totalorder %s167, %s181
      %p183 = scmp.eq.s32.totalorder %s28, 0
      %p184 = por %p182, %p183
      %s186 = sadd.s32 %s185, 1
      %p189 = scmp.eq.s32.totalorder %s22, 3
      %p190 = scmp.ne.s32.totalorder %s185, %s187
      %p191 = scmp.eq.s32.totalorder %s22, 0
      %p192 = por %p190, %p191
      %p193 = scmp.ne.s32.totalorder %s185, %s187
      %p194 = scmp.eq.s32.totalorder %s27, 3
      %p195 = por %p193, %p194
      %p196 = scmp.ne.s32.totalorder %s187, %s188
      %p197 = scmp.eq.s32.totalorder %s27, 0
      %p198 = por %p196, %p197
      %p199 = scmp.ne.s32.totalorder %s187, %s188
      %p200 = scmp.eq.s32.totalorder %s28, 3
      %p201 = por %p199, %p200
      %p203 = scmp.ne.s32.totalorder %s188, %s202
      %p204 = scmp.eq.s32.totalorder %s28, 0
      %p205 = por %p203, %p204
      %s207 = sadd.s32 %s206, 1
      %p210 = scmp.eq.s32.totalorder %s22, 3
      %p211 = scmp.ne.s32.totalorder %s206, %s208
      %p212 = scmp.eq.s32.totalorder %s22, 0
      %p213 = por %p211, %p212
      %p214 = scmp.ne.s32.totalorder %s206, %s208
      %p215 = scmp.eq.s32.totalorder %s27, 3
      %p216 = por %p214, %p215
      %p217 = scmp.ne.s32.totalorder %s208, %s209
      %p218 = scmp.eq.s32.totalorder %s27, 0
      %p219 = por %p217, %p218
      %p220 = scmp.ne.s32.totalorder %s208, %s209
      %p221 = scmp.eq.s32.totalorder %s28, 3
      %p222 = por %p220, %p221
      %p224 = scmp.ne.s32.totalorder %s209, %s223
      %p225 = scmp.eq.s32.totalorder %s28, 0
      %p226 = por %p224, %p225
      %s228 = sadd.s32 %s227, 1
      %p231 = scmp.eq.s32.totalorder %s22, 3
      %p232 = scmp.ne.s32.totalorder %s227, %s229
      %p233 = scmp.eq.s32.totalorder %s22, 0
      %p234 = por %p232, %p233
      %p235 = scmp.ne.s32.totalorder %s227, %s229
      %p236 = scmp.eq.s32.totalorder %s27, 3
      %p237 = por %p235, %p236
      %p238 = scmp.ne.s32.totalorder %s229, %s230
      %p239 = scmp.eq.s32.totalorder %s27, 0
      %p240 = por %p238, %p239
      %p241 = scmp.ne.s32.totalorder %s229, %s230
      %p242 = scmp.eq.s32.totalorder %s28, 3
      %p243 = por %p241, %p242
      %p245 = scmp.ne.s32.totalorder %s230, %s244
      %p246 = scmp.eq.s32.totalorder %s28, 0
      %p247 = por %p245, %p246
      %s249 = sadd.s32 %s248, 1
      %p252 = scmp.eq.s32.totalorder %s22, 3
      %p253 = scmp.ne.s32.totalorder %s248, %s250
      %p254 = scmp.eq.s32.totalorder %s22, 0
      %p255 = por %p253, %p254
      %p256 = scmp.ne.s32.totalorder %s248, %s250
      %p257 = scmp.eq.s32.totalorder %s27, 3
      %p258 = por %p256, %p257
      %p259 = scmp.ne.s32.totalorder %s250, %s251
      %p260 = scmp.eq.s32.totalorder %s27, 0
      %p261 = por %p259, %p260
      %p262 = scmp.ne.s32.totalorder %s250, %s251
      %p263 = scmp.eq.s32.totalorder %s28, 3
      %p264 = por %p262, %p263
      %p266 = scmp.ne.s32.totalorder %s251, %s265
      %p267 = scmp.eq.s32.totalorder %s28, 0
      %p268 = por %p266, %p267
      %s270 = sadd.s32 %s269, 1
      %p273 = scmp.eq.s32.totalorder %s22, 3
      %p274 = scmp.ne.s32.totalorder %s269, %s271
      %p275 = scmp.eq.s32.totalorder %s22, 0
      %p276 = por %p274, %p275
      %p277 = scmp.ne.s32.totalorder %s269, %s271
      %p278 = scmp.eq.s32.totalorder %s27, 3
      %p279 = por %p277, %p278
      %p280 = scmp.ne.s32.totalorder %s271, %s272
      %p281 = scmp.eq.s32.totalorder %s27, 0
      %p282 = por %p280, %p281
      %p283 = scmp.ne.s32.totalorder %s271, %s272
      %p284 = scmp.eq.s32.totalorder %s28, 3
      %p285 = por %p283, %p284
      %p287 = scmp.ne.s32.totalorder %s272, %s286
      %p288 = scmp.eq.s32.totalorder %s28, 0
      %p289 = por %p287, %p288
      %s290 = ssub.s32 %s29, %s41
      %s291 = ssub.s32 %s30, %s37
      %s292 = sor.u32 %s290, %s291
      %p293 = scmp.eq.s32.totalorder %s292, 0
      %s295 = sadd.s32 %s294, 1
      %s296 = scalar_select %p293, %s294, %s295
      %p299 = pneg %p293
      %p300 = scmp.eq.s32.totalorder %s22, 3
      %p301 = por %p299, %p300
      %p302 = scmp.ne.s32.totalorder %s294, %s297
      %p303 = scmp.eq.s32.totalorder %s22, 0
      %p304 = por %p302, %p303
      %p305 = scmp.ne.s32.totalorder %s294, %s297
      %p306 = scmp.eq.s32.totalorder %s27, 3
      %p307 = por %p305, %p306
      %p308 = scmp.ne.s32.totalorder %s297, %s298
      %p309 = scmp.eq.s32.totalorder %s27, 0
      %p310 = por %p308, %p309
      %p311 = scmp.ne.s32.totalorder %s297, %s298
      %p312 = scmp.eq.s32.totalorder %s28, 3
      %p313 = por %p311, %p312
      %p315 = scmp.ne.s32.totalorder %s298, %s314
      %p316 = scmp.eq.s32.totalorder %s28, 0
      %p317 = por %p315, %p316
      %s318 = ssub.s32 %s29, %s41
      %s319 = ssub.s32 %s30, %s37
      %s320 = sor.u32 %s318, %s319
      %p321 = scmp.eq.s32.totalorder %s320, 0
      %s323 = sadd.s32 %s322, 1
      %s324 = scalar_select %p321, %s322, %s323
      %p327 = pneg %p321
      %p328 = scmp.eq.s32.totalorder %s22, 3
      %p329 = por %p327, %p328
      %p330 = scmp.ne.s32.totalorder %s322, %s325
      %p331 = scmp.eq.s32.totalorder %s22, 0
      %p332 = por %p330, %p331
      %p333 = scmp.ne.s32.totalorder %s322, %s325
      %p334 = scmp.eq.s32.totalorder %s27, 3
      %p335 = por %p333, %p334
      %p336 = scmp.ne.s32.totalorder %s325, %s326
      %p337 = scmp.eq.s32.totalorder %s27, 0
      %p338 = por %p336, %p337
      %p339 = scmp.ne.s32.totalorder %s325, %s326
      %p340 = scmp.eq.s32.totalorder %s28, 3
      %p341 = por %p339, %p340
      %p343 = scmp.ne.s32.totalorder %s326, %s342
      %p344 = scmp.eq.s32.totalorder %s28, 0
      %p345 = por %p343, %p344
      %p346 = scmp.le.s32.totalorder 1, %s22
      %p347 = scmp.lt.s32.totalorder %s22, 5
      %p348 = pnand %p346, %p347
      %p349 = pneg %p348
      // Predicated region
      $region9: #{tpu_custom_call.1} parent=5 // pred_check
        _
      $region10: #{tpu_custom_call.1} parent=5 // pred_check_branch
        %351 = sbr.rel (%p348) target = $region12
      $region11: #{tpu_custom_call.1} parent=5 // pred_region
        %s352 = ssub.s32 %s22, 1
        // Predicated region
        $region13: #{tpu_custom_call.1} parent=11 // pred_check
          %p353 = pneg %p135
        $region14: #{tpu_custom_call.1} parent=11 // pred_check_branch
          %355 = sbr.rel (%p353) target = $region16
        $region15: #{tpu_custom_call.1} parent=11 // pred_region
          _
        $region16: #{tpu_custom_call.1} parent=11 // pred_fallthru
          _
        // Predicated region
        $region17: #{tpu_custom_call.1} parent=11 // pred_check
          %p356 = pneg %p156
        $region18: #{tpu_custom_call.1} parent=11 // pred_check_branch
          %358 = sbr.rel (%p356) target = $region20
        $region19: #{tpu_custom_call.1} parent=11 // pred_region
          _
        $region20: #{tpu_custom_call.1} parent=11 // pred_fallthru
          _
        // Predicated region
        $region21: #{tpu_custom_call.1} parent=11 // pred_check
          %p359 = pneg %p177
        $region22: #{tpu_custom_call.1} parent=11 // pred_check_branch
          %361 = sbr.rel (%p359) target = $region24
        $region23: #{tpu_custom_call.1} parent=11 // pred_region
          _
        $region24: #{tpu_custom_call.1} parent=11 // pred_fallthru
          _
        // Predicated region
        $region25: #{tpu_custom_call.1} parent=11 // pred_check
          %p362 = pneg %p198
        $region26: #{tpu_custom_call.1} parent=11 // pred_check_branch
          %364 = sbr.rel (%p362) target = $region28
        $region27: #{tpu_custom_call.1} parent=11 // pred_region
          _
        $region28: #{tpu_custom_call.1} parent=11 // pred_fallthru
          _
        // Predicated region
        $region29: #{tpu_custom_call.1} parent=11 // pred_check
          %p365 = pneg %p219
        $region30: #{tpu_custom_call.1} parent=11 // pred_check_branch
          %367 = sbr.rel (%p365) target = $region32
        $region31: #{tpu_custom_call.1} parent=11 // pred_region
          _
        $region32: #{tpu_custom_call.1} parent=11 // pred_fallthru
          _
        // Predicated region
        $region33: #{tpu_custom_call.1} parent=11 // pred_check
          %p368 = pneg %p240
        $region34: #{tpu_custom_call.1} parent=11 // pred_check_branch
          %370 = sbr.rel (%p368) target = $region36
        $region35: #{tpu_custom_call.1} parent=11 // pred_region
          _
        $region36: #{tpu_custom_call.1} parent=11 // pred_fallthru
          _
        // Predicated region
        $region37: #{tpu_custom_call.1} parent=11 // pred_check
          %p371 = pneg %p261
        $region38: #{tpu_custom_call.1} parent=11 // pred_check_branch
          %373 = sbr.rel (%p371) target = $region40
        $region39: #{tpu_custom_call.1} parent=11 // pred_region
          _
        $region40: #{tpu_custom_call.1} parent=11 // pred_fallthru
          _
        // Predicated region
        $region41: #{tpu_custom_call.1} parent=11 // pred_check
          %p374 = pneg %p282
        $region42: #{tpu_custom_call.1} parent=11 // pred_check_branch
          %376 = sbr.rel (%p374) target = $region44
        $region43: #{tpu_custom_call.1} parent=11 // pred_region
          _
        $region44: #{tpu_custom_call.1} parent=11 // pred_fallthru
          _
      $region12: #{tpu_custom_call.1} parent=5 // pred_fallthru
        _
      %p377 = scmp.lt.s32.totalorder %s22, 4
      // Predicated region
      $region45: #{tpu_custom_call.1} parent=5 // pred_check
        %p378 = pneg %p377
      $region46: #{tpu_custom_call.1} parent=5 // pred_check_branch
        %380 = sbr.rel (%p378) target = $region48
      $region47: #{tpu_custom_call.1} parent=5 // pred_region
        // Predicated region
        $region49: #{tpu_custom_call.1} parent=47 // pred_check
          %p381 = pneg %p56
        $region50: #{tpu_custom_call.1} parent=47 // pred_check_branch
          %383 = sbr.rel (%p381) target = $region52
        $region51: #{tpu_custom_call.1} parent=47 // pred_region
          %s384 = smul.u32 16, %s30
          %p385 = scmp.lt.s32.totalorder %s29, 1
          %s386 = scalar_select %p385, %s29, 1
          %p387 = scmp.lt.s32.totalorder %s384, 31
          %s388 = scalar_select %p387, %s384, 31
          %s389 = smul.addr %s386, 32
          %s390 = sadd.s32 %s388, %s389
          %s391 = smul.addr %s390, 8
          %s392 = scalar_lea.vmem %s0, %s391
          %s393 = smul.u32 16, %s30
        $region52: #{tpu_custom_call.1} parent=47 // pred_fallthru
          _
        // Predicated region
        $region53: #{tpu_custom_call.1} parent=47 // pred_check
          %p394 = pneg %p82
        $region54: #{tpu_custom_call.1} parent=47 // pred_check_branch
          %396 = sbr.rel (%p394) target = $region56
        $region55: #{tpu_custom_call.1} parent=47 // pred_region
          %p397 = scmp.lt.s32.totalorder %s29, 1
          %s398 = scalar_select %p397, %s29, 1
          %s399 = smul.addr %s398, 16
          %s400 = smul.addr %s399, 4
          %s401 = scalar_lea.vmem %s1, %s400
        $region56: #{tpu_custom_call.1} parent=47 // pred_fallthru
          _
        // Predicated region
        $region57: #{tpu_custom_call.1} parent=47 // pred_check
          %p402 = pneg %p108
        $region58: #{tpu_custom_call.1} parent=47 // pred_check_branch
          %404 = sbr.rel (%p402) target = $region60
        $region59: #{tpu_custom_call.1} parent=47 // pred_region
          %p405 = scmp.lt.s32.totalorder %s29, 1
          %s406 = scalar_select %p405, %s29, 1
          %s407 = scalar_lea.vmem %s2, %s406
        $region60: #{tpu_custom_call.1} parent=47 // pred_fallthru
          _
      $region48: #{tpu_custom_call.1} parent=5 // pred_fallthru
        _
      %p408 = scmp.le.s32.totalorder 1, %s22
      %p409 = scmp.lt.s32.totalorder %s22, 5
      %p410 = pnand %p408, %p409
      %p411 = pneg %p410
      // Predicated region
      $region61: #{tpu_custom_call.1} parent=5 // pred_check
        _
      $region62: #{tpu_custom_call.1} parent=5 // pred_check_branch
        %413 = sbr.rel (%p410) target = $region64
      $region63: #{tpu_custom_call.1} parent=5 // pred_region
        %s414 = ssub.s32 %s22, 1
        %s415 = smul.u32 16, %s32
        %p416 = scmp.lt.s32.totalorder %s31, 1
        %s417 = scalar_select %p416, %s31, 1
        %p418 = scmp.lt.s32.totalorder %s415, 31
        %s419 = scalar_select %p418, %s415, 31
        %s420 = smul.addr %s417, 32
        %s421 = sadd.s32 %s419, %s420
        %s422 = smul.addr %s421, 8
        %s423 = scalar_lea.vmem %s0, %s422
        %p424 = pneg %p62
        %p425 = pneg %p59
        %p426 = scmp.lt.s32.totalorder %s31, 1
        %s427 = scalar_select %p426, %s31, 1
        %s428 = smul.addr %s427, 16
        %s429 = smul.addr %s428, 4
        %s430 = scalar_lea.vmem %s1, %s429
        %p431 = pneg %p88
        %p432 = pneg %p85
        %p433 = scmp.lt.s32.totalorder %s31, 1
        %s434 = scalar_select %p433, %s31, 1
        %s435 = scalar_lea.vmem %s2, %s434
        %p436 = pneg %p114
        %p437 = pneg %p111
        %p438 = pneg %p135
        %p439 = pneg %p132
        %p440 = pneg %p156
        %p441 = pneg %p153
        %p442 = pneg %p177
        %p443 = pneg %p174
        %p444 = pneg %p198
        %p445 = pneg %p195
        %p446 = pneg %p219
        %p447 = pneg %p216
        %p448 = pneg %p240
        %p449 = pneg %p237
        %p450 = pneg %p261
        %p451 = pneg %p258
        %p452 = pneg %p282
        %p453 = pneg %p279
        %p454 = pneg %p310
        %p455 = pneg %p307
        %s456 = smul.u32 16, %s32
        %p457 = scmp.lt.s32.totalorder %s31, 1
        %s458 = scalar_select %p457, %s31, 1
        %p459 = scmp.lt.s32.totalorder %s456, 31
        %s460 = scalar_select %p459, %s456, 31
        %s461 = smul.addr %s458, 32
        %s462 = sadd.s32 %s460, %s461
        %s463 = smul.addr %s462, 8
        %s464 = scalar_lea.vmem %s11, %s463
        %p465 = pneg %p338
        %p466 = pneg %p335
        %s467 = sand.u32 %s325, 1
        %s468 = scalar_lea.sflag [#allocation4], %s467
        %s469 = sand.u32 %s325, 1
        %s470 = smul.addr %s469, 128
        %s471 = scalar_lea.vmem [#allocation3], %s470
        %s472 = smul.u32 16, %s32
        %p473 = scmp.lt.s32.totalorder %s31, 1
        %s474 = scalar_select %p473, %s31, 1
        %p475 = scmp.lt.s32.totalorder %s472, 31
        %s476 = scalar_select %p475, %s472, 31
        %s477 = smul.addr %s474, 32
        %s478 = sadd.s32 %s476, %s477
        %s479 = smul.addr %s478, 8
        %s480 = scalar_lea.vmem %s0, %s479
        %s481 = smul.u32 16, %s32
        %p482 = scmp.lt.s32.totalorder %s31, 1
        %s483 = scalar_select %p482, %s31, 1
        %s484 = smul.addr %s483, 16
        %s485 = smul.addr %s484, 4
        %s486 = scalar_lea.vmem %s1, %s485
        %p487 = scmp.lt.s32.totalorder %s31, 1
        %s488 = scalar_select %p487, %s31, 1
        %s489 = scalar_lea.vmem %s2, %s488
        %s490 = smul.u32 16, %s32
        %p491 = scmp.lt.s32.totalorder %s31, 1
        %s492 = scalar_select %p491, %s31, 1
        %p493 = scmp.lt.s32.totalorder %s490, 31
        %s494 = scalar_select %p493, %s490, 31
        %s495 = smul.addr %s492, 32
        %s496 = sadd.s32 %s494, %s495
        %s497 = smul.addr %s496, 8
        %s498 = scalar_lea.vmem %s11, %s497
        %s499 = smul.u32 16, %s32
        %s500 = smul.u32 16, %s32
        %p502 = scmp.eq.s32.totalorder %s32, 0
        // Predicated region
        $region65: #{tpu_custom_call.1} parent=63 // pred_check
          %p503 = pneg %p502
        $region66: #{tpu_custom_call.1} parent=63 // pred_check_branch
          %505 = sbr.rel (%p503) target = $region68
        $region67: #{tpu_custom_call.1} parent=63 // pred_region
          %v506 = vld [vmem:[%s486] sm:$0xf]
          %v507 = vld [vmem:[%s486 + $0x4] sm:$0xf]
          %v508 = vld [vmem:[%s486 + $0x8] sm:$0xf]
          %v509 = vld [vmem:[%s486 + $0xc] sm:$0xf]
          %v510 = vld [vmem:[%s486 + $0x10] sm:$0xf]
          %v511 = vld [vmem:[%s486 + $0x14] sm:$0xf]
          %v512 = vld [vmem:[%s486 + $0x18] sm:$0xf]
          %v513 = vld [vmem:[%s486 + $0x1c] sm:$0xf]
          %v514 = vld [vmem:[%s486 + $0x20] sm:$0xf]
          %v515 = vld [vmem:[%s486 + $0x24] sm:$0xf]
          %v516 = vld [vmem:[%s486 + $0x28] sm:$0xf]
          %v517 = vld [vmem:[%s486 + $0x2c] sm:$0xf]
          %v518 = vld [vmem:[%s486 + $0x30] sm:$0xf]
          %v519 = vld [vmem:[%s486 + $0x34] sm:$0xf]
          %v520 = vld [vmem:[%s486 + $0x38] sm:$0xf]
          %v521 = vld [vmem:[%s486 + $0x3c] sm:$0xf]
          %v522 = vld [vmem:[%s6] sm:$0xf]
          %v523 = vld [vmem:[%s6 + $0x4] sm:$0xf]
          %v524 = vld [vmem:[%s6 + $0x8] sm:$0xf]
          %v525 = vld [vmem:[%s6 + $0xc] sm:$0xf]
          %v526 = vld [vmem:[%s8] sm:$0x1]
          %v528 = vlaneseq
          %v529 = vshrl.u32 %v528, 7
          %v530 = vsub.s32 0, %v529
          %v531 = vrot.slane %v526, %v530
          %v549 = vunpack.c.l.b16 %v506
          %v550 = vunpack.c.l.b16 %v507
          %v551 = vunpack.c.l.b16 %v508
          %v552 = vunpack.c.l.b16 %v509
          %v553 = vunpack.c.l.b16 %v510
          %v554 = vunpack.c.l.b16 %v511
          %v555 = vunpack.c.l.b16 %v512
          %v556 = vunpack.c.l.b16 %v513
          %v557 = vunpack.c.l.b16 %v514
          %v558 = vunpack.c.l.b16 %v515
          %v559 = vunpack.c.l.b16 %v516
          %v560 = vunpack.c.l.b16 %v517
          %v561 = vunpack.c.l.b16 %v518
          %v562 = vunpack.c.l.b16 %v519
          %v563 = vunpack.c.l.b16 %v520
          %v564 = vunpack.c.l.b16 %v521
          %v565 = vpack.c.b16 %v550, %v549
          %v566 = vpack.c.b16 %v552, %v551
          %v567 = vpack.c.b16 %v554, %v553
          %v568 = vpack.c.b16 %v556, %v555
          %v569 = vpack.c.b16 %v558, %v557
          %v570 = vpack.c.b16 %v560, %v559
          %v571 = vpack.c.b16 %v562, %v561
          %v572 = vpack.c.b16 %v564, %v563
          %v577 = vunpack.c.l.b16 %v522
          %v578 = vunpack.c.l.b16 %v523
          %v579 = vunpack.c.l.b16 %v524
          %v580 = vunpack.c.l.b16 %v525
          %v581 = vpack.c.b16 %v578, %v577
          %v582 = vpack.c.b16 %v580, %v579
          %vm585 = vcmask 261120
          %v587 = vsel %vm585, %v565, 0
          %v590 = vsel %vm585, %v566, 0
          %v593 = vsel %vm585, %v567, 0
          %v596 = vsel %vm585, %v568, 0
          %v599 = vsel %vm585, %v569, 0
          %v602 = vsel %vm585, %v570, 0
          %v605 = vsel %vm585, %v571, 0
          %v608 = vsel %vm585, %v572, 0
          %610 = vmatprep.subr.bf16.mxu0 0
          %611 = vmatpush1.bf16.msra.mxu0 %v581
          %612 = vmatprep.subr.bf16.mxu0 0
          %613 = vmatpush1.bf16.msra.mxu0 %v582
          %614 = vmatprep.subr.bf16.mxu0 0
          %615 = vmatpush1.bf16.msra.mxu0 0
          %616 = vmatprep.subr.bf16.mxu0 0
          %617 = vmatpush1.bf16.msra.mxu0 0
          %618 = vmatprep.subr.bf16.mxu0 0
          %619 = vmatpush1.bf16.msra.mxu0 0
          %620 = vmatprep.subr.bf16.mxu0 0
          %621 = vmatpush1.bf16.msra.mxu0 0
          %622 = vmatprep.subr.bf16.mxu0 0
          %623 = vmatpush1.bf16.msra.mxu0 0
          %624 = vmatprep.subr.bf16.mxu0 0
          %625 = vmatpush1.bf16.msra.mxu0 0
          %626 = vmatprep.subr.bf16.mxu0 0
          %627 = vmatpush1.bf16.msra.mxu0 0
          %628 = vmatprep.subr.bf16.mxu0 0
          %629 = vmatpush1.bf16.msra.mxu0 0
          %630 = vmatprep.subr.bf16.mxu0 0
          %631 = vmatpush1.bf16.msra.mxu0 0
          %632 = vmatprep.subr.bf16.mxu0 0
          %633 = vmatpush1.bf16.msra.mxu0 0
          %634 = vmatprep.subr.bf16.mxu0 0
          %635 = vmatpush1.bf16.msra.mxu0 0
          %636 = vmatprep.subr.bf16.mxu0 0
          %637 = vmatpush1.bf16.msra.mxu0 0
          %638 = vmatprep.subr.bf16.mxu0 0
          %639 = vmatpush1.bf16.msra.mxu0 0
          %640 = vmatprep.subr.bf16.mxu0 0
          %641 = vmatpush1.bf16.msra.mxu0 0
          %642 = vmatprep.mubr.bf16.mxu0 0
          %643 = vmatmul.mubr.bf16.gmra.mrb[0].mxu0 %v587
          %v644 = vpop.f32.mrb[0].mxu0
          %v645 = vadd.f32 %v531, %v644
          %v646 = vpop.f32.mrb[0].mxu0
          %v647 = vpop.f32.mrb[0].mxu0
          %v648 = vadd.f32 %v531, %v647
          %v649 = vpop.f32.mrb[0].mxu0
          %650 = vmatprep.mubr.bf16.mxu0 0
          %651 = vmatmul.mubr.bf16.gmra.mrb[0].mxu0 %v590
          %v652 = vpop.f32.mrb[0].mxu0
          %v653 = vadd.f32 %v531, %v652
          %v654 = vpop.f32.mrb[0].mxu0
          %v655 = vpop.f32.mrb[0].mxu0
          %v656 = vadd.f32 %v531, %v655
          %v657 = vpop.f32.mrb[0].mxu0
          %658 = vmatprep.mubr.bf16.mxu0 0
          %659 = vmatmul.mubr.bf16.gmra.mrb[0].mxu0 %v593
          %v660 = vpop.f32.mrb[0].mxu0
          %v661 = vadd.f32 %v531, %v660
          %v662 = vpop.f32.mrb[0].mxu0
          %v663 = vpop.f32.mrb[0].mxu0
          %v664 = vadd.f32 %v531, %v663
          %v665 = vpop.f32.mrb[0].mxu0
          %666 = vmatprep.mubr.bf16.mxu0 0
          %667 = vmatmul.mubr.bf16.gmra.mrb[0].mxu0 %v596
          %v668 = vpop.f32.mrb[0].mxu0
          %v669 = vadd.f32 %v531, %v668
          %v670 = vpop.f32.mrb[0].mxu0
          %v671 = vpop.f32.mrb[0].mxu0
          %v672 = vadd.f32 %v531, %v671
          %v673 = vpop.f32.mrb[0].mxu0
          %674 = vmatprep.mubr.bf16.mxu0 0
          %675 = vmatmul.mubr.bf16.gmra.mrb[0].mxu0 %v599
          %v676 = vpop.f32.mrb[0].mxu0
          %v677 = vadd.f32 %v531, %v676
          %v678 = vpop.f32.mrb[0].mxu0
          %v679 = vpop.f32.mrb[0].mxu0
          %v680 = vadd.f32 %v531, %v679
          %v681 = vpop.f32.mrb[0].mxu0
          %682 = vmatprep.mubr.bf16.mxu0 0
          %683 = vmatmul.mubr.bf16.gmra.mrb[0].mxu0 %v602
          %v684 = vpop.f32.mrb[0].mxu0
          %v685 = vadd.f32 %v531, %v684
          %v686 = vpop.f32.mrb[0].mxu0
          %v687 = vpop.f32.mrb[0].mxu0
          %v688 = vadd.f32 %v531, %v687
          %v689 = vpop.f32.mrb[0].mxu0
          %690 = vmatprep.mubr.bf16.mxu0 0
          %691 = vmatmul.mubr.bf16.gmra.mrb[0].mxu0 %v605
          %v692 = vpop.f32.mrb[0].mxu0
          %v693 = vadd.f32 %v531, %v692
          %v694 = vpop.f32.mrb[0].mxu0
          %v695 = vpop.f32.mrb[0].mxu0
          %v696 = vadd.f32 %v531, %v695
          %v697 = vpop.f32.mrb[0].mxu0
          %698 = vmatprep.mubr.bf16.mxu0 0
          %699 = vmatmul.mubr.bf16.gmra.mrb[0].mxu0 %v608
          %v700 = vpop.f32.mrb[0].mxu0
          %v701 = vadd.f32 %v531, %v700
          %v702 = vpop.f32.mrb[0].mxu0
          %v703 = vpop.f32.mrb[0].mxu0
          %v704 = vadd.f32 %v531, %v703
          %v705 = vpop.f32.mrb[0].mxu0
          %706 = vdwg.mxu0
          %v707 = vpack.c.bf16 %v648, %v645
          %v708 = vpack.c.bf16 %v656, %v653
          %v709 = vpack.c.bf16 %v664, %v661
          %v710 = vpack.c.bf16 %v672, %v669
          %v711 = vpack.c.bf16 %v680, %v677
          %v712 = vpack.c.bf16 %v688, %v685
          %v713 = vpack.c.bf16 %v696, %v693
          %v714 = vpack.c.bf16 %v704, %v701
          %vm715 = vcmask 523264
          %716 = vst.msk [vmem:[#allocation2] sm:$0xff] %vm715, %v707
          %717 = vst.msk [vmem:[#allocation2 + $0x8] sm:$0xff] %vm715, %v708
          %718 = vst.msk [vmem:[#allocation2 + $0x10] sm:$0xff] %vm715, %v709
          %719 = vst.msk [vmem:[#allocation2 + $0x18] sm:$0xff] %vm715, %v710
          %720 = vst.msk [vmem:[#allocation2 + $0x20] sm:$0xff] %vm715, %v711
          %721 = vst.msk [vmem:[#allocation2 + $0x28] sm:$0xff] %vm715, %v712
          %722 = vst.msk [vmem:[#allocation2 + $0x30] sm:$0xff] %vm715, %v713
          %723 = vst.msk [vmem:[#allocation2 + $0x38] sm:$0xff] %vm715, %v714
        $region68: #{tpu_custom_call.1} parent=63 // pred_fallthru
          _
        %v724 = vld [vmem:[%s480] sm:$0xff]
        %v725 = vld [vmem:[%s480 + $0x8] sm:$0xff]
        %v726 = vld [vmem:[%s480 + $0x10] sm:$0xff]
        %v727 = vld [vmem:[%s480 + $0x18] sm:$0xff]
        %v728 = vld [vmem:[%s480 + $0x20] sm:$0xff]
        %v729 = vld [vmem:[%s480 + $0x28] sm:$0xff]
        %v730 = vld [vmem:[%s480 + $0x30] sm:$0xff]
        %v731 = vld [vmem:[%s480 + $0x38] sm:$0xff]
        %v732 = vld [vmem:[%s480 + $0x40] sm:$0xff]
        %v733 = vld [vmem:[%s480 + $0x48] sm:$0xff]
        %v734 = vld [vmem:[%s480 + $0x50] sm:$0xff]
        %v735 = vld [vmem:[%s480 + $0x58] sm:$0xff]
        %v736 = vld [vmem:[%s480 + $0x60] sm:$0xff]
        %v737 = vld [vmem:[%s480 + $0x68] sm:$0xff]
        %v738 = vld [vmem:[%s480 + $0x70] sm:$0xff]
        %v739 = vld [vmem:[%s480 + $0x78] sm:$0xff]
        %vm740 = vcmask 261120
        %v741 = vsel %vm740, %v724, 0.0
        %742 = vadd.xlane.f32.xlu0 %v741
        %v743 = vpop.xlane.xlu0 %742
        %v744 = vsel %vm740, %v725, 0.0
        %745 = vadd.xlane.f32.xlu0 %v744
        %v746 = vpop.xlane.xlu0 %745
        %v747 = vsel %vm740, %v726, 0.0
        %748 = vadd.xlane.f32.xlu0 %v747
        %v749 = vpop.xlane.xlu0 %748
        %v750 = vsel %vm740, %v727, 0.0
        %751 = vadd.xlane.f32.xlu0 %v750
        %v752 = vpop.xlane.xlu0 %751
        %v753 = vsel %vm740, %v728, 0.0
        %754 = vadd.xlane.f32.xlu0 %v753
        %v755 = vpop.xlane.xlu0 %754
        %v756 = vsel %vm740, %v729, 0.0
        %757 = vadd.xlane.f32.xlu0 %v756
        %v758 = vpop.xlane.xlu0 %757
        %v759 = vsel %vm740, %v730, 0.0
        %760 = vadd.xlane.f32.xlu0 %v759
        %v761 = vpop.xlane.xlu0 %760
        %v762 = vsel %vm740, %v731, 0.0
        %763 = vadd.xlane.f32.xlu0 %v762
        %v764 = vpop.xlane.xlu0 %763
        %v765 = vsel %vm740, %v732, 0.0
        %766 = vadd.xlane.f32.xlu0 %v765
        %v767 = vpop.xlane.xlu0 %766
        %v768 = vsel %vm740, %v733, 0.0
        %769 = vadd.xlane.f32.xlu0 %v768
        %v770 = vpop.xlane.xlu0 %769
        %v771 = vsel %vm740, %v734, 0.0
        %772 = vadd.xlane.f32.xlu0 %v771
        %v773 = vpop.xlane.xlu0 %772
        %v774 = vsel %vm740, %v735, 0.0
        %775 = vadd.xlane.f32.xlu0 %v774
        %v776 = vpop.xlane.xlu0 %775
        %v777 = vsel %vm740, %v736, 0.0
        %778 = vadd.xlane.f32.xlu0 %v777
        %v779 = vpop.xlane.xlu0 %778
        %v780 = vsel %vm740, %v737, 0.0
        %781 = vadd.xlane.f32.xlu0 %v780
        %v782 = vpop.xlane.xlu0 %781
        %v783 = vsel %vm740, %v738, 0.0
        %784 = vadd.xlane.f32.xlu0 %v783
        %v785 = vpop.xlane.xlu0 %784
        %v786 = vsel %vm740, %v739, 0.0
        %787 = vadd.xlane.f32.xlu0 %v786
        %v788 = vpop.xlane.xlu0 %787
        %v789 = vrcp.pop 32.0
        %v790 = vmul.f32 %v743, %v789
        %v791 = vmul.f32 %v746, %v789
        %v792 = vmul.f32 %v749, %v789
        %v793 = vmul.f32 %v752, %v789
        %v794 = vmul.f32 %v755, %v789
        %v795 = vmul.f32 %v758, %v789
        %v796 = vmul.f32 %v761, %v789
        %v797 = vmul.f32 %v764, %v789
        %v798 = vmul.f32 %v767, %v789
        %v799 = vmul.f32 %v770, %v789
        %v800 = vmul.f32 %v773, %v789
        %v801 = vmul.f32 %v776, %v789
        %v802 = vmul.f32 %v779, %v789
        %v803 = vmul.f32 %v782, %v789
        %v804 = vmul.f32 %v785, %v789
        %v805 = vmul.f32 %v788, %v789
        %v806 = vsub.f32 %v724, %v790
        %v807 = vsub.f32 %v725, %v791
        %v808 = vsub.f32 %v726, %v792
        %v809 = vsub.f32 %v727, %v793
        %v810 = vsub.f32 %v728, %v794
        %v811 = vsub.f32 %v729, %v795
        %v812 = vsub.f32 %v730, %v796
        %v813 = vsub.f32 %v731, %v797
        %v814 = vsub.f32 %v732, %v798
        %v815 = vsub.f32 %v733, %v799
        %v816 = vsub.f32 %v734, %v800
        %v817 = vsub.f32 %v735, %v801
        %v818 = vsub.f32 %v736, %v802
        %v819 = vsub.f32 %v737, %v803
        %v820 = vsub.f32 %v738, %v804
        %v821 = vsub.f32 %v739, %v805
        %v822 = vmul.f32 %v806, %v806
        %v823 = vmul.f32 %v807, %v807
        %v824 = vmul.f32 %v808, %v808
        %v825 = vmul.f32 %v809, %v809
        %v826 = vmul.f32 %v810, %v810
        %v827 = vmul.f32 %v811, %v811
        %v828 = vmul.f32 %v812, %v812
        %v829 = vmul.f32 %v813, %v813
        %v830 = vmul.f32 %v814, %v814
        %v831 = vmul.f32 %v815, %v815
        %v832 = vmul.f32 %v816, %v816
        %v833 = vmul.f32 %v817, %v817
        %v834 = vmul.f32 %v818, %v818
        %v835 = vmul.f32 %v819, %v819
        %v836 = vmul.f32 %v820, %v820
        %v837 = vmul.f32 %v821, %v821
        %v838 = vsel %vm740, %v822, 0.0
        %839 = vadd.xlane.f32.xlu0 %v838
        %v840 = vpop.xlane.xlu0 %839
        %v841 = vsel %vm740, %v823, 0.0
        %842 = vadd.xlane.f32.xlu0 %v841
        %v843 = vpop.xlane.xlu0 %842
        %v844 = vsel %vm740, %v824, 0.0
        %845 = vadd.xlane.f32.xlu0 %v844
        %v846 = vpop.xlane.xlu0 %845
        %v847 = vsel %vm740, %v825, 0.0
        %848 = vadd.xlane.f32.xlu0 %v847
        %v849 = vpop.xlane.xlu0 %848
        %v850 = vsel %vm740, %v826, 0.0
        %851 = vadd.xlane.f32.xlu0 %v850
        %v852 = vpop.xlane.xlu0 %851
        %v853 = vsel %vm740, %v827, 0.0
        %854 = vadd.xlane.f32.xlu0 %v853
        %v855 = vpop.xlane.xlu0 %854
        %v856 = vsel %vm740, %v828, 0.0
        %857 = vadd.xlane.f32.xlu0 %v856
        %v858 = vpop.xlane.xlu0 %857
        %v859 = vsel %vm740, %v829, 0.0
        %860 = vadd.xlane.f32.xlu0 %v859
        %v861 = vpop.xlane.xlu0 %860
        %v862 = vsel %vm740, %v830, 0.0
        %863 = vadd.xlane.f32.xlu0 %v862
        %v864 = vpop.xlane.xlu0 %863
        %v865 = vsel %vm740, %v831, 0.0
        %866 = vadd.xlane.f32.xlu0 %v865
        %v867 = vpop.xlane.xlu0 %866
        %v868 = vsel %vm740, %v832, 0.0
        %869 = vadd.xlane.f32.xlu0 %v868
        %v870 = vpop.xlane.xlu0 %869
        %v871 = vsel %vm740, %v833, 0.0
        %872 = vadd.xlane.f32.xlu0 %v871
        %v873 = vpop.xlane.xlu0 %872
        %v874 = vsel %vm740, %v834, 0.0
        %875 = vadd.xlane.f32.xlu0 %v874
        %v876 = vpop.xlane.xlu0 %875
        %v877 = vsel %vm740, %v835, 0.0
        %878 = vadd.xlane.f32.xlu0 %v877
        %v879 = vpop.xlane.xlu0 %878
        %v880 = vsel %vm740, %v836, 0.0
        %881 = vadd.xlane.f32.xlu0 %v880
        %v882 = vpop.xlane.xlu0 %881
        %v883 = vsel %vm740, %v837, 0.0
        %884 = vadd.xlane.f32.xlu0 %v883
        %v885 = vpop.xlane.xlu0 %884
        %v886 = vmul.f32 %v840, %v789
        %v887 = vmul.f32 %v843, %v789
        %v888 = vmul.f32 %v846, %v789
        %v889 = vmul.f32 %v849, %v789
        %v890 = vmul.f32 %v852, %v789
        %v891 = vmul.f32 %v855, %v789
        %v892 = vmul.f32 %v858, %v789
        %v893 = vmul.f32 %v861, %v789
        %v894 = vmul.f32 %v864, %v789
        %v895 = vmul.f32 %v867, %v789
        %v896 = vmul.f32 %v870, %v789
        %v897 = vmul.f32 %v873, %v789
        %v898 = vmul.f32 %v876, %v789
        %v899 = vmul.f32 %v879, %v789
        %v900 = vmul.f32 %v882, %v789
        %v901 = vmul.f32 %v885, %v789
        %v902 = vadd.f32 %v886, 1e-05
        %v903 = vadd.f32 %v887, 1e-05
        %v904 = vadd.f32 %v888, 1e-05
        %v905 = vadd.f32 %v889, 1e-05
        %v906 = vadd.f32 %v890, 1e-05
        %v907 = vadd.f32 %v891, 1e-05
        %v908 = vadd.f32 %v892, 1e-05
        %v909 = vadd.f32 %v893, 1e-05
        %v910 = vadd.f32 %v894, 1e-05
        %v911 = vadd.f32 %v895, 1e-05
        %v912 = vadd.f32 %v896, 1e-05
        %v913 = vadd.f32 %v897, 1e-05
        %v914 = vadd.f32 %v898, 1e-05
        %v915 = vadd.f32 %v899, 1e-05
        %v916 = vadd.f32 %v900, 1e-05
        %v917 = vadd.f32 %v901, 1e-05
        %v918 = vrsqrt.pop %v902
        %v919 = vrsqrt.pop %v903
        %v920 = vrsqrt.pop %v904
        %v921 = vrsqrt.pop %v905
        %v922 = vrsqrt.pop %v906
        %v923 = vrsqrt.pop %v907
        %v924 = vrsqrt.pop %v908
        %v925 = vrsqrt.pop %v909
        %v926 = vrsqrt.pop %v910
        %v927 = vrsqrt.pop %v911
        %v928 = vrsqrt.pop %v912
        %v929 = vrsqrt.pop %v913
        %v930 = vrsqrt.pop %v914
        %v931 = vrsqrt.pop %v915
        %v932 = vrsqrt.pop %v916
        %v933 = vrsqrt.pop %v917
        %v934 = vmul.f32 %v806, %v918
        %v935 = vmul.f32 %v807, %v919
        %v936 = vmul.f32 %v808, %v920
        %v937 = vmul.f32 %v809, %v921
        %v938 = vmul.f32 %v810, %v922
        %v939 = vmul.f32 %v811, %v923
        %v940 = vmul.f32 %v812, %v924
        %v941 = vmul.f32 %v813, %v925
        %v942 = vmul.f32 %v814, %v926
        %v943 = vmul.f32 %v815, %v927
        %v944 = vmul.f32 %v816, %v928
        %v945 = vmul.f32 %v817, %v929
        %v946 = vmul.f32 %v818, %v930
        %v947 = vmul.f32 %v819, %v931
        %v948 = vmul.f32 %v820, %v932
        %v949 = vmul.f32 %v821, %v933
        %v950 = vld [vmem:[%s3] sm:$0x1]
        %v952 = vlaneseq
        %v953 = vshrl.u32 %v952, 7
        %v954 = vsub.s32 0, %v953
        %v955 = vrot.slane %v950, %v954
        %v957 = vmul.f32 %v934, %v955
        %v958 = vmul.f32 %v935, %v955
        %v959 = vmul.f32 %v936, %v955
        %v960 = vmul.f32 %v937, %v955
        %v961 = vmul.f32 %v938, %v955
        %v962 = vmul.f32 %v939, %v955
        %v963 = vmul.f32 %v940, %v955
        %v964 = vmul.f32 %v941, %v955
        %v965 = vmul.f32 %v942, %v955
        %v966 = vmul.f32 %v943, %v955
        %v967 = vmul.f32 %v944, %v955
        %v968 = vmul.f32 %v945, %v955
        %v969 = vmul.f32 %v946, %v955
        %v970 = vmul.f32 %v947, %v955
        %v971 = vmul.f32 %v948, %v955
        %v972 = vmul.f32 %v949, %v955
        %v973 = vld [vmem:[%s4] sm:$0x1]
        %v975 = vlaneseq
        %v976 = vshrl.u32 %v975, 7
        %v977 = vsub.s32 0, %v976
        %v978 = vrot.slane %v973, %v977
        %v980 = vadd.f32 %v957, %v978
        %v981 = vadd.f32 %v958, %v978
        %v982 = vadd.f32 %v959, %v978
        %v983 = vadd.f32 %v960, %v978
        %v984 = vadd.f32 %v961, %v978
        %v985 = vadd.f32 %v962, %v978
        %v986 = vadd.f32 %v963, %v978
        %v987 = vadd.f32 %v964, %v978
        %v988 = vadd.f32 %v965, %v978
        %v989 = vadd.f32 %v966, %v978
        %v990 = vadd.f32 %v967, %v978
        %v991 = vadd.f32 %v968, %v978
        %v992 = vadd.f32 %v969, %v978
        %v993 = vadd.f32 %v970, %v978
        %v994 = vadd.f32 %v971, %v978
        %v995 = vadd.f32 %v972, %v978
        %v996 = vpack.c.bf16 %v981, %v980
        %v997 = vpack.c.bf16 %v983, %v982
        %v998 = vpack.c.bf16 %v985, %v984
        %v999 = vpack.c.bf16 %v987, %v986
        %v1000 = vpack.c.bf16 %v989, %v988
        %v1001 = vpack.c.bf16 %v991, %v990
        %v1002 = vpack.c.bf16 %v993, %v992
        %v1003 = vpack.c.bf16 %v995, %v994
        %v1004 = vld [vmem:[%s5] sm:$0xf]
        %v1005 = vld [vmem:[%s5 + $0x4] sm:$0xf]
        %v1006 = vld [vmem:[%s5 + $0x8] sm:$0xf]
        %v1007 = vld [vmem:[%s5 + $0xc] sm:$0xf]
        %v1008 = vld [vmem:[%s7] sm:$0x1]
        %v1010 = vlaneseq
        %v1011 = vshrl.u32 %v1010, 7
        %v1012 = vsub.s32 0, %v1011
        %v1013 = vrot.slane %v1008, %v1012
        %v1019 = vunpack.c.l.b16 %v1004
        %v1020 = vunpack.c.l.b16 %v1005
        %v1021 = vunpack.c.l.b16 %v1006
        %v1022 = vunpack.c.l.b16 %v1007
        %v1023 = vpack.c.b16 %v1020, %v1019
        %v1024 = vpack.c.b16 %v1022, %v1021
        %v1028 = vsel %vm740, %v996, 0
        %v1031 = vsel %vm740, %v997, 0
        %v1034 = vsel %vm740, %v998, 0
        %v1037 = vsel %vm740, %v999, 0
        %v1040 = vsel %vm740, %v1000, 0
        %v1043 = vsel %vm740, %v1001, 0
        %v1046 = vsel %vm740, %v1002, 0
        %v1049 = vsel %vm740, %v1003, 0
        %1051 = vmatprep.subr.bf16.mxu0 0
        %1052 = vmatpush1.bf16.msra.mxu0 %v1023
        %1053 = vmatprep.subr.bf16.mxu0 0
        %1054 = vmatpush1.bf16.msra.mxu0 %v1024
        %1055 = vmatprep.subr.bf16.mxu0 0
        %1056 = vmatpush1.bf16.msra.mxu0 0
        %1057 = vmatprep.subr.bf16.mxu0 0
        %1058 = vmatpush1.bf16.msra.mxu0 0
        %1059 = vmatprep.subr.bf16.mxu0 0
        %1060 = vmatpush1.bf16.msra.mxu0 0
        %1061 = vmatprep.subr.bf16.mxu0 0
        %1062 = vmatpush1.bf16.msra.mxu0 0
        %1063 = vmatprep.subr.bf16.mxu0 0
        %1064 = vmatpush1.bf16.msra.mxu0 0
        %1065 = vmatprep.subr.bf16.mxu0 0
        %1066 = vmatpush1.bf16.msra.mxu0 0
        %1067 = vmatprep.subr.bf16.mxu0 0
        %1068 = vmatpush1.bf16.msra.mxu0 0
        %1069 = vmatprep.subr.bf16.mxu0 0
        %1070 = vmatpush1.bf16.msra.mxu0 0
        %1071 = vmatprep.subr.bf16.mxu0 0
        %1072 = vmatpush1.bf16.msra.mxu0 0
        %1073 = vmatprep.subr.bf16.mxu0 0
        %1074 = vmatpush1.bf16.msra.mxu0 0
        %1075 = vmatprep.subr.bf16.mxu0 0
        %1076 = vmatpush1.bf16.msra.mxu0 0
        %1077 = vmatprep.subr.bf16.mxu0 0
        %1078 = vmatpush1.bf16.msra.mxu0 0
        %1079 = vmatprep.subr.bf16.mxu0 0
        %1080 = vmatpush1.bf16.msra.mxu0 0
        %1081 = vmatprep.subr.bf16.mxu0 0
        %1082 = vmatpush1.bf16.msra.mxu0 0
        %1083 = vmatprep.mubr.bf16.mxu0 0
        %1084 = vmatmul.mubr.bf16.gmra.mrb[0].mxu0 %v1028
        %v1085 = vpop.f32.mrb[0].mxu0
        %v1086 = vadd.f32 %v1013, %v1085
        %v1087 = vpop.f32.mrb[0].mxu0
        %v1088 = vpop.f32.mrb[0].mxu0
        %v1089 = vadd.f32 %v1013, %v1088
        %v1090 = vpop.f32.mrb[0].mxu0
        %1091 = vmatprep.mubr.bf16.mxu0 0
        %1092 = vmatmul.mubr.bf16.gmra.mrb[0].mxu0 %v1031
        %v1093 = vpop.f32.mrb[0].mxu0
        %v1094 = vadd.f32 %v1013, %v1093
        %v1095 = vpop.f32.mrb[0].mxu0
        %v1096 = vpop.f32.mrb[0].mxu0
        %v1097 = vadd.f32 %v1013, %v1096
        %v1098 = vpop.f32.mrb[0].mxu0
        %1099 = vmatprep.mubr.bf16.mxu0 0
        %1100 = vmatmul.mubr.bf16.gmra.mrb[0].mxu0 %v1034
        %v1101 = vpop.f32.mrb[0].mxu0
        %v1102 = vadd.f32 %v1013, %v1101
        %v1103 = vpop.f32.mrb[0].mxu0
        %v1104 = vpop.f32.mrb[0].mxu0
        %v1105 = vadd.f32 %v1013, %v1104
        %v1106 = vpop.f32.mrb[0].mxu0
        %1107 = vmatprep.mubr.bf16.mxu0 0
        %1108 = vmatmul.mubr.bf16.gmra.mrb[0].mxu0 %v1037
        %v1109 = vpop.f32.mrb[0].mxu0
        %v1110 = vadd.f32 %v1013, %v1109
        %v1111 = vpop.f32.mrb[0].mxu0
        %v1112 = vpop.f32.mrb[0].mxu0
        %v1113 = vadd.f32 %v1013, %v1112
        %v1114 = vpop.f32.mrb[0].mxu0
        %1115 = vmatprep.mubr.bf16.mxu0 0
        %1116 = vmatmul.mubr.bf16.gmra.mrb[0].mxu0 %v1040
        %v1117 = vpop.f32.mrb[0].mxu0
        %v1118 = vadd.f32 %v1013, %v1117
        %v1119 = vpop.f32.mrb[0].mxu0
        %v1120 = vpop.f32.mrb[0].mxu0
        %v1121 = vadd.f32 %v1013, %v1120
        %v1122 = vpop.f32.mrb[0].mxu0
        %1123 = vmatprep.mubr.bf16.mxu0 0
        %1124 = vmatmul.mubr.bf16.gmra.mrb[0].mxu0 %v1043
        %v1125 = vpop.f32.mrb[0].mxu0
        %v1126 = vadd.f32 %v1013, %v1125
        %v1127 = vpop.f32.mrb[0].mxu0
        %v1128 = vpop.f32.mrb[0].mxu0
        %v1129 = vadd.f32 %v1013, %v1128
        %v1130 = vpop.f32.mrb[0].mxu0
        %1131 = vmatprep.mubr.bf16.mxu0 0
        %1132 = vmatmul.mubr.bf16.gmra.mrb[0].mxu0 %v1046
        %v1133 = vpop.f32.mrb[0].mxu0
        %v1134 = vadd.f32 %v1013, %v1133
        %v1135 = vpop.f32.mrb[0].mxu0
        %v1136 = vpop.f32.mrb[0].mxu0
        %v1137 = vadd.f32 %v1013, %v1136
        %v1138 = vpop.f32.mrb[0].mxu0
        %1139 = vmatprep.mubr.bf16.mxu0 0
        %1140 = vmatmul.mubr.bf16.gmra.mrb[0].mxu0 %v1049
        %v1141 = vpop.f32.mrb[0].mxu0
        %v1142 = vadd.f32 %v1013, %v1141
        %v1143 = vpop.f32.mrb[0].mxu0
        %v1144 = vpop.f32.mrb[0].mxu0
        %v1145 = vadd.f32 %v1013, %v1144
        %v1146 = vpop.f32.mrb[0].mxu0
        %1147 = vdwg.mxu0
        %v1148 = vpack.c.bf16 %v1089, %v1086
        %v1149 = vpack.c.bf16 %v1097, %v1094
        %v1150 = vpack.c.bf16 %v1105, %v1102
        %v1151 = vpack.c.bf16 %v1113, %v1110
        %v1152 = vpack.c.bf16 %v1121, %v1118
        %v1153 = vpack.c.bf16 %v1129, %v1126
        %v1154 = vpack.c.bf16 %v1137, %v1134
        %v1155 = vpack.c.bf16 %v1145, %v1142
        %v1156 = vld [vmem:[%s489] sm:$0x1]
        %vm1157 = vcmp.eq.s32.totalorder %v1156, 0
        %v1158 = vsel %vm1157, -1e+30, 0.0
        %v1159 = vld [vmem:[#allocation2] sm:$0xff]
        %v1160 = vld [vmem:[#allocation2 + $0x8] sm:$0xff]
        %v1161 = vld [vmem:[#allocation2 + $0x10] sm:$0xff]
        %v1162 = vld [vmem:[#allocation2 + $0x18] sm:$0xff]
        %v1163 = vld [vmem:[#allocation2 + $0x20] sm:$0xff]
        %v1164 = vld [vmem:[#allocation2 + $0x28] sm:$0xff]
        %v1165 = vld [vmem:[#allocation2 + $0x30] sm:$0xff]
        %v1166 = vld [vmem:[#allocation2 + $0x38] sm:$0xff]
        %v1168 = vlaneseq
        %v1169 = vshrl.u32 %v1168, 7
        %v1170 = vsub.s32 0, %v1169
        %v1171 = vrot.slane %v1158, %v1170
        %vm1173 = vcmask 64512
        %v1175 = vsel %vm1173, %v1148, 0
        %v1178 = vsel %vm1173, %v1149, 0
        %v1181 = vsel %vm1173, %v1150, 0
        %v1184 = vsel %vm1173, %v1151, 0
        %v1187 = vsel %vm1173, %v1152, 0
        %v1190 = vsel %vm1173, %v1153, 0
        %v1193 = vsel %vm1173, %v1154, 0
        %v1196 = vsel %vm1173, %v1155, 0
        %v1199 = vsel %vm1173, %v1159, 0
        %v1202 = vsel %vm1173, %v1160, 0
        %v1205 = vsel %vm1173, %v1161, 0
        %v1208 = vsel %vm1173, %v1162, 0
        %v1211 = vsel %vm1173, %v1163, 0
        %v1214 = vsel %vm1173, %v1164, 0
        %v1217 = vsel %vm1173, %v1165, 0
        %v1220 = vsel %vm1173, %v1166, 0
        %1222 = vmatprep.subr.bf16.mxu0 0
        %1223 = vmatpush1.bf16.xpose.msra.mxu0 %v1199
        %1224 = vmatprep.subr.bf16.mxu0 0
        %1225 = vmatpush1.bf16.xpose.msra.mxu0 %v1202
        %1226 = vmatprep.subr.bf16.mxu0 0
        %1227 = vmatpush1.bf16.xpose.msra.mxu0 %v1205
        %1228 = vmatprep.subr.bf16.mxu0 0
        %1229 = vmatpush1.bf16.xpose.msra.mxu0 %v1208
        %1230 = vmatprep.subr.bf16.mxu0 0
        %1231 = vmatpush1.bf16.xpose.msra.mxu0 %v1211
        %1232 = vmatprep.subr.bf16.mxu0 0
        %1233 = vmatpush1.bf16.xpose.msra.mxu0 %v1214
        %1234 = vmatprep.subr.bf16.mxu0 0
        %1235 = vmatpush1.bf16.xpose.msra.mxu0 %v1217
        %1236 = vmatprep.subr.bf16.mxu0 0
        %1237 = vmatpush1.bf16.xpose.msra.mxu0 %v1220
        %1238 = vmatprep.subr.bf16.mxu0 0
        %1239 = vmatpush1.bf16.xpose.msra.mxu0 0
        %1240 = vmatprep.subr.bf16.mxu0 0
        %1241 = vmatpush1.bf16.xpose.msra.mxu0 0
        %1242 = vmatprep.subr.bf16.mxu0 0
        %1243 = vmatpush1.bf16.xpose.msra.mxu0 0
        %1244 = vmatprep.subr.bf16.mxu0 0
        %1245 = vmatpush1.bf16.xpose.msra.mxu0 0
        %1246 = vmatprep.subr.bf16.mxu0 0
        %1247 = vmatpush1.bf16.xpose.msra.mxu0 0
        %1248 = vmatprep.subr.bf16.mxu0 0
        %1249 = vmatpush1.bf16.xpose.msra.mxu0 0
        %1250 = vmatprep.subr.bf16.mxu0 0
        %1251 = vmatpush1.bf16.xpose.msra.mxu0 0
        %1252 = vmatprep.subr.bf16.mxu0 0
        %1253 = vmatpush1.bf16.xpose.msra.mxu0 0
        %1254 = vmatprep.mubr.bf16.mxu0 0
        %1255 = vmatmul.mubr.bf16.gmra.mrb[0].mxu0 %v1175
        %v1256 = vpop.f32.mrb[0].mxu0
        %v1257 = vadd.f32 %v1171, %v1256
        %v1258 = vpop.f32.mrb[0].mxu0
        %v1259 = vpop.f32.mrb[0].mxu0
        %v1260 = vadd.f32 %v1171, %v1259
        %v1261 = vpop.f32.mrb[0].mxu0
        %1262 = vmatprep.mubr.bf16.mxu0 0
        %1263 = vmatmul.mubr.bf16.gmra.mrb[0].mxu0 %v1178
        %v1264 = vpop.f32.mrb[0].mxu0
        %v1265 = vadd.f32 %v1171, %v1264
        %v1266 = vpop.f32.mrb[0].mxu0
        %v1267 = vpop.f32.mrb[0].mxu0
        %v1268 = vadd.f32 %v1171, %v1267
        %v1269 = vpop.f32.mrb[0].mxu0
        %1270 = vmatprep.mubr.bf16.mxu0 0
        %1271 = vmatmul.mubr.bf16.gmra.mrb[0].mxu0 %v1181
        %v1272 = vpop.f32.mrb[0].mxu0
        %v1273 = vadd.f32 %v1171, %v1272
        %v1274 = vpop.f32.mrb[0].mxu0
        %v1275 = vpop.f32.mrb[0].mxu0
        %v1276 = vadd.f32 %v1171, %v1275
        %v1277 = vpop.f32.mrb[0].mxu0
        %1278 = vmatprep.mubr.bf16.mxu0 0
        %1279 = vmatmul.mubr.bf16.gmra.mrb[0].mxu0 %v1184
        %v1280 = vpop.f32.mrb[0].mxu0
        %v1281 = vadd.f32 %v1171, %v1280
        %v1282 = vpop.f32.mrb[0].mxu0
        %v1283 = vpop.f32.mrb[0].mxu0
        %v1284 = vadd.f32 %v1171, %v1283
        %v1285 = vpop.f32.mrb[0].mxu0
        %1286 = vmatprep.mubr.bf16.mxu0 0
        %1287 = vmatmul.mubr.bf16.gmra.mrb[0].mxu0 %v1187
        %v1288 = vpop.f32.mrb[0].mxu0
        %v1289 = vadd.f32 %v1171, %v1288
        %v1290 = vpop.f32.mrb[0].mxu0
        %v1291 = vpop.f32.mrb[0].mxu0
        %v1292 = vadd.f32 %v1171, %v1291
        %v1293 = vpop.f32.mrb[0].mxu0
        %1294 = vmatprep.mubr.bf16.mxu0 0
        %1295 = vmatmul.mubr.bf16.gmra.mrb[0].mxu0 %v1190
        %v1296 = vpop.f32.mrb[0].mxu0
        %v1297 = vadd.f32 %v1171, %v1296
        %v1298 = vpop.f32.mrb[0].mxu0
        %v1299 = vpop.f32.mrb[0].mxu0
        %v1300 = vadd.f32 %v1171, %v1299
        %v1301 = vpop.f32.mrb[0].mxu0
        %1302 = vmatprep.mubr.bf16.mxu0 0
        %1303 = vmatmul.mubr.bf16.gmra.mrb[0].mxu0 %v1193
        %v1304 = vpop.f32.mrb[0].mxu0
        %v1305 = vadd.f32 %v1171, %v1304
        %v1306 = vpop.f32.mrb[0].mxu0
        %v1307 = vpop.f32.mrb[0].mxu0
        %v1308 = vadd.f32 %v1171, %v1307
        %v1309 = vpop.f32.mrb[0].mxu0
        %1310 = vmatprep.mubr.bf16.mxu0 0
        %1311 = vmatmul.mubr.bf16.gmra.mrb[0].mxu0 %v1196
        %v1312 = vpop.f32.mrb[0].mxu0
        %v1313 = vadd.f32 %v1171, %v1312
        %v1314 = vpop.f32.mrb[0].mxu0
        %v1315 = vpop.f32.mrb[0].mxu0
        %v1316 = vadd.f32 %v1171, %v1315
        %v1317 = vpop.f32.mrb[0].mxu0
        %1318 = vdwg.mxu0
        %1319 = vmax.xlane.f32.xlu0 %v1257
        %v1320 = vpop.xlane.xlu0 %1319
        %1321 = vmax.xlane.f32.xlu0 %v1260
        %v1322 = vpop.xlane.xlu0 %1321
        %1323 = vmax.xlane.f32.xlu0 %v1265
        %v1324 = vpop.xlane.xlu0 %1323
        %1325 = vmax.xlane.f32.xlu0 %v1268
        %v1326 = vpop.xlane.xlu0 %1325
        %1327 = vmax.xlane.f32.xlu0 %v1273
        %v1328 = vpop.xlane.xlu0 %1327
        %1329 = vmax.xlane.f32.xlu0 %v1276
        %v1330 = vpop.xlane.xlu0 %1329
        %1331 = vmax.xlane.f32.xlu0 %v1281
        %v1332 = vpop.xlane.xlu0 %1331
        %1333 = vmax.xlane.f32.xlu0 %v1284
        %v1334 = vpop.xlane.xlu0 %1333
        %1335 = vmax.xlane.f32.xlu0 %v1289
        %v1336 = vpop.xlane.xlu0 %1335
        %1337 = vmax.xlane.f32.xlu0 %v1292
        %v1338 = vpop.xlane.xlu0 %1337
        %1339 = vmax.xlane.f32.xlu0 %v1297
        %v1340 = vpop.xlane.xlu0 %1339
        %1341 = vmax.xlane.f32.xlu0 %v1300
        %v1342 = vpop.xlane.xlu0 %1341
        %1343 = vmax.xlane.f32.xlu0 %v1305
        %v1344 = vpop.xlane.xlu0 %1343
        %1345 = vmax.xlane.f32.xlu0 %v1308
        %v1346 = vpop.xlane.xlu0 %1345
        %1347 = vmax.xlane.f32.xlu0 %v1313
        %v1348 = vpop.xlane.xlu0 %1347
        %1349 = vmax.xlane.f32.xlu0 %v1316
        %v1350 = vpop.xlane.xlu0 %1349
        %v1351 = vsub.f32 %v1257, %v1320
        %v1352 = vsub.f32 %v1260, %v1322
        %v1353 = vsub.f32 %v1265, %v1324
        %v1354 = vsub.f32 %v1268, %v1326
        %v1355 = vsub.f32 %v1273, %v1328
        %v1356 = vsub.f32 %v1276, %v1330
        %v1357 = vsub.f32 %v1281, %v1332
        %v1358 = vsub.f32 %v1284, %v1334
        %v1359 = vsub.f32 %v1289, %v1336
        %v1360 = vsub.f32 %v1292, %v1338
        %v1361 = vsub.f32 %v1297, %v1340
        %v1362 = vsub.f32 %v1300, %v1342
        %v1363 = vsub.f32 %v1305, %v1344
        %v1364 = vsub.f32 %v1308, %v1346
        %v1365 = vsub.f32 %v1313, %v1348
        %v1366 = vsub.f32 %v1316, %v1350
        %v1367 = vmul.f32 %v1351, 1.442695
        %v1368 = vpow.pop %v1367
        %v1369 = vmul.f32 %v1352, 1.442695
        %v1370 = vpow.pop %v1369
        %v1371 = vmul.f32 %v1353, 1.442695
        %v1372 = vpow.pop %v1371
        %v1373 = vmul.f32 %v1354, 1.442695
        %v1374 = vpow.pop %v1373
        %v1375 = vmul.f32 %v1355, 1.442695
        %v1376 = vpow.pop %v1375
        %v1377 = vmul.f32 %v1356, 1.442695
        %v1378 = vpow.pop %v1377
        %v1379 = vmul.f32 %v1357, 1.442695
        %v1380 = vpow.pop %v1379
        %v1381 = vmul.f32 %v1358, 1.442695
        %v1382 = vpow.pop %v1381
        %v1383 = vmul.f32 %v1359, 1.442695
        %v1384 = vpow.pop %v1383
        %v1385 = vmul.f32 %v1360, 1.442695
        %v1386 = vpow.pop %v1385
        %v1387 = vmul.f32 %v1361, 1.442695
        %v1388 = vpow.pop %v1387
        %v1389 = vmul.f32 %v1362, 1.442695
        %v1390 = vpow.pop %v1389
        %v1391 = vmul.f32 %v1363, 1.442695
        %v1392 = vpow.pop %v1391
        %v1393 = vmul.f32 %v1364, 1.442695
        %v1394 = vpow.pop %v1393
        %v1395 = vmul.f32 %v1365, 1.442695
        %v1396 = vpow.pop %v1395
        %v1397 = vmul.f32 %v1366, 1.442695
        %v1398 = vpow.pop %v1397
        %1399 = vadd.xlane.f32.xlu0 %v1368
        %v1400 = vpop.xlane.xlu0 %1399
        %1401 = vadd.xlane.f32.xlu0 %v1370
        %v1402 = vpop.xlane.xlu0 %1401
        %1403 = vadd.xlane.f32.xlu0 %v1372
        %v1404 = vpop.xlane.xlu0 %1403
        %1405 = vadd.xlane.f32.xlu0 %v1374
        %v1406 = vpop.xlane.xlu0 %1405
        %1407 = vadd.xlane.f32.xlu0 %v1376
        %v1408 = vpop.xlane.xlu0 %1407
        %1409 = vadd.xlane.f32.xlu0 %v1378
        %v1410 = vpop.xlane.xlu0 %1409
        %1411 = vadd.xlane.f32.xlu0 %v1380
        %v1412 = vpop.xlane.xlu0 %1411
        %1413 = vadd.xlane.f32.xlu0 %v1382
        %v1414 = vpop.xlane.xlu0 %1413
        %1415 = vadd.xlane.f32.xlu0 %v1384
        %v1416 = vpop.xlane.xlu0 %1415
        %1417 = vadd.xlane.f32.xlu0 %v1386
        %v1418 = vpop.xlane.xlu0 %1417
        %1419 = vadd.xlane.f32.xlu0 %v1388
        %v1420 = vpop.xlane.xlu0 %1419
        %1421 = vadd.xlane.f32.xlu0 %v1390
        %v1422 = vpop.xlane.xlu0 %1421
        %1423 = vadd.xlane.f32.xlu0 %v1392
        %v1424 = vpop.xlane.xlu0 %1423
        %1425 = vadd.xlane.f32.xlu0 %v1394
        %v1426 = vpop.xlane.xlu0 %1425
        %1427 = vadd.xlane.f32.xlu0 %v1396
        %v1428 = vpop.xlane.xlu0 %1427
        %1429 = vadd.xlane.f32.xlu0 %v1398
        %v1430 = vpop.xlane.xlu0 %1429
        %v1431 = vrcp.pop %v1400
        %v1432 = vmul.f32 1.0, %v1431
        %v1433 = vrcp.pop %v1402
        %v1434 = vmul.f32 1.0, %v1433
        %v1435 = vrcp.pop %v1404
        %v1436 = vmul.f32 1.0, %v1435
        %v1437 = vrcp.pop %v1406
        %v1438 = vmul.f32 1.0, %v1437
        %v1439 = vrcp.pop %v1408
        %v1440 = vmul.f32 1.0, %v1439
        %v1441 = vrcp.pop %v1410
        %v1442 = vmul.f32 1.0, %v1441
        %v1443 = vrcp.pop %v1412
        %v1444 = vmul.f32 1.0, %v1443
        %v1445 = vrcp.pop %v1414
        %v1446 = vmul.f32 1.0, %v1445
        %v1447 = vrcp.pop %v1416
        %v1448 = vmul.f32 1.0, %v1447
        %v1449 = vrcp.pop %v1418
        %v1450 = vmul.f32 1.0, %v1449
        %v1451 = vrcp.pop %v1420
        %v1452 = vmul.f32 1.0, %v1451
        %v1453 = vrcp.pop %v1422
        %v1454 = vmul.f32 1.0, %v1453
        %v1455 = vrcp.pop %v1424
        %v1456 = vmul.f32 1.0, %v1455
        %v1457 = vrcp.pop %v1426
        %v1458 = vmul.f32 1.0, %v1457
        %v1459 = vrcp.pop %v1428
        %v1460 = vmul.f32 1.0, %v1459
        %v1461 = vrcp.pop %v1430
        %v1462 = vmul.f32 1.0, %v1461
        %v1463 = vmul.f32 %v1368, %v1432
        %v1464 = vmul.f32 %v1370, %v1434
        %v1465 = vmul.f32 %v1372, %v1436
        %v1466 = vmul.f32 %v1374, %v1438
        %v1467 = vmul.f32 %v1376, %v1440
        %v1468 = vmul.f32 %v1378, %v1442
        %v1469 = vmul.f32 %v1380, %v1444
        %v1470 = vmul.f32 %v1382, %v1446
        %v1471 = vmul.f32 %v1384, %v1448
        %v1472 = vmul.f32 %v1386, %v1450
        %v1473 = vmul.f32 %v1388, %v1452
        %v1474 = vmul.f32 %v1390, %v1454
        %v1475 = vmul.f32 %v1392, %v1456
        %v1476 = vmul.f32 %v1394, %v1458
        %v1477 = vmul.f32 %v1396, %v1460
        %v1478 = vmul.f32 %v1398, %v1462
        %v1479 = vpack.c.bf16 %v1464, %v1463
        %v1480 = vpack.c.bf16 %v1466, %v1465
        %v1481 = vpack.c.bf16 %v1468, %v1467
        %v1482 = vpack.c.bf16 %v1470, %v1469
        %v1483 = vpack.c.bf16 %v1472, %v1471
        %v1484 = vpack.c.bf16 %v1474, %v1473
        %v1485 = vpack.c.bf16 %v1476, %v1475
        %v1486 = vpack.c.bf16 %v1478, %v1477
        %1495 = vrot.lane.b32.xlu0 %v1159, 96
        %v1496 = vpop.permute.xlu0 %1495
        %1497 = vrot.lane.b32.xlu0 %v1160, 96
        %v1498 = vpop.permute.xlu0 %1497
        %1499 = vrot.lane.b32.xlu0 %v1161, 96
        %v1500 = vpop.permute.xlu0 %1499
        %1501 = vrot.lane.b32.xlu0 %v1162, 96
        %v1502 = vpop.permute.xlu0 %1501
        %1503 = vrot.lane.b32.xlu0 %v1163, 96
        %v1504 = vpop.permute.xlu0 %1503
        %1505 = vrot.lane.b32.xlu0 %v1164, 96
        %v1506 = vpop.permute.xlu0 %1505
        %1507 = vrot.lane.b32.xlu0 %v1165, 96
        %v1508 = vpop.permute.xlu0 %1507
        %1509 = vrot.lane.b32.xlu0 %v1166, 96
        %v1510 = vpop.permute.xlu0 %1509
        %1519 = vmatprep.subr.bf16.mxu0 0
        %1520 = vmatpush1.bf16.msra.mxu0 %v1496
        %1521 = vmatprep.subr.bf16.mxu0 0
        %1522 = vmatpush1.bf16.msra.mxu0 %v1498
        %1523 = vmatprep.subr.bf16.mxu0 0
        %1524 = vmatpush1.bf16.msra.mxu0 %v1500
        %1525 = vmatprep.subr.bf16.mxu0 0
        %1526 = vmatpush1.bf16.msra.mxu0 %v1502
        %1527 = vmatprep.subr.bf16.mxu0 0
        %1528 = vmatpush1.bf16.msra.mxu0 %v1504
        %1529 = vmatprep.subr.bf16.mxu0 0
        %1530 = vmatpush1.bf16.msra.mxu0 %v1506
        %1531 = vmatprep.subr.bf16.mxu0 0
        %1532 = vmatpush1.bf16.msra.mxu0 %v1508
        %1533 = vmatprep.subr.bf16.mxu0 0
        %1534 = vmatpush1.bf16.msra.mxu0 %v1510
        %1535 = vmatprep.subr.bf16.mxu0 0
        %1536 = vmatpush1.bf16.msra.mxu0 0
        %1537 = vmatprep.subr.bf16.mxu0 0
        %1538 = vmatpush1.bf16.msra.mxu0 0
        %1539 = vmatprep.subr.bf16.mxu0 0
        %1540 = vmatpush1.bf16.msra.mxu0 0
        %1541 = vmatprep.subr.bf16.mxu0 0
        %1542 = vmatpush1.bf16.msra.mxu0 0
        %1543 = vmatprep.subr.bf16.mxu0 0
        %1544 = vmatpush1.bf16.msra.mxu0 0
        %1545 = vmatprep.subr.bf16.mxu0 0
        %1546 = vmatpush1.bf16.msra.mxu0 0
        %1547 = vmatprep.subr.bf16.mxu0 0
        %1548 = vmatpush1.bf16.msra.mxu0 0
        %1549 = vmatprep.subr.bf16.mxu0 0
        %1550 = vmatpush1.bf16.msra.mxu0 0
        %1551 = vmatprep.mubr.bf16.mxu0 0
        %1552 = vmatmul.mubr.bf16.gmra.mrb[0].mxu0 %v1479
        %v1553 = vpop.f32.mrb[0].mxu0
        %v1554 = vadd.f32 0.0, %v1553
        %v1555 = vpop.f32.mrb[0].mxu0
        %v1556 = vpop.f32.mrb[0].mxu0
        %v1557 = vadd.f32 0.0, %v1556
        %v1558 = vpop.f32.mrb[0].mxu0
        %1559 = vmatprep.mubr.bf16.mxu0 0
        %1560 = vmatmul.mubr.bf16.gmra.mrb[0].mxu0 %v1480
        %v1561 = vpop.f32.mrb[0].mxu0
        %v1562 = vadd.f32 0.0, %v1561
        %v1563 = vpop.f32.mrb[0].mxu0
        %v1564 = vpop.f32.mrb[0].mxu0
        %v1565 = vadd.f32 0.0, %v1564
        %v1566 = vpop.f32.mrb[0].mxu0
        %1567 = vmatprep.mubr.bf16.mxu0 0
        %1568 = vmatmul.mubr.bf16.gmra.mrb[0].mxu0 %v1481
        %v1569 = vpop.f32.mrb[0].mxu0
        %v1570 = vadd.f32 0.0, %v1569
        %v1571 = vpop.f32.mrb[0].mxu0
        %v1572 = vpop.f32.mrb[0].mxu0
        %v1573 = vadd.f32 0.0, %v1572
        %v1574 = vpop.f32.mrb[0].mxu0
        %1575 = vmatprep.mubr.bf16.mxu0 0
        %1576 = vmatmul.mubr.bf16.gmra.mrb[0].mxu0 %v1482
        %v1577 = vpop.f32.mrb[0].mxu0
        %v1578 = vadd.f32 0.0, %v1577
        %v1579 = vpop.f32.mrb[0].mxu0
        %v1580 = vpop.f32.mrb[0].mxu0
        %v1581 = vadd.f32 0.0, %v1580
        %v1582 = vpop.f32.mrb[0].mxu0
        %1583 = vmatprep.mubr.bf16.mxu0 0
        %1584 = vmatmul.mubr.bf16.gmra.mrb[0].mxu0 %v1483
        %v1585 = vpop.f32.mrb[0].mxu0
        %v1586 = vadd.f32 0.0, %v1585
        %v1587 = vpop.f32.mrb[0].mxu0
        %v1588 = vpop.f32.mrb[0].mxu0
        %v1589 = vadd.f32 0.0, %v1588
        %v1590 = vpop.f32.mrb[0].mxu0
        %1591 = vmatprep.mubr.bf16.mxu0 0
        %1592 = vmatmul.mubr.bf16.gmra.mrb[0].mxu0 %v1484
        %v1593 = vpop.f32.mrb[0].mxu0
        %v1594 = vadd.f32 0.0, %v1593
        %v1595 = vpop.f32.mrb[0].mxu0
        %v1596 = vpop.f32.mrb[0].mxu0
        %v1597 = vadd.f32 0.0, %v1596
        %v1598 = vpop.f32.mrb[0].mxu0
        %1599 = vmatprep.mubr.bf16.mxu0 0
        %1600 = vmatmul.mubr.bf16.gmra.mrb[0].mxu0 %v1485
        %v1601 = vpop.f32.mrb[0].mxu0
        %v1602 = vadd.f32 0.0, %v1601
        %v1603 = vpop.f32.mrb[0].mxu0
        %v1604 = vpop.f32.mrb[0].mxu0
        %v1605 = vadd.f32 0.0, %v1604
        %v1606 = vpop.f32.mrb[0].mxu0
        %1607 = vmatprep.mubr.bf16.mxu0 0
        %1608 = vmatmul.mubr.bf16.gmra.mrb[0].mxu0 %v1486
        %v1609 = vpop.f32.mrb[0].mxu0
        %v1610 = vadd.f32 0.0, %v1609
        %v1611 = vpop.f32.mrb[0].mxu0
        %v1612 = vpop.f32.mrb[0].mxu0
        %v1613 = vadd.f32 0.0, %v1612
        %v1614 = vpop.f32.mrb[0].mxu0
        %1615 = vdwg.mxu0
        %1624 = vrot.lane.b32.xlu0 %v1148, 120
        %v1625 = vpop.permute.xlu0 %1624
        %1626 = vrot.lane.b32.xlu0 %v1149, 120
        %v1627 = vpop.permute.xlu0 %1626
        %1628 = vrot.lane.b32.xlu0 %v1150, 120
        %v1629 = vpop.permute.xlu0 %1628
        %1630 = vrot.lane.b32.xlu0 %v1151, 120
        %v1631 = vpop.permute.xlu0 %1630
        %1632 = vrot.lane.b32.xlu0 %v1152, 120
        %v1633 = vpop.permute.xlu0 %1632
        %1634 = vrot.lane.b32.xlu0 %v1153, 120
        %v1635 = vpop.permute.xlu0 %1634
        %1636 = vrot.lane.b32.xlu0 %v1154, 120
        %v1637 = vpop.permute.xlu0 %1636
        %1638 = vrot.lane.b32.xlu0 %v1155, 120
        %v1639 = vpop.permute.xlu0 %1638
        %1640 = vrot.lane.b32.xlu0 %v1159, 120
        %v1641 = vpop.permute.xlu0 %1640
        %1642 = vrot.lane.b32.xlu0 %v1160, 120
        %v1643 = vpop.permute.xlu0 %1642
        %1644 = vrot.lane.b32.xlu0 %v1161, 120
        %v1645 = vpop.permute.xlu0 %1644
        %1646 = vrot.lane.b32.xlu0 %v1162, 120
        %v1647 = vpop.permute.xlu0 %1646
        %1648 = vrot.lane.b32.xlu0 %v1163, 120
        %v1649 = vpop.permute.xlu0 %1648
        %1650 = vrot.lane.b32.xlu0 %v1164, 120
        %v1651 = vpop.permute.xlu0 %1650
        %1652 = vrot.lane.b32.xlu0 %v1165, 120
        %v1653 = vpop.permute.xlu0 %1652
        %1654 = vrot.lane.b32.xlu0 %v1166, 120
        %v1655 = vpop.permute.xlu0 %1654
        %v1657 = vsel %vm1173, %v1625, 0
        %v1660 = vsel %vm1173, %v1627, 0
        %v1663 = vsel %vm1173, %v1629, 0
        %v1666 = vsel %vm1173, %v1631, 0
        %v1669 = vsel %vm1173, %v1633, 0
        %v1672 = vsel %vm1173, %v1635, 0
        %v1675 = vsel %vm1173, %v1637, 0
        %v1678 = vsel %vm1173, %v1639, 0
        %v1681 = vsel %vm1173, %v1641, 0
        %v1684 = vsel %vm1173, %v1643, 0
        %v1687 = vsel %vm1173, %v1645, 0
        %v1690 = vsel %vm1173, %v1647, 0
        %v1693 = vsel %vm1173, %v1649, 0
        %v1696 = vsel %vm1173, %v1651, 0
        %v1699 = vsel %vm1173, %v1653, 0
        %v1702 = vsel %vm1173, %v1655, 0
        %1704 = vmatprep.subr.bf16.mxu0 0
        %1705 = vmatpush1.bf16.xpose.msra.mxu0 %v1681
        %1706 = vmatprep.subr.bf16.mxu0 0
        %1707 = vmatpush1.bf16.xpose.msra.mxu0 %v1684
        %1708 = vmatprep.subr.bf16.mxu0 0
        %1709 = vmatpush1.bf16.xpose.msra.mxu0 %v1687
        %1710 = vmatprep.subr.bf16.mxu0 0
        %1711 = vmatpush1.bf16.xpose.msra.mxu0 %v1690
        %1712 = vmatprep.subr.bf16.mxu0 0
        %1713 = vmatpush1.bf16.xpose.msra.mxu0 %v1693
        %1714 = vmatprep.subr.bf16.mxu0 0
        %1715 = vmatpush1.bf16.xpose.msra.mxu0 %v1696
        %1716 = vmatprep.subr.bf16.mxu0 0
        %1717 = vmatpush1.bf16.xpose.msra.mxu0 %v1699
        %1718 = vmatprep.subr.bf16.mxu0 0
        %1719 = vmatpush1.bf16.xpose.msra.mxu0 %v1702
        %1720 = vmatprep.subr.bf16.mxu0 0
        %1721 = vmatpush1.bf16.xpose.msra.mxu0 0
        %1722 = vmatprep.subr.bf16.mxu0 0
        %1723 = vmatpush1.bf16.xpose.msra.mxu0 0
        %1724 = vmatprep.subr.bf16.mxu0 0
        %1725 = vmatpush1.bf16.xpose.msra.mxu0 0
        %1726 = vmatprep.subr.bf16.mxu0 0
        %1727 = vmatpush1.bf16.xpose.msra.mxu0 0
        %1728 = vmatprep.subr.bf16.mxu0 0
        %1729 = vmatpush1.bf16.xpose.msra.mxu0 0
        %1730 = vmatprep.subr.bf16.mxu0 0
        %1731 = vmatpush1.bf16.xpose.msra.mxu0 0
        %1732 = vmatprep.subr.bf16.mxu0 0
        %1733 = vmatpush1.bf16.xpose.msra.mxu0 0
        %1734 = vmatprep.subr.bf16.mxu0 0
        %1735 = vmatpush1.bf16.xpose.msra.mxu0 0
        %1736 = vmatprep.mubr.bf16.mxu0 0
        %1737 = vmatmul.mubr.bf16.gmra.mrb[0].mxu0 %v1657
        %v1738 = vpop.f32.mrb[0].mxu0
        %v1739 = vadd.f32 %v1171, %v1738
        %v1740 = vpop.f32.mrb[0].mxu0
        %v1741 = vpop.f32.mrb[0].mxu0
        %v1742 = vadd.f32 %v1171, %v1741
        %v1743 = vpop.f32.mrb[0].mxu0
        %1744 = vmatprep.mubr.bf16.mxu0 0
        %1745 = vmatmul.mubr.bf16.gmra.mrb[0].mxu0 %v1660
        %v1746 = vpop.f32.mrb[0].mxu0
        %v1747 = vadd.f32 %v1171, %v1746
        %v1748 = vpop.f32.mrb[0].mxu0
        %v1749 = vpop.f32.mrb[0].mxu0
        %v1750 = vadd.f32 %v1171, %v1749
        %v1751 = vpop.f32.mrb[0].mxu0
        %1752 = vmatprep.mubr.bf16.mxu0 0
        %1753 = vmatmul.mubr.bf16.gmra.mrb[0].mxu0 %v1663
        %v1754 = vpop.f32.mrb[0].mxu0
        %v1755 = vadd.f32 %v1171, %v1754
        %v1756 = vpop.f32.mrb[0].mxu0
        %v1757 = vpop.f32.mrb[0].mxu0
        %v1758 = vadd.f32 %v1171, %v1757
        %v1759 = vpop.f32.mrb[0].mxu0
        %1760 = vmatprep.mubr.bf16.mxu0 0
        %1761 = vmatmul.mubr.bf16.gmra.mrb[0].mxu0 %v1666
        %v1762 = vpop.f32.mrb[0].mxu0
        %v1763 = vadd.f32 %v1171, %v1762
        %v1764 = vpop.f32.mrb[0].mxu0
        %v1765 = vpop.f32.mrb[0].mxu0
        %v1766 = vadd.f32 %v1171, %v1765
        %v1767 = vpop.f32.mrb[0].mxu0
        %1768 = vmatprep.mubr.bf16.mxu0 0
        %1769 = vmatmul.mubr.bf16.gmra.mrb[0].mxu0 %v1669
        %v1770 = vpop.f32.mrb[0].mxu0
        %v1771 = vadd.f32 %v1171, %v1770
        %v1772 = vpop.f32.mrb[0].mxu0
        %v1773 = vpop.f32.mrb[0].mxu0
        %v1774 = vadd.f32 %v1171, %v1773
        %v1775 = vpop.f32.mrb[0].mxu0
        %1776 = vmatprep.mubr.bf16.mxu0 0
        %1777 = vmatmul.mubr.bf16.gmra.mrb[0].mxu0 %v1672
        %v1778 = vpop.f32.mrb[0].mxu0
        %v1779 = vadd.f32 %v1171, %v1778
        %v1780 = vpop.f32.mrb[0].mxu0
        %v1781 = vpop.f32.mrb[0].mxu0
        %v1782 = vadd.f32 %v1171, %v1781
        %v1783 = vpop.f32.mrb[0].mxu0
        %1784 = vmatprep.mubr.bf16.mxu0 0
        %1785 = vmatmul.mubr.bf16.gmra.mrb[0].mxu0 %v1675
        %v1786 = vpop.f32.mrb[0].mxu0
        %v1787 = vadd.f32 %v1171, %v1786
        %v1788 = vpop.f32.mrb[0].mxu0
        %v1789 = vpop.f32.mrb[0].mxu0
        %v1790 = vadd.f32 %v1171, %v1789
        %v1791 = vpop.f32.mrb[0].mxu0
        %1792 = vmatprep.mubr.bf16.mxu0 0
        %1793 = vmatmul.mubr.bf16.gmra.mrb[0].mxu0 %v1678
        %v1794 = vpop.f32.mrb[0].mxu0
        %v1795 = vadd.f32 %v1171, %v1794
        %v1796 = vpop.f32.mrb[0].mxu0
        %v1797 = vpop.f32.mrb[0].mxu0
        %v1798 = vadd.f32 %v1171, %v1797
        %v1799 = vpop.f32.mrb[0].mxu0
        %1800 = vdwg.mxu0
        %1801 = vmax.xlane.f32.xlu0 %v1739
        %v1802 = vpop.xlane.xlu0 %1801
        %1803 = vmax.xlane.f32.xlu0 %v1742
        %v1804 = vpop.xlane.xlu0 %1803
        %1805 = vmax.xlane.f32.xlu0 %v1747
        %v1806 = vpop.xlane.xlu0 %1805
        %1807 = vmax.xlane.f32.xlu0 %v1750
        %v1808 = vpop.xlane.xlu0 %1807
        %1809 = vmax.xlane.f32.xlu0 %v1755
        %v1810 = vpop.xlane.xlu0 %1809
        %1811 = vmax.xlane.f32.xlu0 %v1758
        %v1812 = vpop.xlane.xlu0 %1811
        %1813 = vmax.xlane.f32.xlu0 %v1763
        %v1814 = vpop.xlane.xlu0 %1813
        %1815 = vmax.xlane.f32.xlu0 %v1766
        %v1816 = vpop.xlane.xlu0 %1815
        %1817 = vmax.xlane.f32.xlu0 %v1771
        %v1818 = vpop.xlane.xlu0 %1817
        %1819 = vmax.xlane.f32.xlu0 %v1774
        %v1820 = vpop.xlane.xlu0 %1819
        %1821 = vmax.xlane.f32.xlu0 %v1779
        %v1822 = vpop.xlane.xlu0 %1821
        %1823 = vmax.xlane.f32.xlu0 %v1782
        %v1824 = vpop.xlane.xlu0 %1823
        %1825 = vmax.xlane.f32.xlu0 %v1787
        %v1826 = vpop.xlane.xlu0 %1825
        %1827 = vmax.xlane.f32.xlu0 %v1790
        %v1828 = vpop.xlane.xlu0 %1827
        %1829 = vmax.xlane.f32.xlu0 %v1795
        %v1830 = vpop.xlane.xlu0 %1829
        %1831 = vmax.xlane.f32.xlu0 %v1798
        %v1832 = vpop.xlane.xlu0 %1831
        %v1833 = vsub.f32 %v1739, %v1802
        %v1834 = vsub.f32 %v1742, %v1804
        %v1835 = vsub.f32 %v1747, %v1806
        %v1836 = vsub.f32 %v1750, %v1808
        %v1837 = vsub.f32 %v1755, %v1810
        %v1838 = vsub.f32 %v1758, %v1812
        %v1839 = vsub.f32 %v1763, %v1814
        %v1840 = vsub.f32 %v1766, %v1816
        %v1841 = vsub.f32 %v1771, %v1818
        %v1842 = vsub.f32 %v1774, %v1820
        %v1843 = vsub.f32 %v1779, %v1822
        %v1844 = vsub.f32 %v1782, %v1824
        %v1845 = vsub.f32 %v1787, %v1826
        %v1846 = vsub.f32 %v1790, %v1828
        %v1847 = vsub.f32 %v1795, %v1830
        %v1848 = vsub.f32 %v1798, %v1832
        %v1849 = vmul.f32 %v1833, 1.442695
        %v1850 = vpow.pop %v1849
        %v1851 = vmul.f32 %v1834, 1.442695
        %v1852 = vpow.pop %v1851
        %v1853 = vmul.f32 %v1835, 1.442695
        %v1854 = vpow.pop %v1853
        %v1855 = vmul.f32 %v1836, 1.442695
        %v1856 = vpow.pop %v1855
        %v1857 = vmul.f32 %v1837, 1.442695
        %v1858 = vpow.pop %v1857
        %v1859 = vmul.f32 %v1838, 1.442695
        %v1860 = vpow.pop %v1859
        %v1861 = vmul.f32 %v1839, 1.442695
        %v1862 = vpow.pop %v1861
        %v1863 = vmul.f32 %v1840, 1.442695
        %v1864 = vpow.pop %v1863
        %v1865 = vmul.f32 %v1841, 1.442695
        %v1866 = vpow.pop %v1865
        %v1867 = vmul.f32 %v1842, 1.442695
        %v1868 = vpow.pop %v1867
        %v1869 = vmul.f32 %v1843, 1.442695
        %v1870 = vpow.pop %v1869
        %v1871 = vmul.f32 %v1844, 1.442695
        %v1872 = vpow.pop %v1871
        %v1873 = vmul.f32 %v1845, 1.442695
        %v1874 = vpow.pop %v1873
        %v1875 = vmul.f32 %v1846, 1.442695
        %v1876 = vpow.pop %v1875
        %v1877 = vmul.f32 %v1847, 1.442695
        %v1878 = vpow.pop %v1877
        %v1879 = vmul.f32 %v1848, 1.442695
        %v1880 = vpow.pop %v1879
        %1881 = vadd.xlane.f32.xlu0 %v1850
        %v1882 = vpop.xlane.xlu0 %1881
        %1883 = vadd.xlane.f32.xlu0 %v1852
        %v1884 = vpop.xlane.xlu0 %1883
        %1885 = vadd.xlane.f32.xlu0 %v1854
        %v1886 = vpop.xlane.xlu0 %1885
        %1887 = vadd.xlane.f32.xlu0 %v1856
        %v1888 = vpop.xlane.xlu0 %1887
        %1889 = vadd.xlane.f32.xlu0 %v1858
        %v1890 = vpop.xlane.xlu0 %1889
        %1891 = vadd.xlane.f32.xlu0 %v1860
        %v1892 = vpop.xlane.xlu0 %1891
        %1893 = vadd.xlane.f32.xlu0 %v1862
        %v1894 = vpop.xlane.xlu0 %1893
        %1895 = vadd.xlane.f32.xlu0 %v1864
        %v1896 = vpop.xlane.xlu0 %1895
        %1897 = vadd.xlane.f32.xlu0 %v1866
        %v1898 = vpop.xlane.xlu0 %1897
        %1899 = vadd.xlane.f32.xlu0 %v1868
        %v1900 = vpop.xlane.xlu0 %1899
        %1901 = vadd.xlane.f32.xlu0 %v1870
        %v1902 = vpop.xlane.xlu0 %1901
        %1903 = vadd.xlane.f32.xlu0 %v1872
        %v1904 = vpop.xlane.xlu0 %1903
        %1905 = vadd.xlane.f32.xlu0 %v1874
        %v1906 = vpop.xlane.xlu0 %1905
        %1907 = vadd.xlane.f32.xlu0 %v1876
        %v1908 = vpop.xlane.xlu0 %1907
        %1909 = vadd.xlane.f32.xlu0 %v1878
        %v1910 = vpop.xlane.xlu0 %1909
        %1911 = vadd.xlane.f32.xlu0 %v1880
        %v1912 = vpop.xlane.xlu0 %1911
        %v1913 = vrcp.pop %v1882
        %v1914 = vmul.f32 1.0, %v1913
        %v1915 = vrcp.pop %v1884
        %v1916 = vmul.f32 1.0, %v1915
        %v1917 = vrcp.pop %v1886
        %v1918 = vmul.f32 1.0, %v1917
        %v1919 = vrcp.pop %v1888
        %v1920 = vmul.f32 1.0, %v1919
        %v1921 = vrcp.pop %v1890
        %v1922 = vmul.f32 1.0, %v1921
        %v1923 = vrcp.pop %v1892
        %v1924 = vmul.f32 1.0, %v1923
        %v1925 = vrcp.pop %v1894
        %v1926 = vmul.f32 1.0, %v1925
        %v1927 = vrcp.pop %v1896
        %v1928 = vmul.f32 1.0, %v1927
        %v1929 = vrcp.pop %v1898
        %v1930 = vmul.f32 1.0, %v1929
        %v1931 = vrcp.pop %v1900
        %v1932 = vmul.f32 1.0, %v1931
        %v1933 = vrcp.pop %v1902
        %v1934 = vmul.f32 1.0, %v1933
        %v1935 = vrcp.pop %v1904
        %v1936 = vmul.f32 1.0, %v1935
        %v1937 = vrcp.pop %v1906
        %v1938 = vmul.f32 1.0, %v1937
        %v1939 = vrcp.pop %v1908
        %v1940 = vmul.f32 1.0, %v1939
        %v1941 = vrcp.pop %v1910
        %v1942 = vmul.f32 1.0, %v1941
        %v1943 = vrcp.pop %v1912
        %v1944 = vmul.f32 1.0, %v1943
        %v1945 = vmul.f32 %v1850, %v1914
        %v1946 = vmul.f32 %v1852, %v1916
        %v1947 = vmul.f32 %v1854, %v1918
        %v1948 = vmul.f32 %v1856, %v1920
        %v1949 = vmul.f32 %v1858, %v1922
        %v1950 = vmul.f32 %v1860, %v1924
        %v1951 = vmul.f32 %v1862, %v1926
        %v1952 = vmul.f32 %v1864, %v1928
        %v1953 = vmul.f32 %v1866, %v1930
        %v1954 = vmul.f32 %v1868, %v1932
        %v1955 = vmul.f32 %v1870, %v1934
        %v1956 = vmul.f32 %v1872, %v1936
        %v1957 = vmul.f32 %v1874, %v1938
        %v1958 = vmul.f32 %v1876, %v1940
        %v1959 = vmul.f32 %v1878, %v1942
        %v1960 = vmul.f32 %v1880, %v1944
        %v1961 = vpack.c.bf16 %v1946, %v1945
        %v1962 = vpack.c.bf16 %v1948, %v1947
        %v1963 = vpack.c.bf16 %v1950, %v1949
        %v1964 = vpack.c.bf16 %v1952, %v1951
        %v1965 = vpack.c.bf16 %v1954, %v1953
        %v1966 = vpack.c.bf16 %v1956, %v1955
        %v1967 = vpack.c.bf16 %v1958, %v1957
        %v1968 = vpack.c.bf16 %v1960, %v1959
        %1969 = vrot.lane.b32.xlu0 %v1159, 88
        %v1970 = vpop.permute.xlu0 %1969
        %1971 = vrot.lane.b32.xlu0 %v1160, 88
        %v1972 = vpop.permute.xlu0 %1971
        %1973 = vrot.lane.b32.xlu0 %v1161, 88
        %v1974 = vpop.permute.xlu0 %1973
        %1975 = vrot.lane.b32.xlu0 %v1162, 88
        %v1976 = vpop.permute.xlu0 %1975
        %1977 = vrot.lane.b32.xlu0 %v1163, 88
        %v1978 = vpop.permute.xlu0 %1977
        %1979 = vrot.lane.b32.xlu0 %v1164, 88
        %v1980 = vpop.permute.xlu0 %1979
        %1981 = vrot.lane.b32.xlu0 %v1165, 88
        %v1982 = vpop.permute.xlu0 %1981
        %1983 = vrot.lane.b32.xlu0 %v1166, 88
        %v1984 = vpop.permute.xlu0 %1983
        %1993 = vmatprep.subr.bf16.mxu0 0
        %1994 = vmatpush1.bf16.msra.mxu0 %v1970
        %1995 = vmatprep.subr.bf16.mxu0 0
        %1996 = vmatpush1.bf16.msra.mxu0 %v1972
        %1997 = vmatprep.subr.bf16.mxu0 0
        %1998 = vmatpush1.bf16.msra.mxu0 %v1974
        %1999 = vmatprep.subr.bf16.mxu0 0
        %2000 = vmatpush1.bf16.msra.mxu0 %v1976
        %2001 = vmatprep.subr.bf16.mxu0 0
        %2002 = vmatpush1.bf16.msra.mxu0 %v1978
        %2003 = vmatprep.subr.bf16.mxu0 0
        %2004 = vmatpush1.bf16.msra.mxu0 %v1980
        %2005 = vmatprep.subr.bf16.mxu0 0
        %2006 = vmatpush1.bf16.msra.mxu0 %v1982
        %2007 = vmatprep.subr.bf16.mxu0 0
        %2008 = vmatpush1.bf16.msra.mxu0 %v1984
        %2009 = vmatprep.subr.bf16.mxu0 0
        %2010 = vmatpush1.bf16.msra.mxu0 0
        %2011 = vmatprep.subr.bf16.mxu0 0
        %2012 = vmatpush1.bf16.msra.mxu0 0
        %2013 = vmatprep.subr.bf16.mxu0 0
        %2014 = vmatpush1.bf16.msra.mxu0 0
        %2015 = vmatprep.subr.bf16.mxu0 0
        %2016 = vmatpush1.bf16.msra.mxu0 0
        %2017 = vmatprep.subr.bf16.mxu0 0
        %2018 = vmatpush1.bf16.msra.mxu0 0
        %2019 = vmatprep.subr.bf16.mxu0 0
        %2020 = vmatpush1.bf16.msra.mxu0 0
        %2021 = vmatprep.subr.bf16.mxu0 0
        %2022 = vmatpush1.bf16.msra.mxu0 0
        %2023 = vmatprep.subr.bf16.mxu0 0
        %2024 = vmatpush1.bf16.msra.mxu0 0
        %2025 = vmatprep.mubr.bf16.mxu0 0
        %2026 = vmatmul.mubr.bf16.gmra.mrb[0].mxu0 %v1961
        %v2027 = vpop.f32.mrb[0].mxu0
        %v2028 = vadd.f32 0.0, %v2027
        %v2029 = vpop.f32.mrb[0].mxu0
        %v2030 = vpop.f32.mrb[0].mxu0
        %v2031 = vadd.f32 0.0, %v2030
        %v2032 = vpop.f32.mrb[0].mxu0
        %2033 = vmatprep.mubr.bf16.mxu0 0
        %2034 = vmatmul.mubr.bf16.gmra.mrb[0].mxu0 %v1962
        %v2035 = vpop.f32.mrb[0].mxu0
        %v2036 = vadd.f32 0.0, %v2035
        %v2037 = vpop.f32.mrb[0].mxu0
        %v2038 = vpop.f32.mrb[0].mxu0
        %v2039 = vadd.f32 0.0, %v2038
        %v2040 = vpop.f32.mrb[0].mxu0
        %2041 = vmatprep.mubr.bf16.mxu0 0
        %2042 = vmatmul.mubr.bf16.gmra.mrb[0].mxu0 %v1963
        %v2043 = vpop.f32.mrb[0].mxu0
        %v2044 = vadd.f32 0.0, %v2043
        %v2045 = vpop.f32.mrb[0].mxu0
        %v2046 = vpop.f32.mrb[0].mxu0
        %v2047 = vadd.f32 0.0, %v2046
        %v2048 = vpop.f32.mrb[0].mxu0
        %2049 = vmatprep.mubr.bf16.mxu0 0
        %2050 = vmatmul.mubr.bf16.gmra.mrb[0].mxu0 %v1964
        %v2051 = vpop.f32.mrb[0].mxu0
        %v2052 = vadd.f32 0.0, %v2051
        %v2053 = vpop.f32.mrb[0].mxu0
        %v2054 = vpop.f32.mrb[0].mxu0
        %v2055 = vadd.f32 0.0, %v2054
        %v2056 = vpop.f32.mrb[0].mxu0
        %2057 = vmatprep.mubr.bf16.mxu0 0
        %2058 = vmatmul.mubr.bf16.gmra.mrb[0].mxu0 %v1965
        %v2059 = vpop.f32.mrb[0].mxu0
        %v2060 = vadd.f32 0.0, %v2059
        %v2061 = vpop.f32.mrb[0].mxu0
        %v2062 = vpop.f32.mrb[0].mxu0
        %v2063 = vadd.f32 0.0, %v2062
        %v2064 = vpop.f32.mrb[0].mxu0
        %2065 = vmatprep.mubr.bf16.mxu0 0
        %2066 = vmatmul.mubr.bf16.gmra.mrb[0].mxu0 %v1966
        %v2067 = vpop.f32.mrb[0].mxu0
        %v2068 = vadd.f32 0.0, %v2067
        %v2069 = vpop.f32.mrb[0].mxu0
        %v2070 = vpop.f32.mrb[0].mxu0
        %v2071 = vadd.f32 0.0, %v2070
        %v2072 = vpop.f32.mrb[0].mxu0
        %2073 = vmatprep.mubr.bf16.mxu0 0
        %2074 = vmatmul.mubr.bf16.gmra.mrb[0].mxu0 %v1967
        %v2075 = vpop.f32.mrb[0].mxu0
        %v2076 = vadd.f32 0.0, %v2075
        %v2077 = vpop.f32.mrb[0].mxu0
        %v2078 = vpop.f32.mrb[0].mxu0
        %v2079 = vadd.f32 0.0, %v2078
        %v2080 = vpop.f32.mrb[0].mxu0
        %2081 = vmatprep.mubr.bf16.mxu0 0
        %2082 = vmatmul.mubr.bf16.gmra.mrb[0].mxu0 %v1968
        %v2083 = vpop.f32.mrb[0].mxu0
        %v2084 = vadd.f32 0.0, %v2083
        %v2085 = vpop.f32.mrb[0].mxu0
        %v2086 = vpop.f32.mrb[0].mxu0
        %v2087 = vadd.f32 0.0, %v2086
        %v2088 = vpop.f32.mrb[0].mxu0
        %2089 = vdwg.mxu0
        %v2090 = vadd.f32 %v1463, %v1945
        %v2091 = vadd.f32 %v1464, %v1946
        %v2092 = vadd.f32 %v1465, %v1947
        %v2093 = vadd.f32 %v1466, %v1948
        %v2094 = vadd.f32 %v1467, %v1949
        %v2095 = vadd.f32 %v1468, %v1950
        %v2096 = vadd.f32 %v1469, %v1951
        %v2097 = vadd.f32 %v1470, %v1952
        %v2098 = vadd.f32 %v1471, %v1953
        %v2099 = vadd.f32 %v1472, %v1954
        %v2100 = vadd.f32 %v1473, %v1955
        %v2101 = vadd.f32 %v1474, %v1956
        %v2102 = vadd.f32 %v1475, %v1957
        %v2103 = vadd.f32 %v1476, %v1958
        %v2104 = vadd.f32 %v1477, %v1959
        %v2105 = vadd.f32 %v1478, %v1960
        %2106 = vrot.lane.b32.xlu0 %v1148, 112
        %v2107 = vpop.permute.xlu0 %2106
        %2108 = vrot.lane.b32.xlu0 %v1149, 112
        %v2109 = vpop.permute.xlu0 %2108
        %2110 = vrot.lane.b32.xlu0 %v1150, 112
        %v2111 = vpop.permute.xlu0 %2110
        %2112 = vrot.lane.b32.xlu0 %v1151, 112
        %v2113 = vpop.permute.xlu0 %2112
        %2114 = vrot.lane.b32.xlu0 %v1152, 112
        %v2115 = vpop.permute.xlu0 %2114
        %2116 = vrot.lane.b32.xlu0 %v1153, 112
        %v2117 = vpop.permute.xlu0 %2116
        %2118 = vrot.lane.b32.xlu0 %v1154, 112
        %v2119 = vpop.permute.xlu0 %2118
        %2120 = vrot.lane.b32.xlu0 %v1155, 112
        %v2121 = vpop.permute.xlu0 %2120
        %2122 = vrot.lane.b32.xlu0 %v1159, 112
        %v2123 = vpop.permute.xlu0 %2122
        %2124 = vrot.lane.b32.xlu0 %v1160, 112
        %v2125 = vpop.permute.xlu0 %2124
        %2126 = vrot.lane.b32.xlu0 %v1161, 112
        %v2127 = vpop.permute.xlu0 %2126
        %2128 = vrot.lane.b32.xlu0 %v1162, 112
        %v2129 = vpop.permute.xlu0 %2128
        %2130 = vrot.lane.b32.xlu0 %v1163, 112
        %v2131 = vpop.permute.xlu0 %2130
        %2132 = vrot.lane.b32.xlu0 %v1164, 112
        %v2133 = vpop.permute.xlu0 %2132
        %2134 = vrot.lane.b32.xlu0 %v1165, 112
        %v2135 = vpop.permute.xlu0 %2134
        %2136 = vrot.lane.b32.xlu0 %v1166, 112
        %v2137 = vpop.permute.xlu0 %2136
        %v2139 = vsel %vm1173, %v2107, 0
        %v2142 = vsel %vm1173, %v2109, 0
        %v2145 = vsel %vm1173, %v2111, 0
        %v2148 = vsel %vm1173, %v2113, 0
        %v2151 = vsel %vm1173, %v2115, 0
        %v2154 = vsel %vm1173, %v2117, 0
        %v2157 = vsel %vm1173, %v2119, 0
        %v2160 = vsel %vm1173, %v2121, 0
        %v2163 = vsel %vm1173, %v2123, 0
        %v2166 = vsel %vm1173, %v2125, 0
        %v2169 = vsel %vm1173, %v2127, 0
        %v2172 = vsel %vm1173, %v2129, 0
        %v2175 = vsel %vm1173, %v2131, 0
        %v2178 = vsel %vm1173, %v2133, 0
        %v2181 = vsel %vm1173, %v2135, 0
        %v2184 = vsel %vm1173, %v2137, 0
        %2186 = vmatprep.subr.bf16.mxu0 0
        %2187 = vmatpush1.bf16.xpose.msra.mxu0 %v2163
        %2188 = vmatprep.subr.bf16.mxu0 0
        %2189 = vmatpush1.bf16.xpose.msra.mxu0 %v2166
        %2190 = vmatprep.subr.bf16.mxu0 0
        %2191 = vmatpush1.bf16.xpose.msra.mxu0 %v2169
        %2192 = vmatprep.subr.bf16.mxu0 0
        %2193 = vmatpush1.bf16.xpose.msra.mxu0 %v2172
        %2194 = vmatprep.subr.bf16.mxu0 0
        %2195 = vmatpush1.bf16.xpose.msra.mxu0 %v2175
        %2196 = vmatprep.subr.bf16.mxu0 0
        %2197 = vmatpush1.bf16.xpose.msra.mxu0 %v2178
        %2198 = vmatprep.subr.bf16.mxu0 0
        %2199 = vmatpush1.bf16.xpose.msra.mxu0 %v2181
        %2200 = vmatprep.subr.bf16.mxu0 0
        %2201 = vmatpush1.bf16.xpose.msra.mxu0 %v2184
        %2202 = vmatprep.subr.bf16.mxu0 0
        %2203 = vmatpush1.bf16.xpose.msra.mxu0 0
        %2204 = vmatprep.subr.bf16.mxu0 0
        %2205 = vmatpush1.bf16.xpose.msra.mxu0 0
        %2206 = vmatprep.subr.bf16.mxu0 0
        %2207 = vmatpush1.bf16.xpose.msra.mxu0 0
        %2208 = vmatprep.subr.bf16.mxu0 0
        %2209 = vmatpush1.bf16.xpose.msra.mxu0 0
        %2210 = vmatprep.subr.bf16.mxu0 0
        %2211 = vmatpush1.bf16.xpose.msra.mxu0 0
        %2212 = vmatprep.subr.bf16.mxu0 0
        %2213 = vmatpush1.bf16.xpose.msra.mxu0 0
        %2214 = vmatprep.subr.bf16.mxu0 0
        %2215 = vmatpush1.bf16.xpose.msra.mxu0 0
        %2216 = vmatprep.subr.bf16.mxu0 0
        %2217 = vmatpush1.bf16.xpose.msra.mxu0 0
        %2218 = vmatprep.mubr.bf16.mxu0 0
        %2219 = vmatmul.mubr.bf16.gmra.mrb[0].mxu0 %v2139
        %v2220 = vpop.f32.mrb[0].mxu0
        %v2221 = vadd.f32 %v1171, %v2220
        %v2222 = vpop.f32.mrb[0].mxu0
        %v2223 = vpop.f32.mrb[0].mxu0
        %v2224 = vadd.f32 %v1171, %v2223
        %v2225 = vpop.f32.mrb[0].mxu0
        %2226 = vmatprep.mubr.bf16.mxu0 0
        %2227 = vmatmul.mubr.bf16.gmra.mrb[0].mxu0 %v2142
        %v2228 = vpop.f32.mrb[0].mxu0
        %v2229 = vadd.f32 %v1171, %v2228
        %v2230 = vpop.f32.mrb[0].mxu0
        %v2231 = vpop.f32.mrb[0].mxu0
        %v2232 = vadd.f32 %v1171, %v2231
        %v2233 = vpop.f32.mrb[0].mxu0
        %2234 = vmatprep.mubr.bf16.mxu0 0
        %2235 = vmatmul.mubr.bf16.gmra.mrb[0].mxu0 %v2145
        %v2236 = vpop.f32.mrb[0].mxu0
        %v2237 = vadd.f32 %v1171, %v2236
        %v2238 = vpop.f32.mrb[0].mxu0
        %v2239 = vpop.f32.mrb[0].mxu0
        %v2240 = vadd.f32 %v1171, %v2239
        %v2241 = vpop.f32.mrb[0].mxu0
        %2242 = vmatprep.mubr.bf16.mxu0 0
        %2243 = vmatmul.mubr.bf16.gmra.mrb[0].mxu0 %v2148
        %v2244 = vpop.f32.mrb[0].mxu0
        %v2245 = vadd.f32 %v1171, %v2244
        %v2246 = vpop.f32.mrb[0].mxu0
        %v2247 = vpop.f32.mrb[0].mxu0
        %v2248 = vadd.f32 %v1171, %v2247
        %v2249 = vpop.f32.mrb[0].mxu0
        %2250 = vmatprep.mubr.bf16.mxu0 0
        %2251 = vmatmul.mubr.bf16.gmra.mrb[0].mxu0 %v2151
        %v2252 = vpop.f32.mrb[0].mxu0
        %v2253 = vadd.f32 %v1171, %v2252
        %v2254 = vpop.f32.mrb[0].mxu0
        %v2255 = vpop.f32.mrb[0].mxu0
        %v2256 = vadd.f32 %v1171, %v2255
        %v2257 = vpop.f32.mrb[0].mxu0
        %2258 = vmatprep.mubr.bf16.mxu0 0
        %2259 = vmatmul.mubr.bf16.gmra.mrb[0].mxu0 %v2154
        %v2260 = vpop.f32.mrb[0].mxu0
        %v2261 = vadd.f32 %v1171, %v2260
        %v2262 = vpop.f32.mrb[0].mxu0
        %v2263 = vpop.f32.mrb[0].mxu0
        %v2264 = vadd.f32 %v1171, %v2263
        %v2265 = vpop.f32.mrb[0].mxu0
        %2266 = vmatprep.mubr.bf16.mxu0 0
        %2267 = vmatmul.mubr.bf16.gmra.mrb[0].mxu0 %v2157
        %v2268 = vpop.f32.mrb[0].mxu0
        %v2269 = vadd.f32 %v1171, %v2268
        %v2270 = vpop.f32.mrb[0].mxu0
        %v2271 = vpop.f32.mrb[0].mxu0
        %v2272 = vadd.f32 %v1171, %v2271
        %v2273 = vpop.f32.mrb[0].mxu0
        %2274 = vmatprep.mubr.bf16.mxu0 0
        %2275 = vmatmul.mubr.bf16.gmra.mrb[0].mxu0 %v2160
        %v2276 = vpop.f32.mrb[0].mxu0
        %v2277 = vadd.f32 %v1171, %v2276
        %v2278 = vpop.f32.mrb[0].mxu0
        %v2279 = vpop.f32.mrb[0].mxu0
        %v2280 = vadd.f32 %v1171, %v2279
        %v2281 = vpop.f32.mrb[0].mxu0
        %2282 = vdwg.mxu0
        %2283 = vmax.xlane.f32.xlu0 %v2221
        %v2284 = vpop.xlane.xlu0 %2283
        %2285 = vmax.xlane.f32.xlu0 %v2224
        %v2286 = vpop.xlane.xlu0 %2285
        %2287 = vmax.xlane.f32.xlu0 %v2229
        %v2288 = vpop.xlane.xlu0 %2287
        %2289 = vmax.xlane.f32.xlu0 %v2232
        %v2290 = vpop.xlane.xlu0 %2289
        %2291 = vmax.xlane.f32.xlu0 %v2237
        %v2292 = vpop.xlane.xlu0 %2291
        %2293 = vmax.xlane.f32.xlu0 %v2240
        %v2294 = vpop.xlane.xlu0 %2293
        %2295 = vmax.xlane.f32.xlu0 %v2245
        %v2296 = vpop.xlane.xlu0 %2295
        %2297 = vmax.xlane.f32.xlu0 %v2248
        %v2298 = vpop.xlane.xlu0 %2297
        %2299 = vmax.xlane.f32.xlu0 %v2253
        %v2300 = vpop.xlane.xlu0 %2299
        %2301 = vmax.xlane.f32.xlu0 %v2256
        %v2302 = vpop.xlane.xlu0 %2301
        %2303 = vmax.xlane.f32.xlu0 %v2261
        %v2304 = vpop.xlane.xlu0 %2303
        %2305 = vmax.xlane.f32.xlu0 %v2264
        %v2306 = vpop.xlane.xlu0 %2305
        %2307 = vmax.xlane.f32.xlu0 %v2269
        %v2308 = vpop.xlane.xlu0 %2307
        %2309 = vmax.xlane.f32.xlu0 %v2272
        %v2310 = vpop.xlane.xlu0 %2309
        %2311 = vmax.xlane.f32.xlu0 %v2277
        %v2312 = vpop.xlane.xlu0 %2311
        %2313 = vmax.xlane.f32.xlu0 %v2280
        %v2314 = vpop.xlane.xlu0 %2313
        %v2315 = vsub.f32 %v2221, %v2284
        %v2316 = vsub.f32 %v2224, %v2286
        %v2317 = vsub.f32 %v2229, %v2288
        %v2318 = vsub.f32 %v2232, %v2290
        %v2319 = vsub.f32 %v2237, %v2292
        %v2320 = vsub.f32 %v2240, %v2294
        %v2321 = vsub.f32 %v2245, %v2296
        %v2322 = vsub.f32 %v2248, %v2298
        %v2323 = vsub.f32 %v2253, %v2300
        %v2324 = vsub.f32 %v2256, %v2302
        %v2325 = vsub.f32 %v2261, %v2304
        %v2326 = vsub.f32 %v2264, %v2306
        %v2327 = vsub.f32 %v2269, %v2308
        %v2328 = vsub.f32 %v2272, %v2310
        %v2329 = vsub.f32 %v2277, %v2312
        %v2330 = vsub.f32 %v2280, %v2314
        %v2331 = vmul.f32 %v2315, 1.442695
        %v2332 = vpow.pop %v2331
        %v2333 = vmul.f32 %v2316, 1.442695
        %v2334 = vpow.pop %v2333
        %v2335 = vmul.f32 %v2317, 1.442695
        %v2336 = vpow.pop %v2335
        %v2337 = vmul.f32 %v2318, 1.442695
        %v2338 = vpow.pop %v2337
        %v2339 = vmul.f32 %v2319, 1.442695
        %v2340 = vpow.pop %v2339
        %v2341 = vmul.f32 %v2320, 1.442695
        %v2342 = vpow.pop %v2341
        %v2343 = vmul.f32 %v2321, 1.442695
        %v2344 = vpow.pop %v2343
        %v2345 = vmul.f32 %v2322, 1.442695
        %v2346 = vpow.pop %v2345
        %v2347 = vmul.f32 %v2323, 1.442695
        %v2348 = vpow.pop %v2347
        %v2349 = vmul.f32 %v2324, 1.442695
        %v2350 = vpow.pop %v2349
        %v2351 = vmul.f32 %v2325, 1.442695
        %v2352 = vpow.pop %v2351
        %v2353 = vmul.f32 %v2326, 1.442695
        %v2354 = vpow.pop %v2353
        %v2355 = vmul.f32 %v2327, 1.442695
        %v2356 = vpow.pop %v2355
        %v2357 = vmul.f32 %v2328, 1.442695
        %v2358 = vpow.pop %v2357
        %v2359 = vmul.f32 %v2329, 1.442695
        %v2360 = vpow.pop %v2359
        %v2361 = vmul.f32 %v2330, 1.442695
        %v2362 = vpow.pop %v2361
        %2363 = vadd.xlane.f32.xlu0 %v2332
        %v2364 = vpop.xlane.xlu0 %2363
        %2365 = vadd.xlane.f32.xlu0 %v2334
        %v2366 = vpop.xlane.xlu0 %2365
        %2367 = vadd.xlane.f32.xlu0 %v2336
        %v2368 = vpop.xlane.xlu0 %2367
        %2369 = vadd.xlane.f32.xlu0 %v2338
        %v2370 = vpop.xlane.xlu0 %2369
        %2371 = vadd.xlane.f32.xlu0 %v2340
        %v2372 = vpop.xlane.xlu0 %2371
        %2373 = vadd.xlane.f32.xlu0 %v2342
        %v2374 = vpop.xlane.xlu0 %2373
        %2375 = vadd.xlane.f32.xlu0 %v2344
        %v2376 = vpop.xlane.xlu0 %2375
        %2377 = vadd.xlane.f32.xlu0 %v2346
        %v2378 = vpop.xlane.xlu0 %2377
        %2379 = vadd.xlane.f32.xlu0 %v2348
        %v2380 = vpop.xlane.xlu0 %2379
        %2381 = vadd.xlane.f32.xlu0 %v2350
        %v2382 = vpop.xlane.xlu0 %2381
        %2383 = vadd.xlane.f32.xlu0 %v2352
        %v2384 = vpop.xlane.xlu0 %2383
        %2385 = vadd.xlane.f32.xlu0 %v2354
        %v2386 = vpop.xlane.xlu0 %2385
        %2387 = vadd.xlane.f32.xlu0 %v2356
        %v2388 = vpop.xlane.xlu0 %2387
        %2389 = vadd.xlane.f32.xlu0 %v2358
        %v2390 = vpop.xlane.xlu0 %2389
        %2391 = vadd.xlane.f32.xlu0 %v2360
        %v2392 = vpop.xlane.xlu0 %2391
        %2393 = vadd.xlane.f32.xlu0 %v2362
        %v2394 = vpop.xlane.xlu0 %2393
        %v2395 = vrcp.pop %v2364
        %v2396 = vmul.f32 1.0, %v2395
        %v2397 = vrcp.pop %v2366
        %v2398 = vmul.f32 1.0, %v2397
        %v2399 = vrcp.pop %v2368
        %v2400 = vmul.f32 1.0, %v2399
        %v2401 = vrcp.pop %v2370
        %v2402 = vmul.f32 1.0, %v2401
        %v2403 = vrcp.pop %v2372
        %v2404 = vmul.f32 1.0, %v2403
        %v2405 = vrcp.pop %v2374
        %v2406 = vmul.f32 1.0, %v2405
        %v2407 = vrcp.pop %v2376
        %v2408 = vmul.f32 1.0, %v2407
        %v2409 = vrcp.pop %v2378
        %v2410 = vmul.f32 1.0, %v2409
        %v2411 = vrcp.pop %v2380
        %v2412 = vmul.f32 1.0, %v2411
        %v2413 = vrcp.pop %v2382
        %v2414 = vmul.f32 1.0, %v2413
        %v2415 = vrcp.pop %v2384
        %v2416 = vmul.f32 1.0, %v2415
        %v2417 = vrcp.pop %v2386
        %v2418 = vmul.f32 1.0, %v2417
        %v2419 = vrcp.pop %v2388
        %v2420 = vmul.f32 1.0, %v2419
        %v2421 = vrcp.pop %v2390
        %v2422 = vmul.f32 1.0, %v2421
        %v2423 = vrcp.pop %v2392
        %v2424 = vmul.f32 1.0, %v2423
        %v2425 = vrcp.pop %v2394
        %v2426 = vmul.f32 1.0, %v2425
        %v2427 = vmul.f32 %v2332, %v2396
        %v2428 = vmul.f32 %v2334, %v2398
        %v2429 = vmul.f32 %v2336, %v2400
        %v2430 = vmul.f32 %v2338, %v2402
        %v2431 = vmul.f32 %v2340, %v2404
        %v2432 = vmul.f32 %v2342, %v2406
        %v2433 = vmul.f32 %v2344, %v2408
        %v2434 = vmul.f32 %v2346, %v2410
        %v2435 = vmul.f32 %v2348, %v2412
        %v2436 = vmul.f32 %v2350, %v2414
        %v2437 = vmul.f32 %v2352, %v2416
        %v2438 = vmul.f32 %v2354, %v2418
        %v2439 = vmul.f32 %v2356, %v2420
        %v2440 = vmul.f32 %v2358, %v2422
        %v2441 = vmul.f32 %v2360, %v2424
        %v2442 = vmul.f32 %v2362, %v2426
        %v2443 = vpack.c.bf16 %v2428, %v2427
        %v2444 = vpack.c.bf16 %v2430, %v2429
        %v2445 = vpack.c.bf16 %v2432, %v2431
        %v2446 = vpack.c.bf16 %v2434, %v2433
        %v2447 = vpack.c.bf16 %v2436, %v2435
        %v2448 = vpack.c.bf16 %v2438, %v2437
        %v2449 = vpack.c.bf16 %v2440, %v2439
        %v2450 = vpack.c.bf16 %v2442, %v2441
        %2451 = vrot.lane.b32.xlu0 %v1159, 80
        %v2452 = vpop.permute.xlu0 %2451
        %2453 = vrot.lane.b32.xlu0 %v1160, 80
        %v2454 = vpop.permute.xlu0 %2453
        %2455 = vrot.lane.b32.xlu0 %v1161, 80
        %v2456 = vpop.permute.xlu0 %2455
        %2457 = vrot.lane.b32.xlu0 %v1162, 80
        %v2458 = vpop.permute.xlu0 %2457
        %2459 = vrot.lane.b32.xlu0 %v1163, 80
        %v2460 = vpop.permute.xlu0 %2459
        %2461 = vrot.lane.b32.xlu0 %v1164, 80
        %v2462 = vpop.permute.xlu0 %2461
        %2463 = vrot.lane.b32.xlu0 %v1165, 80
        %v2464 = vpop.permute.xlu0 %2463
        %2465 = vrot.lane.b32.xlu0 %v1166, 80
        %v2466 = vpop.permute.xlu0 %2465
        %2475 = vmatprep.subr.bf16.mxu0 0
        %2476 = vmatpush1.bf16.msra.mxu0 %v2452
        %2477 = vmatprep.subr.bf16.mxu0 0
        %2478 = vmatpush1.bf16.msra.mxu0 %v2454
        %2479 = vmatprep.subr.bf16.mxu0 0
        %2480 = vmatpush1.bf16.msra.mxu0 %v2456
        %2481 = vmatprep.subr.bf16.mxu0 0
        %2482 = vmatpush1.bf16.msra.mxu0 %v2458
        %2483 = vmatprep.subr.bf16.mxu0 0
        %2484 = vmatpush1.bf16.msra.mxu0 %v2460
        %2485 = vmatprep.subr.bf16.mxu0 0
        %2486 = vmatpush1.bf16.msra.mxu0 %v2462
        %2487 = vmatprep.subr.bf16.mxu0 0
        %2488 = vmatpush1.bf16.msra.mxu0 %v2464
        %2489 = vmatprep.subr.bf16.mxu0 0
        %2490 = vmatpush1.bf16.msra.mxu0 %v2466
        %2491 = vmatprep.subr.bf16.mxu0 0
        %2492 = vmatpush1.bf16.msra.mxu0 0
        %2493 = vmatprep.subr.bf16.mxu0 0
        %2494 = vmatpush1.bf16.msra.mxu0 0
        %2495 = vmatprep.subr.bf16.mxu0 0
        %2496 = vmatpush1.bf16.msra.mxu0 0
        %2497 = vmatprep.subr.bf16.mxu0 0
        %2498 = vmatpush1.bf16.msra.mxu0 0
        %2499 = vmatprep.subr.bf16.mxu0 0
        %2500 = vmatpush1.bf16.msra.mxu0 0
        %2501 = vmatprep.subr.bf16.mxu0 0
        %2502 = vmatpush1.bf16.msra.mxu0 0
        %2503 = vmatprep.subr.bf16.mxu0 0
        %2504 = vmatpush1.bf16.msra.mxu0 0
        %2505 = vmatprep.subr.bf16.mxu0 0
        %2506 = vmatpush1.bf16.msra.mxu0 0
        %2507 = vmatprep.mubr.bf16.mxu0 0
        %2508 = vmatmul.mubr.bf16.gmra.mrb[0].mxu0 %v2443
        %v2509 = vpop.f32.mrb[0].mxu0
        %v2510 = vadd.f32 0.0, %v2509
        %v2511 = vpop.f32.mrb[0].mxu0
        %v2512 = vpop.f32.mrb[0].mxu0
        %v2513 = vadd.f32 0.0, %v2512
        %v2514 = vpop.f32.mrb[0].mxu0
        %2515 = vmatprep.mubr.bf16.mxu0 0
        %2516 = vmatmul.mubr.bf16.gmra.mrb[0].mxu0 %v2444
        %v2517 = vpop.f32.mrb[0].mxu0
        %v2518 = vadd.f32 0.0, %v2517
        %v2519 = vpop.f32.mrb[0].mxu0
        %v2520 = vpop.f32.mrb[0].mxu0
        %v2521 = vadd.f32 0.0, %v2520
        %v2522 = vpop.f32.mrb[0].mxu0
        %2523 = vmatprep.mubr.bf16.mxu0 0
        %2524 = vmatmul.mubr.bf16.gmra.mrb[0].mxu0 %v2445
        %v2525 = vpop.f32.mrb[0].mxu0
        %v2526 = vadd.f32 0.0, %v2525
        %v2527 = vpop.f32.mrb[0].mxu0
        %v2528 = vpop.f32.mrb[0].mxu0
        %v2529 = vadd.f32 0.0, %v2528
        %v2530 = vpop.f32.mrb[0].mxu0
        %2531 = vmatprep.mubr.bf16.mxu0 0
        %2532 = vmatmul.mubr.bf16.gmra.mrb[0].mxu0 %v2446
        %v2533 = vpop.f32.mrb[0].mxu0
        %v2534 = vadd.f32 0.0, %v2533
        %v2535 = vpop.f32.mrb[0].mxu0
        %v2536 = vpop.f32.mrb[0].mxu0
        %v2537 = vadd.f32 0.0, %v2536
        %v2538 = vpop.f32.mrb[0].mxu0
        %2539 = vmatprep.mubr.bf16.mxu0 0
        %2540 = vmatmul.mubr.bf16.gmra.mrb[0].mxu0 %v2447
        %v2541 = vpop.f32.mrb[0].mxu0
        %v2542 = vadd.f32 0.0, %v2541
        %v2543 = vpop.f32.mrb[0].mxu0
        %v2544 = vpop.f32.mrb[0].mxu0
        %v2545 = vadd.f32 0.0, %v2544
        %v2546 = vpop.f32.mrb[0].mxu0
        %2547 = vmatprep.mubr.bf16.mxu0 0
        %2548 = vmatmul.mubr.bf16.gmra.mrb[0].mxu0 %v2448
        %v2549 = vpop.f32.mrb[0].mxu0
        %v2550 = vadd.f32 0.0, %v2549
        %v2551 = vpop.f32.mrb[0].mxu0
        %v2552 = vpop.f32.mrb[0].mxu0
        %v2553 = vadd.f32 0.0, %v2552
        %v2554 = vpop.f32.mrb[0].mxu0
        %2555 = vmatprep.mubr.bf16.mxu0 0
        %2556 = vmatmul.mubr.bf16.gmra.mrb[0].mxu0 %v2449
        %v2557 = vpop.f32.mrb[0].mxu0
        %v2558 = vadd.f32 0.0, %v2557
        %v2559 = vpop.f32.mrb[0].mxu0
        %v2560 = vpop.f32.mrb[0].mxu0
        %v2561 = vadd.f32 0.0, %v2560
        %v2562 = vpop.f32.mrb[0].mxu0
        %2563 = vmatprep.mubr.bf16.mxu0 0
        %2564 = vmatmul.mubr.bf16.gmra.mrb[0].mxu0 %v2450
        %v2565 = vpop.f32.mrb[0].mxu0
        %v2566 = vadd.f32 0.0, %v2565
        %v2567 = vpop.f32.mrb[0].mxu0
        %v2568 = vpop.f32.mrb[0].mxu0
        %v2569 = vadd.f32 0.0, %v2568
        %v2570 = vpop.f32.mrb[0].mxu0
        %2571 = vdwg.mxu0
        %v2572 = vadd.f32 %v2090, %v2427
        %v2573 = vadd.f32 %v2091, %v2428
        %v2574 = vadd.f32 %v2092, %v2429
        %v2575 = vadd.f32 %v2093, %v2430
        %v2576 = vadd.f32 %v2094, %v2431
        %v2577 = vadd.f32 %v2095, %v2432
        %v2578 = vadd.f32 %v2096, %v2433
        %v2579 = vadd.f32 %v2097, %v2434
        %v2580 = vadd.f32 %v2098, %v2435
        %v2581 = vadd.f32 %v2099, %v2436
        %v2582 = vadd.f32 %v2100, %v2437
        %v2583 = vadd.f32 %v2101, %v2438
        %v2584 = vadd.f32 %v2102, %v2439
        %v2585 = vadd.f32 %v2103, %v2440
        %v2586 = vadd.f32 %v2104, %v2441
        %v2587 = vadd.f32 %v2105, %v2442
        %2588 = vrot.lane.b32.xlu0 %v1148, 104
        %v2589 = vpop.permute.xlu0 %2588
        %2590 = vrot.lane.b32.xlu0 %v1149, 104
        %v2591 = vpop.permute.xlu0 %2590
        %2592 = vrot.lane.b32.xlu0 %v1150, 104
        %v2593 = vpop.permute.xlu0 %2592
        %2594 = vrot.lane.b32.xlu0 %v1151, 104
        %v2595 = vpop.permute.xlu0 %2594
        %2596 = vrot.lane.b32.xlu0 %v1152, 104
        %v2597 = vpop.permute.xlu0 %2596
        %2598 = vrot.lane.b32.xlu0 %v1153, 104
        %v2599 = vpop.permute.xlu0 %2598
        %2600 = vrot.lane.b32.xlu0 %v1154, 104
        %v2601 = vpop.permute.xlu0 %2600
        %2602 = vrot.lane.b32.xlu0 %v1155, 104
        %v2603 = vpop.permute.xlu0 %2602
        %2604 = vrot.lane.b32.xlu0 %v1159, 104
        %v2605 = vpop.permute.xlu0 %2604
        %2606 = vrot.lane.b32.xlu0 %v1160, 104
        %v2607 = vpop.permute.xlu0 %2606
        %2608 = vrot.lane.b32.xlu0 %v1161, 104
        %v2609 = vpop.permute.xlu0 %2608
        %2610 = vrot.lane.b32.xlu0 %v1162, 104
        %v2611 = vpop.permute.xlu0 %2610
        %2612 = vrot.lane.b32.xlu0 %v1163, 104
        %v2613 = vpop.permute.xlu0 %2612
        %2614 = vrot.lane.b32.xlu0 %v1164, 104
        %v2615 = vpop.permute.xlu0 %2614
        %2616 = vrot.lane.b32.xlu0 %v1165, 104
        %v2617 = vpop.permute.xlu0 %2616
        %2618 = vrot.lane.b32.xlu0 %v1166, 104
        %v2619 = vpop.permute.xlu0 %2618
        %v2621 = vsel %vm1173, %v2589, 0
        %v2624 = vsel %vm1173, %v2591, 0
        %v2627 = vsel %vm1173, %v2593, 0
        %v2630 = vsel %vm1173, %v2595, 0
        %v2633 = vsel %vm1173, %v2597, 0
        %v2636 = vsel %vm1173, %v2599, 0
        %v2639 = vsel %vm1173, %v2601, 0
        %v2642 = vsel %vm1173, %v2603, 0
        %v2645 = vsel %vm1173, %v2605, 0
        %v2648 = vsel %vm1173, %v2607, 0
        %v2651 = vsel %vm1173, %v2609, 0
        %v2654 = vsel %vm1173, %v2611, 0
        %v2657 = vsel %vm1173, %v2613, 0
        %v2660 = vsel %vm1173, %v2615, 0
        %v2663 = vsel %vm1173, %v2617, 0
        %v2666 = vsel %vm1173, %v2619, 0
        %2668 = vmatprep.subr.bf16.mxu0 0
        %2669 = vmatpush1.bf16.xpose.msra.mxu0 %v2645
        %2670 = vmatprep.subr.bf16.mxu0 0
        %2671 = vmatpush1.bf16.xpose.msra.mxu0 %v2648
        %2672 = vmatprep.subr.bf16.mxu0 0
        %2673 = vmatpush1.bf16.xpose.msra.mxu0 %v2651
        %2674 = vmatprep.subr.bf16.mxu0 0
        %2675 = vmatpush1.bf16.xpose.msra.mxu0 %v2654
        %2676 = vmatprep.subr.bf16.mxu0 0
        %2677 = vmatpush1.bf16.xpose.msra.mxu0 %v2657
        %2678 = vmatprep.subr.bf16.mxu0 0
        %2679 = vmatpush1.bf16.xpose.msra.mxu0 %v2660
        %2680 = vmatprep.subr.bf16.mxu0 0
        %2681 = vmatpush1.bf16.xpose.msra.mxu0 %v2663
        %2682 = vmatprep.subr.bf16.mxu0 0
        %2683 = vmatpush1.bf16.xpose.msra.mxu0 %v2666
        %2684 = vmatprep.subr.bf16.mxu0 0
        %2685 = vmatpush1.bf16.xpose.msra.mxu0 0
        %2686 = vmatprep.subr.bf16.mxu0 0
        %2687 = vmatpush1.bf16.xpose.msra.mxu0 0
        %2688 = vmatprep.subr.bf16.mxu0 0
        %2689 = vmatpush1.bf16.xpose.msra.mxu0 0
        %2690 = vmatprep.subr.bf16.mxu0 0
        %2691 = vmatpush1.bf16.xpose.msra.mxu0 0
        %2692 = vmatprep.subr.bf16.mxu0 0
        %2693 = vmatpush1.bf16.xpose.msra.mxu0 0
        %2694 = vmatprep.subr.bf16.mxu0 0
        %2695 = vmatpush1.bf16.xpose.msra.mxu0 0
        %2696 = vmatprep.subr.bf16.mxu0 0
        %2697 = vmatpush1.bf16.xpose.msra.mxu0 0
        %2698 = vmatprep.subr.bf16.mxu0 0
        %2699 = vmatpush1.bf16.xpose.msra.mxu0 0
        %2700 = vmatprep.mubr.bf16.mxu0 0
        %2701 = vmatmul.mubr.bf16.gmra.mrb[0].mxu0 %v2621
        %v2702 = vpop.f32.mrb[0].mxu0
        %v2703 = vadd.f32 %v1171, %v2702
        %v2704 = vpop.f32.mrb[0].mxu0
        %v2705 = vpop.f32.mrb[0].mxu0
        %v2706 = vadd.f32 %v1171, %v2705
        %v2707 = vpop.f32.mrb[0].mxu0
        %2708 = vmatprep.mubr.bf16.mxu0 0
        %2709 = vmatmul.mubr.bf16.gmra.mrb[0].mxu0 %v2624
        %v2710 = vpop.f32.mrb[0].mxu0
        %v2711 = vadd.f32 %v1171, %v2710
        %v2712 = vpop.f32.mrb[0].mxu0
        %v2713 = vpop.f32.mrb[0].mxu0
        %v2714 = vadd.f32 %v1171, %v2713
        %v2715 = vpop.f32.mrb[0].mxu0
        %2716 = vmatprep.mubr.bf16.mxu0 0
        %2717 = vmatmul.mubr.bf16.gmra.mrb[0].mxu0 %v2627
        %v2718 = vpop.f32.mrb[0].mxu0
        %v2719 = vadd.f32 %v1171, %v2718
        %v2720 = vpop.f32.mrb[0].mxu0
        %v2721 = vpop.f32.mrb[0].mxu0
        %v2722 = vadd.f32 %v1171, %v2721
        %v2723 = vpop.f32.mrb[0].mxu0
        %2724 = vmatprep.mubr.bf16.mxu0 0
        %2725 = vmatmul.mubr.bf16.gmra.mrb[0].mxu0 %v2630
        %v2726 = vpop.f32.mrb[0].mxu0
        %v2727 = vadd.f32 %v1171, %v2726
        %v2728 = vpop.f32.mrb[0].mxu0
        %v2729 = vpop.f32.mrb[0].mxu0
        %v2730 = vadd.f32 %v1171, %v2729
        %v2731 = vpop.f32.mrb[0].mxu0
        %2732 = vmatprep.mubr.bf16.mxu0 0
        %2733 = vmatmul.mubr.bf16.gmra.mrb[0].mxu0 %v2633
        %v2734 = vpop.f32.mrb[0].mxu0
        %v2735 = vadd.f32 %v1171, %v2734
        %v2736 = vpop.f32.mrb[0].mxu0
        %v2737 = vpop.f32.mrb[0].mxu0
        %v2738 = vadd.f32 %v1171, %v2737
        %v2739 = vpop.f32.mrb[0].mxu0
        %2740 = vmatprep.mubr.bf16.mxu0 0
        %2741 = vmatmul.mubr.bf16.gmra.mrb[0].mxu0 %v2636
        %v2742 = vpop.f32.mrb[0].mxu0
        %v2743 = vadd.f32 %v1171, %v2742
        %v2744 = vpop.f32.mrb[0].mxu0
        %v2745 = vpop.f32.mrb[0].mxu0
        %v2746 = vadd.f32 %v1171, %v2745
        %v2747 = vpop.f32.mrb[0].mxu0
        %2748 = vmatprep.mubr.bf16.mxu0 0
        %2749 = vmatmul.mubr.bf16.gmra.mrb[0].mxu0 %v2639
        %v2750 = vpop.f32.mrb[0].mxu0
        %v2751 = vadd.f32 %v1171, %v2750
        %v2752 = vpop.f32.mrb[0].mxu0
        %v2753 = vpop.f32.mrb[0].mxu0
        %v2754 = vadd.f32 %v1171, %v2753
        %v2755 = vpop.f32.mrb[0].mxu0
        %2756 = vmatprep.mubr.bf16.mxu0 0
        %2757 = vmatmul.mubr.bf16.gmra.mrb[0].mxu0 %v2642
        %v2758 = vpop.f32.mrb[0].mxu0
        %v2759 = vadd.f32 %v1171, %v2758
        %v2760 = vpop.f32.mrb[0].mxu0
        %v2761 = vpop.f32.mrb[0].mxu0
        %v2762 = vadd.f32 %v1171, %v2761
        %v2763 = vpop.f32.mrb[0].mxu0
        %2764 = vdwg.mxu0
        %2765 = vmax.xlane.f32.xlu0 %v2703
        %v2766 = vpop.xlane.xlu0 %2765
        %2767 = vmax.xlane.f32.xlu0 %v2706
        %v2768 = vpop.xlane.xlu0 %2767
        %2769 = vmax.xlane.f32.xlu0 %v2711
        %v2770 = vpop.xlane.xlu0 %2769
        %2771 = vmax.xlane.f32.xlu0 %v2714
        %v2772 = vpop.xlane.xlu0 %2771
        %2773 = vmax.xlane.f32.xlu0 %v2719
        %v2774 = vpop.xlane.xlu0 %2773
        %2775 = vmax.xlane.f32.xlu0 %v2722
        %v2776 = vpop.xlane.xlu0 %2775
        %2777 = vmax.xlane.f32.xlu0 %v2727
        %v2778 = vpop.xlane.xlu0 %2777
        %2779 = vmax.xlane.f32.xlu0 %v2730
        %v2780 = vpop.xlane.xlu0 %2779
        %2781 = vmax.xlane.f32.xlu0 %v2735
        %v2782 = vpop.xlane.xlu0 %2781
        %2783 = vmax.xlane.f32.xlu0 %v2738
        %v2784 = vpop.xlane.xlu0 %2783
        %2785 = vmax.xlane.f32.xlu0 %v2743
        %v2786 = vpop.xlane.xlu0 %2785
        %2787 = vmax.xlane.f32.xlu0 %v2746
        %v2788 = vpop.xlane.xlu0 %2787
        %2789 = vmax.xlane.f32.xlu0 %v2751
        %v2790 = vpop.xlane.xlu0 %2789
        %2791 = vmax.xlane.f32.xlu0 %v2754
        %v2792 = vpop.xlane.xlu0 %2791
        %2793 = vmax.xlane.f32.xlu0 %v2759
        %v2794 = vpop.xlane.xlu0 %2793
        %2795 = vmax.xlane.f32.xlu0 %v2762
        %v2796 = vpop.xlane.xlu0 %2795
        %v2797 = vsub.f32 %v2703, %v2766
        %v2798 = vsub.f32 %v2706, %v2768
        %v2799 = vsub.f32 %v2711, %v2770
        %v2800 = vsub.f32 %v2714, %v2772
        %v2801 = vsub.f32 %v2719, %v2774
        %v2802 = vsub.f32 %v2722, %v2776
        %v2803 = vsub.f32 %v2727, %v2778
        %v2804 = vsub.f32 %v2730, %v2780
        %v2805 = vsub.f32 %v2735, %v2782
        %v2806 = vsub.f32 %v2738, %v2784
        %v2807 = vsub.f32 %v2743, %v2786
        %v2808 = vsub.f32 %v2746, %v2788
        %v2809 = vsub.f32 %v2751, %v2790
        %v2810 = vsub.f32 %v2754, %v2792
        %v2811 = vsub.f32 %v2759, %v2794
        %v2812 = vsub.f32 %v2762, %v2796
        %v2813 = vmul.f32 %v2797, 1.442695
        %v2814 = vpow.pop %v2813
        %v2815 = vmul.f32 %v2798, 1.442695
        %v2816 = vpow.pop %v2815
        %v2817 = vmul.f32 %v2799, 1.442695
        %v2818 = vpow.pop %v2817
        %v2819 = vmul.f32 %v2800, 1.442695
        %v2820 = vpow.pop %v2819
        %v2821 = vmul.f32 %v2801, 1.442695
        %v2822 = vpow.pop %v2821
        %v2823 = vmul.f32 %v2802, 1.442695
        %v2824 = vpow.pop %v2823
        %v2825 = vmul.f32 %v2803, 1.442695
        %v2826 = vpow.pop %v2825
        %v2827 = vmul.f32 %v2804, 1.442695
        %v2828 = vpow.pop %v2827
        %v2829 = vmul.f32 %v2805, 1.442695
        %v2830 = vpow.pop %v2829
        %v2831 = vmul.f32 %v2806, 1.442695
        %v2832 = vpow.pop %v2831
        %v2833 = vmul.f32 %v2807, 1.442695
        %v2834 = vpow.pop %v2833
        %v2835 = vmul.f32 %v2808, 1.442695
        %v2836 = vpow.pop %v2835
        %v2837 = vmul.f32 %v2809, 1.442695
        %v2838 = vpow.pop %v2837
        %v2839 = vmul.f32 %v2810, 1.442695
        %v2840 = vpow.pop %v2839
        %v2841 = vmul.f32 %v2811, 1.442695
        %v2842 = vpow.pop %v2841
        %v2843 = vmul.f32 %v2812, 1.442695
        %v2844 = vpow.pop %v2843
        %2845 = vadd.xlane.f32.xlu0 %v2814
        %v2846 = vpop.xlane.xlu0 %2845
        %2847 = vadd.xlane.f32.xlu0 %v2816
        %v2848 = vpop.xlane.xlu0 %2847
        %2849 = vadd.xlane.f32.xlu0 %v2818
        %v2850 = vpop.xlane.xlu0 %2849
        %2851 = vadd.xlane.f32.xlu0 %v2820
        %v2852 = vpop.xlane.xlu0 %2851
        %2853 = vadd.xlane.f32.xlu0 %v2822
        %v2854 = vpop.xlane.xlu0 %2853
        %2855 = vadd.xlane.f32.xlu0 %v2824
        %v2856 = vpop.xlane.xlu0 %2855
        %2857 = vadd.xlane.f32.xlu0 %v2826
        %v2858 = vpop.xlane.xlu0 %2857
        %2859 = vadd.xlane.f32.xlu0 %v2828
        %v2860 = vpop.xlane.xlu0 %2859
        %2861 = vadd.xlane.f32.xlu0 %v2830
        %v2862 = vpop.xlane.xlu0 %2861
        %2863 = vadd.xlane.f32.xlu0 %v2832
        %v2864 = vpop.xlane.xlu0 %2863
        %2865 = vadd.xlane.f32.xlu0 %v2834
        %v2866 = vpop.xlane.xlu0 %2865
        %2867 = vadd.xlane.f32.xlu0 %v2836
        %v2868 = vpop.xlane.xlu0 %2867
        %2869 = vadd.xlane.f32.xlu0 %v2838
        %v2870 = vpop.xlane.xlu0 %2869
        %2871 = vadd.xlane.f32.xlu0 %v2840
        %v2872 = vpop.xlane.xlu0 %2871
        %2873 = vadd.xlane.f32.xlu0 %v2842
        %v2874 = vpop.xlane.xlu0 %2873
        %2875 = vadd.xlane.f32.xlu0 %v2844
        %v2876 = vpop.xlane.xlu0 %2875
        %v2877 = vrcp.pop %v2846
        %v2878 = vmul.f32 1.0, %v2877
        %v2879 = vrcp.pop %v2848
        %v2880 = vmul.f32 1.0, %v2879
        %v2881 = vrcp.pop %v2850
        %v2882 = vmul.f32 1.0, %v2881
        %v2883 = vrcp.pop %v2852
        %v2884 = vmul.f32 1.0, %v2883
        %v2885 = vrcp.pop %v2854
        %v2886 = vmul.f32 1.0, %v2885
        %v2887 = vrcp.pop %v2856
        %v2888 = vmul.f32 1.0, %v2887
        %v2889 = vrcp.pop %v2858
        %v2890 = vmul.f32 1.0, %v2889
        %v2891 = vrcp.pop %v2860
        %v2892 = vmul.f32 1.0, %v2891
        %v2893 = vrcp.pop %v2862
        %v2894 = vmul.f32 1.0, %v2893
        %v2895 = vrcp.pop %v2864
        %v2896 = vmul.f32 1.0, %v2895
        %v2897 = vrcp.pop %v2866
        %v2898 = vmul.f32 1.0, %v2897
        %v2899 = vrcp.pop %v2868
        %v2900 = vmul.f32 1.0, %v2899
        %v2901 = vrcp.pop %v2870
        %v2902 = vmul.f32 1.0, %v2901
        %v2903 = vrcp.pop %v2872
        %v2904 = vmul.f32 1.0, %v2903
        %v2905 = vrcp.pop %v2874
        %v2906 = vmul.f32 1.0, %v2905
        %v2907 = vrcp.pop %v2876
        %v2908 = vmul.f32 1.0, %v2907
        %v2909 = vmul.f32 %v2814, %v2878
        %v2910 = vmul.f32 %v2816, %v2880
        %v2911 = vmul.f32 %v2818, %v2882
        %v2912 = vmul.f32 %v2820, %v2884
        %v2913 = vmul.f32 %v2822, %v2886
        %v2914 = vmul.f32 %v2824, %v2888
        %v2915 = vmul.f32 %v2826, %v2890
        %v2916 = vmul.f32 %v2828, %v2892
        %v2917 = vmul.f32 %v2830, %v2894
        %v2918 = vmul.f32 %v2832, %v2896
        %v2919 = vmul.f32 %v2834, %v2898
        %v2920 = vmul.f32 %v2836, %v2900
        %v2921 = vmul.f32 %v2838, %v2902
        %v2922 = vmul.f32 %v2840, %v2904
        %v2923 = vmul.f32 %v2842, %v2906
        %v2924 = vmul.f32 %v2844, %v2908
        %v2925 = vpack.c.bf16 %v2910, %v2909
        %v2926 = vpack.c.bf16 %v2912, %v2911
        %v2927 = vpack.c.bf16 %v2914, %v2913
        %v2928 = vpack.c.bf16 %v2916, %v2915
        %v2929 = vpack.c.bf16 %v2918, %v2917
        %v2930 = vpack.c.bf16 %v2920, %v2919
        %v2931 = vpack.c.bf16 %v2922, %v2921
        %v2932 = vpack.c.bf16 %v2924, %v2923
        %2933 = vrot.lane.b32.xlu0 %v1159, 72
        %v2934 = vpop.permute.xlu0 %2933
        %2935 = vrot.lane.b32.xlu0 %v1160, 72
        %v2936 = vpop.permute.xlu0 %2935
        %2937 = vrot.lane.b32.xlu0 %v1161, 72
        %v2938 = vpop.permute.xlu0 %2937
        %2939 = vrot.lane.b32.xlu0 %v1162, 72
        %v2940 = vpop.permute.xlu0 %2939
        %2941 = vrot.lane.b32.xlu0 %v1163, 72
        %v2942 = vpop.permute.xlu0 %2941
        %2943 = vrot.lane.b32.xlu0 %v1164, 72
        %v2944 = vpop.permute.xlu0 %2943
        %2945 = vrot.lane.b32.xlu0 %v1165, 72
        %v2946 = vpop.permute.xlu0 %2945
        %2947 = vrot.lane.b32.xlu0 %v1166, 72
        %v2948 = vpop.permute.xlu0 %2947
        %2957 = vmatprep.subr.bf16.mxu0 0
        %2958 = vmatpush1.bf16.msra.mxu0 %v2934
        %2959 = vmatprep.subr.bf16.mxu0 0
        %2960 = vmatpush1.bf16.msra.mxu0 %v2936
        %2961 = vmatprep.subr.bf16.mxu0 0
        %2962 = vmatpush1.bf16.msra.mxu0 %v2938
        %2963 = vmatprep.subr.bf16.mxu0 0
        %2964 = vmatpush1.bf16.msra.mxu0 %v2940
        %2965 = vmatprep.subr.bf16.mxu0 0
        %2966 = vmatpush1.bf16.msra.mxu0 %v2942
        %2967 = vmatprep.subr.bf16.mxu0 0
        %2968 = vmatpush1.bf16.msra.mxu0 %v2944
        %2969 = vmatprep.subr.bf16.mxu0 0
        %2970 = vmatpush1.bf16.msra.mxu0 %v2946
        %2971 = vmatprep.subr.bf16.mxu0 0
        %2972 = vmatpush1.bf16.msra.mxu0 %v2948
        %2973 = vmatprep.subr.bf16.mxu0 0
        %2974 = vmatpush1.bf16.msra.mxu0 0
        %2975 = vmatprep.subr.bf16.mxu0 0
        %2976 = vmatpush1.bf16.msra.mxu0 0
        %2977 = vmatprep.subr.bf16.mxu0 0
        %2978 = vmatpush1.bf16.msra.mxu0 0
        %2979 = vmatprep.subr.bf16.mxu0 0
        %2980 = vmatpush1.bf16.msra.mxu0 0
        %2981 = vmatprep.subr.bf16.mxu0 0
        %2982 = vmatpush1.bf16.msra.mxu0 0
        %2983 = vmatprep.subr.bf16.mxu0 0
        %2984 = vmatpush1.bf16.msra.mxu0 0
        %2985 = vmatprep.subr.bf16.mxu0 0
        %2986 = vmatpush1.bf16.msra.mxu0 0
        %2987 = vmatprep.subr.bf16.mxu0 0
        %2988 = vmatpush1.bf16.msra.mxu0 0
        %2989 = vmatprep.mubr.bf16.mxu0 0
        %2990 = vmatmul.mubr.bf16.gmra.mrb[0].mxu0 %v2925
        %v2991 = vpop.f32.mrb[0].mxu0
        %v2992 = vadd.f32 0.0, %v2991
        %v2993 = vpop.f32.mrb[0].mxu0
        %v2994 = vpop.f32.mrb[0].mxu0
        %v2995 = vadd.f32 0.0, %v2994
        %v2996 = vpop.f32.mrb[0].mxu0
        %2997 = vmatprep.mubr.bf16.mxu0 0
        %2998 = vmatmul.mubr.bf16.gmra.mrb[0].mxu0 %v2926
        %v2999 = vpop.f32.mrb[0].mxu0
        %v3000 = vadd.f32 0.0, %v2999
        %v3001 = vpop.f32.mrb[0].mxu0
        %v3002 = vpop.f32.mrb[0].mxu0
        %v3003 = vadd.f32 0.0, %v3002
        %v3004 = vpop.f32.mrb[0].mxu0
        %3005 = vmatprep.mubr.bf16.mxu0 0
        %3006 = vmatmul.mubr.bf16.gmra.mrb[0].mxu0 %v2927
        %v3007 = vpop.f32.mrb[0].mxu0
        %v3008 = vadd.f32 0.0, %v3007
        %v3009 = vpop.f32.mrb[0].mxu0
        %v3010 = vpop.f32.mrb[0].mxu0
        %v3011 = vadd.f32 0.0, %v3010
        %v3012 = vpop.f32.mrb[0].mxu0
        %3013 = vmatprep.mubr.bf16.mxu0 0
        %3014 = vmatmul.mubr.bf16.gmra.mrb[0].mxu0 %v2928
        %v3015 = vpop.f32.mrb[0].mxu0
        %v3016 = vadd.f32 0.0, %v3015
        %v3017 = vpop.f32.mrb[0].mxu0
        %v3018 = vpop.f32.mrb[0].mxu0
        %v3019 = vadd.f32 0.0, %v3018
        %v3020 = vpop.f32.mrb[0].mxu0
        %3021 = vmatprep.mubr.bf16.mxu0 0
        %3022 = vmatmul.mubr.bf16.gmra.mrb[0].mxu0 %v2929
        %v3023 = vpop.f32.mrb[0].mxu0
        %v3024 = vadd.f32 0.0, %v3023
        %v3025 = vpop.f32.mrb[0].mxu0
        %v3026 = vpop.f32.mrb[0].mxu0
        %v3027 = vadd.f32 0.0, %v3026
        %v3028 = vpop.f32.mrb[0].mxu0
        %3029 = vmatprep.mubr.bf16.mxu0 0
        %3030 = vmatmul.mubr.bf16.gmra.mrb[0].mxu0 %v2930
        %v3031 = vpop.f32.mrb[0].mxu0
        %v3032 = vadd.f32 0.0, %v3031
        %v3033 = vpop.f32.mrb[0].mxu0
        %v3034 = vpop.f32.mrb[0].mxu0
        %v3035 = vadd.f32 0.0, %v3034
        %v3036 = vpop.f32.mrb[0].mxu0
        %3037 = vmatprep.mubr.bf16.mxu0 0
        %3038 = vmatmul.mubr.bf16.gmra.mrb[0].mxu0 %v2931
        %v3039 = vpop.f32.mrb[0].mxu0
        %v3040 = vadd.f32 0.0, %v3039
        %v3041 = vpop.f32.mrb[0].mxu0
        %v3042 = vpop.f32.mrb[0].mxu0
        %v3043 = vadd.f32 0.0, %v3042
        %v3044 = vpop.f32.mrb[0].mxu0
        %3045 = vmatprep.mubr.bf16.mxu0 0
        %3046 = vmatmul.mubr.bf16.gmra.mrb[0].mxu0 %v2932
        %v3047 = vpop.f32.mrb[0].mxu0
        %v3048 = vadd.f32 0.0, %v3047
        %v3049 = vpop.f32.mrb[0].mxu0
        %v3050 = vpop.f32.mrb[0].mxu0
        %v3051 = vadd.f32 0.0, %v3050
        %v3052 = vpop.f32.mrb[0].mxu0
        %3053 = vdwg.mxu0
        %v3054 = vadd.f32 %v2572, %v2909
        %v3055 = vadd.f32 %v2573, %v2910
        %v3056 = vadd.f32 %v2574, %v2911
        %v3057 = vadd.f32 %v2575, %v2912
        %v3058 = vadd.f32 %v2576, %v2913
        %v3059 = vadd.f32 %v2577, %v2914
        %v3060 = vadd.f32 %v2578, %v2915
        %v3061 = vadd.f32 %v2579, %v2916
        %v3062 = vadd.f32 %v2580, %v2917
        %v3063 = vadd.f32 %v2581, %v2918
        %v3064 = vadd.f32 %v2582, %v2919
        %v3065 = vadd.f32 %v2583, %v2920
        %v3066 = vadd.f32 %v2584, %v2921
        %v3067 = vadd.f32 %v2585, %v2922
        %v3068 = vadd.f32 %v2586, %v2923
        %v3069 = vadd.f32 %v2587, %v2924
        %3086 = vrot.lane.b32.xlu0 %v2028, 8
        %v3087 = vpop.permute.xlu0 %3086
        %3088 = vrot.lane.b32.xlu0 %v2031, 8
        %v3089 = vpop.permute.xlu0 %3088
        %3090 = vrot.lane.b32.xlu0 %v2036, 8
        %v3091 = vpop.permute.xlu0 %3090
        %3092 = vrot.lane.b32.xlu0 %v2039, 8
        %v3093 = vpop.permute.xlu0 %3092
        %3094 = vrot.lane.b32.xlu0 %v2044, 8
        %v3095 = vpop.permute.xlu0 %3094
        %3096 = vrot.lane.b32.xlu0 %v2047, 8
        %v3097 = vpop.permute.xlu0 %3096
        %3098 = vrot.lane.b32.xlu0 %v2052, 8
        %v3099 = vpop.permute.xlu0 %3098
        %3100 = vrot.lane.b32.xlu0 %v2055, 8
        %v3101 = vpop.permute.xlu0 %3100
        %3102 = vrot.lane.b32.xlu0 %v2060, 8
        %v3103 = vpop.permute.xlu0 %3102
        %3104 = vrot.lane.b32.xlu0 %v2063, 8
        %v3105 = vpop.permute.xlu0 %3104
        %3106 = vrot.lane.b32.xlu0 %v2068, 8
        %v3107 = vpop.permute.xlu0 %3106
        %3108 = vrot.lane.b32.xlu0 %v2071, 8
        %v3109 = vpop.permute.xlu0 %3108
        %3110 = vrot.lane.b32.xlu0 %v2076, 8
        %v3111 = vpop.permute.xlu0 %3110
        %3112 = vrot.lane.b32.xlu0 %v2079, 8
        %v3113 = vpop.permute.xlu0 %3112
        %3114 = vrot.lane.b32.xlu0 %v2084, 8
        %v3115 = vpop.permute.xlu0 %3114
        %3116 = vrot.lane.b32.xlu0 %v2087, 8
        %v3117 = vpop.permute.xlu0 %3116
        %3150 = vrot.lane.b32.xlu0 %v2510, 16
        %v3151 = vpop.permute.xlu0 %3150
        %3152 = vrot.lane.b32.xlu0 %v2513, 16
        %v3153 = vpop.permute.xlu0 %3152
        %3154 = vrot.lane.b32.xlu0 %v2518, 16
        %v3155 = vpop.permute.xlu0 %3154
        %3156 = vrot.lane.b32.xlu0 %v2521, 16
        %v3157 = vpop.permute.xlu0 %3156
        %3158 = vrot.lane.b32.xlu0 %v2526, 16
        %v3159 = vpop.permute.xlu0 %3158
        %3160 = vrot.lane.b32.xlu0 %v2529, 16
        %v3161 = vpop.permute.xlu0 %3160
        %3162 = vrot.lane.b32.xlu0 %v2534, 16
        %v3163 = vpop.permute.xlu0 %3162
        %3164 = vrot.lane.b32.xlu0 %v2537, 16
        %v3165 = vpop.permute.xlu0 %3164
        %3166 = vrot.lane.b32.xlu0 %v2542, 16
        %v3167 = vpop.permute.xlu0 %3166
        %3168 = vrot.lane.b32.xlu0 %v2545, 16
        %v3169 = vpop.permute.xlu0 %3168
        %3170 = vrot.lane.b32.xlu0 %v2550, 16
        %v3171 = vpop.permute.xlu0 %3170
        %3172 = vrot.lane.b32.xlu0 %v2553, 16
        %v3173 = vpop.permute.xlu0 %3172
        %3174 = vrot.lane.b32.xlu0 %v2558, 16
        %v3175 = vpop.permute.xlu0 %3174
        %3176 = vrot.lane.b32.xlu0 %v2561, 16
        %v3177 = vpop.permute.xlu0 %3176
        %3178 = vrot.lane.b32.xlu0 %v2566, 16
        %v3179 = vpop.permute.xlu0 %3178
        %3180 = vrot.lane.b32.xlu0 %v2569, 16
        %v3181 = vpop.permute.xlu0 %3180
        %3214 = vrot.lane.b32.xlu0 %v2992, 24
        %v3215 = vpop.permute.xlu0 %3214
        %3216 = vrot.lane.b32.xlu0 %v2995, 24
        %v3217 = vpop.permute.xlu0 %3216
        %3218 = vrot.lane.b32.xlu0 %v3000, 24
        %v3219 = vpop.permute.xlu0 %3218
        %3220 = vrot.lane.b32.xlu0 %v3003, 24
        %v3221 = vpop.permute.xlu0 %3220
        %3222 = vrot.lane.b32.xlu0 %v3008, 24
        %v3223 = vpop.permute.xlu0 %3222
        %3224 = vrot.lane.b32.xlu0 %v3011, 24
        %v3225 = vpop.permute.xlu0 %3224
        %3226 = vrot.lane.b32.xlu0 %v3016, 24
        %v3227 = vpop.permute.xlu0 %3226
        %3228 = vrot.lane.b32.xlu0 %v3019, 24
        %v3229 = vpop.permute.xlu0 %3228
        %3230 = vrot.lane.b32.xlu0 %v3024, 24
        %v3231 = vpop.permute.xlu0 %3230
        %3232 = vrot.lane.b32.xlu0 %v3027, 24
        %v3233 = vpop.permute.xlu0 %3232
        %3234 = vrot.lane.b32.xlu0 %v3032, 24
        %v3235 = vpop.permute.xlu0 %3234
        %3236 = vrot.lane.b32.xlu0 %v3035, 24
        %v3237 = vpop.permute.xlu0 %3236
        %3238 = vrot.lane.b32.xlu0 %v3040, 24
        %v3239 = vpop.permute.xlu0 %3238
        %3240 = vrot.lane.b32.xlu0 %v3043, 24
        %v3241 = vpop.permute.xlu0 %3240
        %3242 = vrot.lane.b32.xlu0 %v3048, 24
        %v3243 = vpop.permute.xlu0 %3242
        %3244 = vrot.lane.b32.xlu0 %v3051, 24
        %v3245 = vpop.permute.xlu0 %3244
        %v3262 = vsel %vm1173, %v1554, %v3087
        %v3263 = vsel %vm1173, %v1557, %v3089
        %v3264 = vsel %vm1173, %v1562, %v3091
        %v3265 = vsel %vm1173, %v1565, %v3093
        %v3266 = vsel %vm1173, %v1570, %v3095
        %v3267 = vsel %vm1173, %v1573, %v3097
        %v3268 = vsel %vm1173, %v1578, %v3099
        %v3269 = vsel %vm1173, %v1581, %v3101
        %v3270 = vsel %vm1173, %v1586, %v3103
        %v3271 = vsel %vm1173, %v1589, %v3105
        %v3272 = vsel %vm1173, %v1594, %v3107
        %v3273 = vsel %vm1173, %v1597, %v3109
        %v3274 = vsel %vm1173, %v1602, %v3111
        %v3275 = vsel %vm1173, %v1605, %v3113
        %v3276 = vsel %vm1173, %v1610, %v3115
        %v3277 = vsel %vm1173, %v1613, %v3117
        %vm3278 = vcmask 130048
        %v3279 = vsel %vm3278, %v3262, %v3151
        %v3280 = vsel %vm3278, %v3263, %v3153
        %v3281 = vsel %vm3278, %v3264, %v3155
        %v3282 = vsel %vm3278, %v3265, %v3157
        %v3283 = vsel %vm3278, %v3266, %v3159
        %v3284 = vsel %vm3278, %v3267, %v3161
        %v3285 = vsel %vm3278, %v3268, %v3163
        %v3286 = vsel %vm3278, %v3269, %v3165
        %v3287 = vsel %vm3278, %v3270, %v3167
        %v3288 = vsel %vm3278, %v3271, %v3169
        %v3289 = vsel %vm3278, %v3272, %v3171
        %v3290 = vsel %vm3278, %v3273, %v3173
        %v3291 = vsel %vm3278, %v3274, %v3175
        %v3292 = vsel %vm3278, %v3275, %v3177
        %v3293 = vsel %vm3278, %v3276, %v3179
        %v3294 = vsel %vm3278, %v3277, %v3181
        %vm3295 = vcmask 195584
        %v3296 = vsel %vm3295, %v3279, %v3215
        %v3297 = vsel %vm3295, %v3280, %v3217
        %v3298 = vsel %vm3295, %v3281, %v3219
        %v3299 = vsel %vm3295, %v3282, %v3221
        %v3300 = vsel %vm3295, %v3283, %v3223
        %v3301 = vsel %vm3295, %v3284, %v3225
        %v3302 = vsel %vm3295, %v3285, %v3227
        %v3303 = vsel %vm3295, %v3286, %v3229
        %v3304 = vsel %vm3295, %v3287, %v3231
        %v3305 = vsel %vm3295, %v3288, %v3233
        %v3306 = vsel %vm3295, %v3289, %v3235
        %v3307 = vsel %vm3295, %v3290, %v3237
        %v3308 = vsel %vm3295, %v3291, %v3239
        %v3309 = vsel %vm3295, %v3292, %v3241
        %v3310 = vsel %vm3295, %v3293, %v3243
        %v3311 = vsel %vm3295, %v3294, %v3245
        %v3312 = vpack.c.bf16 %v3297, %v3296
        %v3313 = vpack.c.bf16 %v3299, %v3298
        %v3314 = vpack.c.bf16 %v3301, %v3300
        %v3315 = vpack.c.bf16 %v3303, %v3302
        %v3316 = vpack.c.bf16 %v3305, %v3304
        %v3317 = vpack.c.bf16 %v3307, %v3306
        %v3318 = vpack.c.bf16 %v3309, %v3308
        %v3319 = vpack.c.bf16 %v3311, %v3310
        %v3320 = vld [vmem:[%s9] sm:$0xf]
        %v3321 = vld [vmem:[%s9 + $0x4] sm:$0xf]
        %v3322 = vld [vmem:[%s9 + $0x8] sm:$0xf]
        %v3323 = vld [vmem:[%s9 + $0xc] sm:$0xf]
        %v3324 = vld [vmem:[%s10] sm:$0x1]
        %v3326 = vlaneseq
        %v3327 = vshrl.u32 %v3326, 7
        %v3328 = vsub.s32 0, %v3327
        %v3329 = vrot.slane %v3324, %v3328
        %v3335 = vunpack.c.l.b16 %v3320
        %v3336 = vunpack.c.l.b16 %v3321
        %v3337 = vunpack.c.l.b16 %v3322
        %v3338 = vunpack.c.l.b16 %v3323
        %v3339 = vpack.c.b16 %v3336, %v3335
        %v3340 = vpack.c.b16 %v3338, %v3337
        %v3344 = vsel %vm740, %v3312, 0
        %v3347 = vsel %vm740, %v3313, 0
        %v3350 = vsel %vm740, %v3314, 0
        %v3353 = vsel %vm740, %v3315, 0
        %v3356 = vsel %vm740, %v3316, 0
        %v3359 = vsel %vm740, %v3317, 0
        %v3362 = vsel %vm740, %v3318, 0
        %v3365 = vsel %vm740, %v3319, 0
        %3367 = vmatprep.subr.bf16.mxu0 0
        %3368 = vmatpush1.bf16.msra.mxu0 %v3339
        %3369 = vmatprep.subr.bf16.mxu0 0
        %3370 = vmatpush1.bf16.msra.mxu0 %v3340
        %3371 = vmatprep.subr.bf16.mxu0 0
        %3372 = vmatpush1.bf16.msra.mxu0 0
        %3373 = vmatprep.subr.bf16.mxu0 0
        %3374 = vmatpush1.bf16.msra.mxu0 0
        %3375 = vmatprep.subr.bf16.mxu0 0
        %3376 = vmatpush1.bf16.msra.mxu0 0
        %3377 = vmatprep.subr.bf16.mxu0 0
        %3378 = vmatpush1.bf16.msra.mxu0 0
        %3379 = vmatprep.subr.bf16.mxu0 0
        %3380 = vmatpush1.bf16.msra.mxu0 0
        %3381 = vmatprep.subr.bf16.mxu0 0
        %3382 = vmatpush1.bf16.msra.mxu0 0
        %3383 = vmatprep.subr.bf16.mxu0 0
        %3384 = vmatpush1.bf16.msra.mxu0 0
        %3385 = vmatprep.subr.bf16.mxu0 0
        %3386 = vmatpush1.bf16.msra.mxu0 0
        %3387 = vmatprep.subr.bf16.mxu0 0
        %3388 = vmatpush1.bf16.msra.mxu0 0
        %3389 = vmatprep.subr.bf16.mxu0 0
        %3390 = vmatpush1.bf16.msra.mxu0 0
        %3391 = vmatprep.subr.bf16.mxu0 0
        %3392 = vmatpush1.bf16.msra.mxu0 0
        %3393 = vmatprep.subr.bf16.mxu0 0
        %3394 = vmatpush1.bf16.msra.mxu0 0
        %3395 = vmatprep.subr.bf16.mxu0 0
        %3396 = vmatpush1.bf16.msra.mxu0 0
        %3397 = vmatprep.subr.bf16.mxu0 0
        %3398 = vmatpush1.bf16.msra.mxu0 0
        %3399 = vmatprep.mubr.bf16.mxu0 0
        %3400 = vmatmul.mubr.bf16.gmra.mrb[0].mxu0 %v3344
        %v3401 = vpop.f32.mrb[0].mxu0
        %v3402 = vadd.f32 %v3329, %v3401
        %v3403 = vpop.f32.mrb[0].mxu0
        %v3404 = vpop.f32.mrb[0].mxu0
        %v3405 = vadd.f32 %v3329, %v3404
        %v3406 = vpop.f32.mrb[0].mxu0
        %3407 = vmatprep.mubr.bf16.mxu0 0
        %3408 = vmatmul.mubr.bf16.gmra.mrb[0].mxu0 %v3347
        %v3409 = vpop.f32.mrb[0].mxu0
        %v3410 = vadd.f32 %v3329, %v3409
        %v3411 = vpop.f32.mrb[0].mxu0
        %v3412 = vpop.f32.mrb[0].mxu0
        %v3413 = vadd.f32 %v3329, %v3412
        %v3414 = vpop.f32.mrb[0].mxu0
        %3415 = vmatprep.mubr.bf16.mxu0 0
        %3416 = vmatmul.mubr.bf16.gmra.mrb[0].mxu0 %v3350
        %v3417 = vpop.f32.mrb[0].mxu0
        %v3418 = vadd.f32 %v3329, %v3417
        %v3419 = vpop.f32.mrb[0].mxu0
        %v3420 = vpop.f32.mrb[0].mxu0
        %v3421 = vadd.f32 %v3329, %v3420
        %v3422 = vpop.f32.mrb[0].mxu0
        %3423 = vmatprep.mubr.bf16.mxu0 0
        %3424 = vmatmul.mubr.bf16.gmra.mrb[0].mxu0 %v3353
        %v3425 = vpop.f32.mrb[0].mxu0
        %v3426 = vadd.f32 %v3329, %v3425
        %v3427 = vpop.f32.mrb[0].mxu0
        %v3428 = vpop.f32.mrb[0].mxu0
        %v3429 = vadd.f32 %v3329, %v3428
        %v3430 = vpop.f32.mrb[0].mxu0
        %3431 = vmatprep.mubr.bf16.mxu0 0
        %3432 = vmatmul.mubr.bf16.gmra.mrb[0].mxu0 %v3356
        %v3433 = vpop.f32.mrb[0].mxu0
        %v3434 = vadd.f32 %v3329, %v3433
        %v3435 = vpop.f32.mrb[0].mxu0
        %v3436 = vpop.f32.mrb[0].mxu0
        %v3437 = vadd.f32 %v3329, %v3436
        %v3438 = vpop.f32.mrb[0].mxu0
        %3439 = vmatprep.mubr.bf16.mxu0 0
        %3440 = vmatmul.mubr.bf16.gmra.mrb[0].mxu0 %v3359
        %v3441 = vpop.f32.mrb[0].mxu0
        %v3442 = vadd.f32 %v3329, %v3441
        %v3443 = vpop.f32.mrb[0].mxu0
        %v3444 = vpop.f32.mrb[0].mxu0
        %v3445 = vadd.f32 %v3329, %v3444
        %v3446 = vpop.f32.mrb[0].mxu0
        %3447 = vmatprep.mubr.bf16.mxu0 0
        %3448 = vmatmul.mubr.bf16.gmra.mrb[0].mxu0 %v3362
        %v3449 = vpop.f32.mrb[0].mxu0
        %v3450 = vadd.f32 %v3329, %v3449
        %v3451 = vpop.f32.mrb[0].mxu0
        %v3452 = vpop.f32.mrb[0].mxu0
        %v3453 = vadd.f32 %v3329, %v3452
        %v3454 = vpop.f32.mrb[0].mxu0
        %3455 = vmatprep.mubr.bf16.mxu0 0
        %3456 = vmatmul.mubr.bf16.gmra.mrb[0].mxu0 %v3365
        %v3457 = vpop.f32.mrb[0].mxu0
        %v3458 = vadd.f32 %v3329, %v3457
        %v3459 = vpop.f32.mrb[0].mxu0
        %v3460 = vpop.f32.mrb[0].mxu0
        %v3461 = vadd.f32 %v3329, %v3460
        %v3462 = vpop.f32.mrb[0].mxu0
        %3463 = vdwg.mxu0
        %3464 = vst.msk [vmem:[%s498] sm:$0xff] %vm740, %v3402
        %3465 = vst.msk [vmem:[%s498 + $0x8] sm:$0xff] %vm740, %v3405
        %3466 = vst.msk [vmem:[%s498 + $0x10] sm:$0xff] %vm740, %v3410
        %3467 = vst.msk [vmem:[%s498 + $0x18] sm:$0xff] %vm740, %v3413
        %3468 = vst.msk [vmem:[%s498 + $0x20] sm:$0xff] %vm740, %v3418
        %3469 = vst.msk [vmem:[%s498 + $0x28] sm:$0xff] %vm740, %v3421
        %3470 = vst.msk [vmem:[%s498 + $0x30] sm:$0xff] %vm740, %v3426
        %3471 = vst.msk [vmem:[%s498 + $0x38] sm:$0xff] %vm740, %v3429
        %3472 = vst.msk [vmem:[%s498 + $0x40] sm:$0xff] %vm740, %v3434
        %3473 = vst.msk [vmem:[%s498 + $0x48] sm:$0xff] %vm740, %v3437
        %3474 = vst.msk [vmem:[%s498 + $0x50] sm:$0xff] %vm740, %v3442
        %3475 = vst.msk [vmem:[%s498 + $0x58] sm:$0xff] %vm740, %v3445
        %3476 = vst.msk [vmem:[%s498 + $0x60] sm:$0xff] %vm740, %v3450
        %3477 = vst.msk [vmem:[%s498 + $0x68] sm:$0xff] %vm740, %v3453
        %3478 = vst.msk [vmem:[%s498 + $0x70] sm:$0xff] %vm740, %v3458
        %3479 = vst.msk [vmem:[%s498 + $0x78] sm:$0xff] %vm740, %v3461
        %v3480 = vmul.f32 %v3054, 0.25
        %v3481 = vmul.f32 %v3055, 0.25
        %v3482 = vmul.f32 %v3056, 0.25
        %v3483 = vmul.f32 %v3057, 0.25
        %v3484 = vmul.f32 %v3058, 0.25
        %v3485 = vmul.f32 %v3059, 0.25
        %v3486 = vmul.f32 %v3060, 0.25
        %v3487 = vmul.f32 %v3061, 0.25
        %v3488 = vmul.f32 %v3062, 0.25
        %v3489 = vmul.f32 %v3063, 0.25
        %v3490 = vmul.f32 %v3064, 0.25
        %v3491 = vmul.f32 %v3065, 0.25
        %v3492 = vmul.f32 %v3066, 0.25
        %v3493 = vmul.f32 %v3067, 0.25
        %v3494 = vmul.f32 %v3068, 0.25
        %v3495 = vmul.f32 %v3069, 0.25
        %3496 = vst [vmem:[%s471] sm:$0xff] %v3480
        %3497 = vst [vmem:[%s471 + $0x8] sm:$0xff] %v3481
        %3498 = vst [vmem:[%s471 + $0x10] sm:$0xff] %v3482
        %3499 = vst [vmem:[%s471 + $0x18] sm:$0xff] %v3483
        %3500 = vst [vmem:[%s471 + $0x20] sm:$0xff] %v3484
        %3501 = vst [vmem:[%s471 + $0x28] sm:$0xff] %v3485
        %3502 = vst [vmem:[%s471 + $0x30] sm:$0xff] %v3486
        %3503 = vst [vmem:[%s471 + $0x38] sm:$0xff] %v3487
        %3504 = vst [vmem:[%s471 + $0x40] sm:$0xff] %v3488
        %3505 = vst [vmem:[%s471 + $0x48] sm:$0xff] %v3489
        %3506 = vst [vmem:[%s471 + $0x50] sm:$0xff] %v3490
        %3507 = vst [vmem:[%s471 + $0x58] sm:$0xff] %v3491
        %3508 = vst [vmem:[%s471 + $0x60] sm:$0xff] %v3492
        %3509 = vst [vmem:[%s471 + $0x68] sm:$0xff] %v3493
        %3510 = vst [vmem:[%s471 + $0x70] sm:$0xff] %v3494
        %3511 = vst [vmem:[%s471 + $0x78] sm:$0xff] %v3495
        %s3512 = smul.u32 16, %s32
        %p3513 = scmp.lt.s32.totalorder %s31, 1
        %s3514 = scalar_select %p3513, %s31, 1
        %p3515 = scmp.lt.s32.totalorder %s3512, 31
        %s3516 = scalar_select %p3515, %s3512, 31
        %s3517 = smul.addr %s3514, 32
        %s3518 = sadd.s32 %s3516, %s3517
        %s3519 = smul.addr %s3518, 8
        %s3520 = scalar_lea.vmem %s11, %s3519
        %s3521 = sand.u32 %s325, 1
        %s3522 = scalar_lea.sflag [#allocation4], %s3521
        %s3523 = sand.u32 %s325, 1
        %s3524 = smul.addr %s3523, 128
        %s3525 = scalar_lea.vmem [#allocation3], %s3524
        // Predicated region
        $region69: #{tpu_custom_call.1} parent=63 // pred_check
          %p3526 = pneg %p307
        $region70: #{tpu_custom_call.1} parent=63 // pred_check_branch
          %3528 = sbr.rel (%p3526) target = $region72
        $region71: #{tpu_custom_call.1} parent=63 // pred_region
          %s3529 = smul.u32 16, %s32
        $region72: #{tpu_custom_call.1} parent=63 // pred_fallthru
          _
        // Predicated region
        $region73: #{tpu_custom_call.1} parent=63 // pred_check
          %p3530 = pneg %p335
        $region74: #{tpu_custom_call.1} parent=63 // pred_check_branch
          %3532 = sbr.rel (%p3530) target = $region76
        $region75: #{tpu_custom_call.1} parent=63 // pred_region
          %s3533 = smul.u32 16, %s32
          %s3535 = ssub.s32 2048, 2048
          %3536 = vsyncadd %s3522, %s3535
          %s3537 = smul.addr %s31, 32
          %s3538 = sadd.s32 %s3533, %s3537
          %s3539 = smul.addr %s3538, 128
          %s3540 = scalar_lea.hbm %s12, %s3539
          %s3541 = sshll.u32 %s3525, 4
          %s3542 = int_to_ptr.vmem [resolvable:$true] %s3541
          %3547 = dma.vmem_to_hbm [thread:$0]  %s3542, 2048, %s3540, %s3522, 128, 128, 8
        $region76: #{tpu_custom_call.1} parent=63 // pred_fallthru
          _
      $region64: #{tpu_custom_call.1} parent=5 // pred_fallthru
        _
      %p3548 = scmp.le.s32.totalorder 2, %s22
      // Predicated region
      $region77: #{tpu_custom_call.1} parent=5 // pred_check
        %p3549 = pneg %p3548
      $region78: #{tpu_custom_call.1} parent=5 // pred_check_branch
        %3551 = sbr.rel (%p3549) target = $region80
      $region79: #{tpu_custom_call.1} parent=5 // pred_region
        %s3552 = ssub.s32 %s22, 2
        // Predicated region
        $region81: #{tpu_custom_call.1} parent=79 // pred_check
          %p3553 = pneg %p313
        $region82: #{tpu_custom_call.1} parent=79 // pred_check_branch
          %3555 = sbr.rel (%p3553) target = $region84
        $region83: #{tpu_custom_call.1} parent=79 // pred_region
          %s3556 = smul.u32 16, %s34
          %p3557 = scmp.lt.s32.totalorder %s33, 1
          %s3558 = scalar_select %p3557, %s33, 1
          %p3559 = scmp.lt.s32.totalorder %s3556, 31
          %s3560 = scalar_select %p3559, %s3556, 31
          %s3561 = smul.addr %s3558, 32
          %s3562 = sadd.s32 %s3560, %s3561
          %s3563 = smul.addr %s3562, 8
          %s3564 = scalar_lea.vmem %s11, %s3563
        $region84: #{tpu_custom_call.1} parent=79 // pred_fallthru
          _
        // Predicated region
        $region85: #{tpu_custom_call.1} parent=79 // pred_check
          %p3565 = pneg %p341
        $region86: #{tpu_custom_call.1} parent=79 // pred_check_branch
          %3567 = sbr.rel (%p3565) target = $region88
        $region87: #{tpu_custom_call.1} parent=79 // pred_region
          %s3568 = sand.u32 %s326, 1
          %s3569 = scalar_lea.sflag [#allocation4], %s3568
          %s3570 = sand.u32 %s326, 1
          %s3571 = smul.addr %s3570, 128
          %s3572 = scalar_lea.vmem [#allocation3], %s3571
          %3573 = dma.done %s3569, 2048
        $region88: #{tpu_custom_call.1} parent=79 // pred_fallthru
          _
      $region80: #{tpu_custom_call.1} parent=5 // pred_fallthru
        _
    $region6: #{tpu_custom_call.1} parent=1 // loop_footer
      %s26 = sadd.s32 1, %s22
    $region7: #{tpu_custom_call.1} parent=1 // loop_footer_branch
      %21 = sbr.rel target = $region3
    $region8: #{tpu_custom_call.1} parent=1 // loop_exit
      _
    %3574 = vsyncpa [#allocation4], 1
    %s3575 = scalar_lea.sflag [#allocation4], 1
    %3576 = vsyncpa %s3575, 1

</llo_original>
